<compile_context>
chip_gen: v7x
topology: tpu7x:2x2x1
jax: 0.10.0
libtpu: 0.0.40
codegen_flags: <defaults>
</compile_context>

<pallas_src>
import math
import functools

import jax
import jax.numpy as jnp
from jax.experimental import pallas as pl
from jax.experimental.pallas import tpu as pltpu

PI = math.pi
_TM_MAX = 4096  # max rows per grid step (sweepable)


def _round_up(x: int, m: int) -> int:
    return ((x + m - 1) // m) * m


def make_w(dim: int, num_inf: int = 126) -> jnp.ndarray:
    """Faithful to: w = Tensor([2**i for i in range(dim//4)])/180*PI; w[num_inf:] = 0."""
    dq = dim // 4
    w = jnp.asarray([2.0 ** i for i in range(dq)], dtype=jnp.float32) / 180.0 * PI
    return jnp.where(jnp.arange(dq) < num_inf, w, jnp.float32(0.0))


# --------------------------------------------------------------------------
# Kernels
# --------------------------------------------------------------------------
def _gpe_fused_kernel(t_ref, w_ref, mask_ref, o_ref, *, apply_mask: bool):
    """Feature-major compute: half the transcendentals, one XLU transpose.

    t_ref:    (2, tm)   transposed input rows [lat; lon] for this tile
    w_ref:    (dq, 1)   frequency column (already num_inf-masked)
    mask_ref: (dim, 1)  num_inf output mask column (read only if apply_mask)
    o_ref:    (tm, dim) output tile
    """
    lat = t_ref[0:1, :]                      # (1, tm)
    lon = t_ref[1:2, :]                      # (1, tm)
    w = w_ref[...]                           # (dq, 1)
    th_lat = w * lat                         # (dq, tm)  == reference (lat*w)^T, bit-exact
    th_lon = w * lon                         # (dq, tm)  == reference (lon*w)^T, bit-exact
    # Exactly dim transcendentals per row (vs 2*dim in the full-width form),
    # every vreg fully populated with distinct phases.
    outT = jnp.concatenate(
        [jnp.sin(th_lat), jnp.cos(th_lat), jnp.sin(th_lon), jnp.cos(th_lon)],
        axis=0)                              # (dim, tm) sublane-aligned concat
    if apply_mask:                           # static: only when num_inf < dim//4
        outT = outT * mask_ref[...]
    # (dim, tm) -> (tm, dim): XLU transpose, hidden under the VALU-bound sin/cos.
    o_ref[...] = jnp.transpose(outT)


def _gpe_wide_kernel(t_ref, c_ref, o_ref, *, apply_mask: bool):
    """Fallback: full-width sin+cos with a lane select (previously validated path).

    t_ref: (tm, 2) rows [lat, lon]
    c_ref: (4, dim) stacked constants [w_lat_row, w_lon_row, sel_sin_row, mask_row]
    o_ref: (tm, dim)
    """
    lat = t_ref[:, 0:1]                      # (tm, 1)
    lon = t_ref[:, 1:2]                      # (tm, 1)
    theta = lat * c_ref[0:1, :] + lon * c_ref[1:2, :]   # (tm, dim)
    s = jnp.sin(theta)
    c = jnp.cos(theta)
    out = jnp.where(c_ref[2:3, :] != 0.0, s, c)          # lane select, no blend
    if apply_mask:
        out = out * c_ref[3:4, :]
    o_ref[...] = out


# --------------------------------------------------------------------------
# Constants
# --------------------------------------------------------------------------
def _fused_consts(dim: int, num_inf: int):
    dq = dim // 4
    w_col = make_w(dim, num_inf).reshape(dq, 1)
    mask_col = jnp.tile((jnp.arange(dq) < num_inf).astype(jnp.float32), 4).reshape(dim, 1)
    return w_col, mask_col


def _wide_consts(dim: int, num_inf: int) -> jnp.ndarray:
    dq = dim // 4
    w = make_w(dim, num_inf)
    z = jnp.zeros((dq,), jnp.float32)
    o = jnp.ones((dq,), jnp.float32)
    w_lat = jnp.concatenate([w, w, z, z])                 # drives quarters 0,1
    w_lon = jnp.concatenate([z, z, w, w])                 # drives quarters 2,3
    sel = jnp.concatenate([o, z, o, z])                   # 1 on sin lanes
    mask = jnp.tile((jnp.arange(dq) < num_inf).astype(jnp.float32), 4)
    return jnp.stack([w_lat, w_lon, sel, mask], axis=0)   # (4, dim), one BlockSpec


# --------------------------------------------------------------------------
# Launch
# --------------------------------------------------------------------------
def _launch(T2: jnp.ndarray, dim: int, num_inf: int, impl: str,
            tm_max: int = _TM_MAX) -> jnp.ndarray:
    """T2: (N, 2) float32.  Returns (N, dim) float32."""
    N = T2.shape[0]
    dq = dim // 4
    apply_mask = num_inf < dq   # default num_inf=126 >= dq -> mask path skipped

    # Row tile: big enough to amortize per-step overhead (~0.35us), capped at
    # ~N/2 (>= 2 grid steps keeps both v7x TensorCores busy), multiple of 128
    # so the in-kernel transpose and stores stay tile-aligned.
    tm = min(tm_max, max(128, _round_up(pl.cdiv(N, 2), 128)))
    N_pad = max(N, tm)                    # only tiny inputs pad up to one block;
    if N_pad != N:                        # N >= tm needs no padding (partial last
        T2 = jnp.pad(T2, ((0, N_pad - N), (0, 0)))  # block is masked by Pallas).
    grid = (pl.cdiv(N_pad, tm),)

    params = pltpu.CompilerParams(
        dimension_semantics=("parallel",),
        vmem_limit_bytes=32 * 1024 * 1024)
    out_spec = pl.BlockSpec((tm, dim), lambda i: (i, 0))
    out_shape = jax.ShapeDtypeStruct((N_pad, dim), jnp.float32)

    if impl == "fused":
        w_col, mask_col = _fused_consts(dim, num_inf)
        out = pl.pallas_call(
            functools.partial(_gpe_fused_kernel, apply_mask=apply_mask),
            out_shape=out_shape,
            grid_spec=pl.GridSpec(
                grid=grid,
                in_specs=[
                    pl.BlockSpec((2, tm), lambda i: (0, i)),    # transposed rows
                    pl.BlockSpec((dq, 1), lambda i: (0, 0)),    # resident w column
                    pl.BlockSpec((dim, 1), lambda i: (0, 0)),   # resident mask column
                ],
                out_specs=out_spec),
            compiler_params=params,
        )(T2.T, w_col, mask_col)
    elif impl == "wide":
        consts = _wide_consts(dim, num_inf)
        out = pl.pallas_call(
            functools.partial(_gpe_wide_kernel, apply_mask=apply_mask),
            out_shape=out_shape,
            grid_spec=pl.GridSpec(
                grid=grid,
                in_specs=[
                    pl.BlockSpec((tm, 2), lambda i: (i, 0)),    # row tile
                    pl.BlockSpec((4, dim), lambda i: (0, 0)),   # resident constants
                ],
                out_specs=out_spec),
            compiler_params=params,
        )(T2, consts)
    else:
        raise ValueError(f"unknown impl {impl!r}")

    return out[:N] if N_pad != N else out


# --------------------------------------------------------------------------
# Reference + impl selection + public wrapper
# --------------------------------------------------------------------------
def _reference(T, dim=128, num_inf=126):
    """Pure-JAX transcription of the PyTorch forward (ground truth)."""
    dq = dim // 4
    w = make_w(dim, num_inf)
    T2 = T.reshape(-1, 2).astype(jnp.float32)
    wlons = T2[:, 0:1] * w[None, :]
    wlats = T2[:, 1:2] * w[None, :]
    mask = (jnp.arange(dq) < num_inf).astype(jnp.float32)[None, :]
    sc = jnp.concatenate([jnp.sin(wlons) * mask, jnp.cos(wlons) * mask,
                          jnp.sin(wlats) * mask, jnp.cos(wlats) * mask], axis=-1)
    if T.ndim == 3:
        sc = sc.reshape(T.shape[0], -1, dim)
    return sc


_IMPL_CHOICE = {}


def _select_impl(dim: int, num_inf: int) -> str:
    """One-time backend probe: prefer the fused (half-transcendental) kernel,
    fall back to the validated full-width kernel if it fails to lower or to
    match the pure-JAX reference on a small probe."""
    probe = jax.random.uniform(jax.random.PRNGKey(0), (200, 2), jnp.float32,
                               minval=-180.0, maxval=180.0)
    ref = _reference(probe, dim, num_inf)
    try:
        got = _launch(probe, dim, num_inf, "fused")
        ok = bool(jnp.allclose(got, ref, atol=1e-5, rtol=1e-5))
    except Exception:
        ok = False
    return "fused" if ok else "wide"


def bgpe_single_forward(T: jnp.ndarray, dim: int = 128, num_inf: int = 126,
                        impl: str = "auto", tm_max: int = _TM_MAX) -> jnp.ndarray:
    """Pallas implementation of bGPESingle.forward.

    T: (n, 2) or (bs, n, 2).  Returns (n, dim) or (bs, n, dim) float32.
    """
    assert dim % 4 == 0 and dim >= 4
    assert T.shape[-1] == 2
    batched = (T.ndim == 3)
    T2 = T.reshape(-1, 2).astype(jnp.float32)

    if impl == "auto":
        key = (dim, num_inf)
        if key not in _IMPL_CHOICE:
            _IMPL_CHOICE[key] = _select_impl(dim, num_inf)
        impl = _IMPL_CHOICE[key]

    out = _launch(T2, dim, num_inf, impl, tm_max=tm_max)
    if batched:
        out = out.reshape(T.shape[0], -1, dim)
    return out


# --------------------------------------------------------------------------
# Self-test
# --------------------------------------------------------------------------
if __name__ == "__main__":
    dim = 128
    k1, k2, k3 = jax.random.split(jax.random.PRNGKey(0), 3)

    # Small batched case matching the module's (bs, n, 2) usage.
    bs, n = 2, 8
    T_small = jax.random.uniform(k1, (bs, n, 2), jnp.float32,
                                 minval=-180.0, maxval=180.0)
    out_small = jax.block_until_ready(bgpe_single_forward(T_small, dim=dim))
    assert out_small.shape == (bs, n, dim)
    assert jnp.allclose(out_small, _reference(T_small, dim), atol=1e-5, rtol=1e-5)

    # Larger unbatched case: 2-step grid (tm=1280) with a Pallas-masked partial
    # final block, no wrapper-side padding or output slice.
    T_big = jax.random.uniform(k2, (2400, 2), jnp.float32,
                               minval=-180.0, maxval=180.0)
    out_big = jax.block_until_ready(bgpe_single_forward(T_big, dim=dim))
    assert out_big.shape == (2400, dim)
    assert jnp.allclose(out_big, _reference(T_big, dim), atol=1e-5, rtol=1e-5)

    # num_inf < dim//4 exercises the (normally-dead) output-masking path.
    T_m = jax.random.uniform(k3, (4, 16, 2), jnp.float32,
                             minval=-180.0, maxval=180.0)
    out_m = jax.block_until_ready(bgpe_single_forward(T_m, dim=dim, num_inf=20))
    assert out_m.shape == (4, 16, dim)
    assert jnp.allclose(out_m, _reference(T_m, dim, 20), atol=1e-5, rtol=1e-5)

    print("KERNEL_OK")
</pallas_src>

<mosaic_0001>
module attributes {stable_mosaic.version = 11 : i64} {
  func.func @_gpe_fused_kernel(%arg0: i32, %arg1: memref<2x128xf32, #tpu.memory_space<vmem>>, %arg2: memref<32x1xf32, #tpu.memory_space<vmem>>, %arg3: memref<128x1xf32, #tpu.memory_space<vmem>>, %arg4: memref<128x128xf32, #tpu.memory_space<vmem>>) attributes {dimension_semantics = [#tpu.dimension_semantics<parallel>], iteration_bounds = array<i64: 2>, scalar_prefetch = 0 : i64, scratch_operands = 0 : i64, tpu.core_type = #tpu.core_type<tc>, window_params = [{transform_indices = @transform_0, window_bounds = array<i64: 2, 128>}, {pipeline_mode = #tpu.pipeline_mode<synchronous>, transform_indices = @transform_1, window_bounds = array<i64: 32, 1>}, {pipeline_mode = #tpu.pipeline_mode<synchronous>, transform_indices = @transform_2, window_bounds = array<i64: 128, 1>}, {transform_indices = @transform_3, window_bounds = array<i64: 128, 128>}]} {
    %c0 = arith.constant 0 : index
    %c0_0 = arith.constant 0 : index
    %0 = vector.load %arg1[%c0, %c0_0] : memref<2x128xf32, #tpu.memory_space<vmem>>, vector<1x128xf32>
    %c1 = arith.constant 1 : index
    %c0_1 = arith.constant 0 : index
    %1 = vector.load %arg1[%c1, %c0_1] : memref<2x128xf32, #tpu.memory_space<vmem>>, vector<1x128xf32>
    %c0_2 = arith.constant 0 : index
    %c0_3 = arith.constant 0 : index
    %2 = vector.load %arg2[%c0_2, %c0_3] : memref<32x1xf32, #tpu.memory_space<vmem>>, vector<32x1xf32>
    %3 = vector.broadcast %2 : vector<32x1xf32> to vector<32x128xf32>
    %4 = vector.broadcast %0 : vector<1x128xf32> to vector<32x128xf32>
    %5 = arith.mulf %3, %4 : vector<32x128xf32>
    %6 = vector.broadcast %2 : vector<32x1xf32> to vector<32x128xf32>
    %7 = vector.broadcast %1 : vector<1x128xf32> to vector<32x128xf32>
    %8 = arith.mulf %6, %7 : vector<32x128xf32>
    %9 = math.sin %5 : vector<32x128xf32>
    %10 = math.cos %5 : vector<32x128xf32>
    %11 = math.sin %8 : vector<32x128xf32>
    %12 = math.cos %8 : vector<32x128xf32>
    %13 = tpu.concatenate %9, %10, %11, %12 in 0 : vector<32x128xf32>, vector<32x128xf32>, vector<32x128xf32>, vector<32x128xf32> -> vector<128x128xf32>
    %14 = tpu.transpose %13, [1, 0] : vector<128x128xf32> -> vector<128x128xf32>
    %c0_4 = arith.constant 0 : index
    %c0_5 = arith.constant 0 : index
    %15 = vector.load %arg4[%c0_4, %c0_5] : memref<128x128xf32, #tpu.memory_space<vmem>>, vector<128x128xf32>
    tpu.vector_store %arg4[%c0_4, %c0_5], %14 {strides = array<i32>} : memref<128x128xf32, #tpu.memory_space<vmem>>, vector<128x128xf32>,
    return
  }
  func.func @transform_0(%arg0: i32) -> (i32, i32) {
    %c0_i32 = arith.constant 0 : i32
    %c0_i32_0 = arith.constant 0 : i32
    return %c0_i32, %arg0 : i32, i32
  }
  func.func @transform_1(%arg0: i32) -> (i32, i32) {
    %c0_i32 = arith.constant 0 : i32
    %c0_i32_0 = arith.constant 0 : i32
    %c0_i32_1 = arith.constant 0 : i32
    return %c0_i32, %c0_i32_0 : i32, i32
  }
  func.func @transform_2(%arg0: i32) -> (i32, i32) {
    %c0_i32 = arith.constant 0 : i32
    %c0_i32_0 = arith.constant 0 : i32
    %c0_i32_1 = arith.constant 0 : i32
    return %c0_i32, %c0_i32_0 : i32, i32
  }
  func.func @transform_3(%arg0: i32) -> (i32, i32) {
    %c0_i32 = arith.constant 0 : i32
    %c0_i32_0 = arith.constant 0 : i32
    return %arg0, %c0_i32 : i32, i32
  }
}

module attributes {stable_mosaic.version = 11 : i64} {
  func.func @_gpe_wide_kernel(%arg0: i32, %arg1: memref<128x2xf32, #tpu.memory_space<vmem>>, %arg2: memref<4x128xf32, #tpu.memory_space<vmem>>, %arg3: memref<128x128xf32, #tpu.memory_space<vmem>>) attributes {dimension_semantics = [#tpu.dimension_semantics<parallel>], iteration_bounds = array<i64: 1>, scalar_prefetch = 0 : i64, scratch_operands = 0 : i64, tpu.core_type = #tpu.core_type<tc>, window_params = [{transform_indices = @transform_0, window_bounds = array<i64: 128, 2>}, {pipeline_mode = #tpu.pipeline_mode<synchronous>, transform_indices = @transform_1, window_bounds = array<i64: 4, 128>}, {transform_indices = @transform_2, window_bounds = array<i64: 128, 128>}]} {
    %c0 = arith.constant 0 : index
    %c0_0 = arith.constant 0 : index
    %0 = vector.load %arg1[%c0, %c0_0] : memref<128x2xf32, #tpu.memory_space<vmem>>, vector<128x1xf32>
    %c0_1 = arith.constant 0 : index
    %c1 = arith.constant 1 : index
    %1 = vector.load %arg1[%c0_1, %c1] : memref<128x2xf32, #tpu.memory_space<vmem>>, vector<128x1xf32>
    %c0_2 = arith.constant 0 : index
    %c0_3 = arith.constant 0 : index
    %2 = vector.load %arg2[%c0_2, %c0_3] : memref<4x128xf32, #tpu.memory_space<vmem>>, vector<1x128xf32>
    %3 = vector.broadcast %0 : vector<128x1xf32> to vector<128x128xf32>
    %4 = vector.broadcast %2 : vector<1x128xf32> to vector<128x128xf32>
    %5 = arith.mulf %3, %4 : vector<128x128xf32>
    %c1_4 = arith.constant 1 : index
    %c0_5 = arith.constant 0 : index
    %6 = vector.load %arg2[%c1_4, %c0_5] : memref<4x128xf32, #tpu.memory_space<vmem>>, vector<1x128xf32>
    %7 = vector.broadcast %1 : vector<128x1xf32> to vector<128x128xf32>
    %8 = vector.broadcast %6 : vector<1x128xf32> to vector<128x128xf32>
    %9 = arith.mulf %7, %8 : vector<128x128xf32>
    %10 = arith.addf %5, %9 : vector<128x128xf32>
    %11 = math.sin %10 : vector<128x128xf32>
    %12 = math.cos %10 : vector<128x128xf32>
    %c2 = arith.constant 2 : index
    %c0_6 = arith.constant 0 : index
    %13 = vector.load %arg2[%c2, %c0_6] : memref<4x128xf32, #tpu.memory_space<vmem>>, vector<1x128xf32>
    %cst = arith.constant 0.000000e+00 : f32
    %14 = vector.broadcast %cst : f32 to vector<1x128xf32>
    %15 = arith.cmpf one, %13, %14 : vector<1x128xf32>
    %16 = vector.shape_cast %15 : vector<1x128xi1> to vector<1x128xi1>
    %17 = vector.broadcast %16 : vector<1x128xi1> to vector<128x128xi1>
    %18 = arith.select %17, %11, %12 : vector<128x128xi1>, vector<128x128xf32>
    %c0_7 = arith.constant 0 : index
    %c0_8 = arith.constant 0 : index
    %19 = vector.load %arg3[%c0_7, %c0_8] : memref<128x128xf32, #tpu.memory_space<vmem>>, vector<128x128xf32>
    tpu.vector_store %arg3[%c0_7, %c0_8], %18 {strides = array<i32>} : memref<128x128xf32, #tpu.memory_space<vmem>>, vector<128x128xf32>,
    return
  }
  func.func @transform_0(%arg0: i32) -> (i32, i32) {
    %c0_i32 = arith.constant 0 : i32
    %c0_i32_0 = arith.constant 0 : i32
    return %arg0, %c0_i32 : i32, i32
  }
  func.func @transform_1(%arg0: i32) -> (i32, i32) {
    %c0_i32 = arith.constant 0 : i32
    %c0_i32_0 = arith.constant 0 : i32
    %c0_i32_1 = arith.constant 0 : i32
    return %c0_i32, %c0_i32_0 : i32, i32
  }
  func.func @transform_2(%arg0: i32) -> (i32, i32) {
    %c0_i32 = arith.constant 0 : i32
    %c0_i32_0 = arith.constant 0 : i32
    return %arg0, %c0_i32 : i32, i32
  }
}

</mosaic_0001>

<llo_original>
// kernel: tpu_custom_call.1
$region0: #{tpu_custom_call.1}
  #allocation0 [shape = 'u32[]', space=smem, size = 0x4, offset = 0x4, fixed_abs, tag = 'smem constant byte address 0x4 - core index']
  #allocation1 [shape = 'u32[144,128]{1,0:T(1,128)}', space=vmem, size = 0x12000, scoped, tag = 'internal scratch']
  %s0 = inlined_call_operand.vmem [shape: f32[2,200], index: 0, kind: input, shape index: {}]
  %s1 = inlined_call_operand.vmem [shape: f32[32,1], index: 1, kind: input, shape index: {}]
  %s2 = inlined_call_operand.vmem [shape: f32[128,1], index: 2, kind: input, shape index: {}]
  %s3 = inlined_call_operand.hbm [shape: f32[200,128], index: 3, kind: output, shape index: {}]
  %s4 = sld [smem:[#allocation0]]
  $region45: #{tpu_custom_call.1} parent=0
    _
  %s6 = ssub.s32 1, %s4
  %s7 = scalar_select 0, %s6, %s4
  $region1: #{tpu_custom_call.1} parent=0
    #allocation2 [shape = 'u8[131072]{0}', space=vmem, size = 0x20000, scoped, tag = 'output window, operand 0']
    #allocation3 [shape = 's32[2]{0}', space=sflag, size = 0x8, scoped, tag = 'scoped memory for tpu_custom_call.1']
    %8 = vsyncpa [#allocation3], 0
    %s9 = scalar_lea.sflag [#allocation3], 1
    %10 = vsyncpa %s9, 0
    loop: start=0, step=1, limit=4
    $region2: #{tpu_custom_call.1} parent=1 // loop_pre_header
      _
    $region3: #{tpu_custom_call.1} parent=1 // loop_header
      %s12 = sphi 0, %s16
      %p13 = scmp.ge.s32.totalorder %s12, 4
      %s22 = sphi 0, %s24
      %s25 = sphi 0, %s22
      %s26 = sphi 0, %s25
      %s42 = sphi 0, %s26
      %s46 = sphi 0, %s46
      %s48 = sphi 0, %s46
      %s49 = sphi 0, %s48
      %s63 = sphi 0, %s49
      %s67 = sphi 0, %s67
      %s69 = sphi 0, %s67
      %s70 = sphi 0, %s69
      %s84 = sphi 0, %s70
      %s90 = sphi 0, %s92
      %s93 = sphi 0, %s90
      %s94 = sphi 0, %s93
      %s110 = sphi 0, %s94
    $region4: #{tpu_custom_call.1} parent=1 // loop_header_branch
      %15 = sbr.rel (%p13) target = $region8
    $region5: #{tpu_custom_call.1} parent=1 // loop_body
      %s17 = ssub.s32 %s12, 1
      %s18 = ssub.s32 %s12, 2
      %s19 = sadd.s32 %s12, 1
      %s20 = ssub.s32 %s12, %s19
      %p21 = scmp.eq.s32.totalorder %s20, 0
      %s23 = sadd.s32 %s22, 1
      %s24 = scalar_select %p21, %s22, %s23
      %p27 = pneg %p21
      %p28 = scmp.eq.s32.totalorder %s12, 1
      %p29 = por %p27, %p28
      %p30 = scmp.ne.s32.totalorder %s22, %s25
      %p31 = scmp.eq.s32.totalorder %s12, 0
      %p32 = por %p30, %p31
      %p33 = scmp.ne.s32.totalorder %s22, %s25
      %p34 = scmp.eq.s32.totalorder %s17, 1
      %p35 = por %p33, %p34
      %p36 = scmp.ne.s32.totalorder %s25, %s26
      %p37 = scmp.eq.s32.totalorder %s17, 0
      %p38 = por %p36, %p37
      %p39 = scmp.ne.s32.totalorder %s25, %s26
      %p40 = scmp.eq.s32.totalorder %s18, 1
      %p41 = por %p39, %p40
      %p43 = scmp.ne.s32.totalorder %s26, %s42
      %p44 = scmp.eq.s32.totalorder %s18, 0
      %p45 = por %p43, %p44
      %s47 = sadd.s32 %s46, 1
      %p50 = scmp.eq.s32.totalorder %s12, 1
      %p51 = scmp.ne.s32.totalorder %s46, %s48
      %p52 = scmp.eq.s32.totalorder %s12, 0
      %p53 = por %p51, %p52
      %p54 = scmp.ne.s32.totalorder %s46, %s48
      %p55 = scmp.eq.s32.totalorder %s17, 1
      %p56 = por %p54, %p55
      %p57 = scmp.ne.s32.totalorder %s48, %s49
      %p58 = scmp.eq.s32.totalorder %s17, 0
      %p59 = por %p57, %p58
      %p60 = scmp.ne.s32.totalorder %s48, %s49
      %p61 = scmp.eq.s32.totalorder %s18, 1
      %p62 = por %p60, %p61
      %p64 = scmp.ne.s32.totalorder %s49, %s63
      %p65 = scmp.eq.s32.totalorder %s18, 0
      %p66 = por %p64, %p65
      %s68 = sadd.s32 %s67, 1
      %p71 = scmp.eq.s32.totalorder %s12, 1
      %p72 = scmp.ne.s32.totalorder %s67, %s69
      %p73 = scmp.eq.s32.totalorder %s12, 0
      %p74 = por %p72, %p73
      %p75 = scmp.ne.s32.totalorder %s67, %s69
      %p76 = scmp.eq.s32.totalorder %s17, 1
      %p77 = por %p75, %p76
      %p78 = scmp.ne.s32.totalorder %s69, %s70
      %p79 = scmp.eq.s32.totalorder %s17, 0
      %p80 = por %p78, %p79
      %p81 = scmp.ne.s32.totalorder %s69, %s70
      %p82 = scmp.eq.s32.totalorder %s18, 1
      %p83 = por %p81, %p82
      %p85 = scmp.ne.s32.totalorder %s70, %s84
      %p86 = scmp.eq.s32.totalorder %s18, 0
      %p87 = por %p85, %p86
      %s88 = ssub.s32 %s12, %s19
      %p89 = scmp.eq.s32.totalorder %s88, 0
      %s91 = sadd.s32 %s90, 1
      %s92 = scalar_select %p89, %s90, %s91
      %p95 = pneg %p89
      %p96 = scmp.eq.s32.totalorder %s12, 1
      %p97 = por %p95, %p96
      %p98 = scmp.ne.s32.totalorder %s90, %s93
      %p99 = scmp.eq.s32.totalorder %s12, 0
      %p100 = por %p98, %p99
      %p101 = scmp.ne.s32.totalorder %s90, %s93
      %p102 = scmp.eq.s32.totalorder %s17, 1
      %p103 = por %p101, %p102
      %p104 = scmp.ne.s32.totalorder %s93, %s94
      %p105 = scmp.eq.s32.totalorder %s17, 0
      %p106 = por %p104, %p105
      %p107 = scmp.ne.s32.totalorder %s93, %s94
      %p108 = scmp.eq.s32.totalorder %s18, 1
      %p109 = por %p107, %p108
      %p111 = scmp.ne.s32.totalorder %s94, %s110
      %p112 = scmp.eq.s32.totalorder %s18, 0
      %p113 = por %p111, %p112
      %p114 = scmp.le.s32.totalorder 1, %s12
      %p115 = scmp.lt.s32.totalorder %s12, 3
      %p116 = pnand %p114, %p115
      %p117 = pneg %p116
      // Predicated region
      $region9: #{tpu_custom_call.1} parent=5 // pred_check
        _
      $region10: #{tpu_custom_call.1} parent=5 // pred_check_branch
        %119 = sbr.rel (%p116) target = $region12
      $region11: #{tpu_custom_call.1} parent=5 // pred_region
        %s120 = ssub.s32 %s12, 1
        // Predicated region
        $region13: #{tpu_custom_call.1} parent=11 // pred_check
          %p121 = pneg %p59
        $region14: #{tpu_custom_call.1} parent=11 // pred_check_branch
          %123 = sbr.rel (%p121) target = $region16
        $region15: #{tpu_custom_call.1} parent=11 // pred_region
          _
        $region16: #{tpu_custom_call.1} parent=11 // pred_fallthru
          _
        // Predicated region
        $region17: #{tpu_custom_call.1} parent=11 // pred_check
          %p124 = pneg %p80
        $region18: #{tpu_custom_call.1} parent=11 // pred_check_branch
          %126 = sbr.rel (%p124) target = $region20
        $region19: #{tpu_custom_call.1} parent=11 // pred_region
          _
        $region20: #{tpu_custom_call.1} parent=11 // pred_fallthru
          _
      $region12: #{tpu_custom_call.1} parent=5 // pred_fallthru
        _
      %p127 = scmp.lt.s32.totalorder %s12, 2
      // Predicated region
      $region21: #{tpu_custom_call.1} parent=5 // pred_check
        %p128 = pneg %p127
      $region22: #{tpu_custom_call.1} parent=5 // pred_check_branch
        %130 = sbr.rel (%p128) target = $region24
      $region23: #{tpu_custom_call.1} parent=5 // pred_region
        // Predicated region
        $region25: #{tpu_custom_call.1} parent=23 // pred_check
          %p131 = pneg %p32
        $region26: #{tpu_custom_call.1} parent=23 // pred_check_branch
          %133 = sbr.rel (%p131) target = $region28
        $region27: #{tpu_custom_call.1} parent=23 // pred_region
          %p134 = scmp.lt.s32.totalorder %s12, 1
          %s135 = scalar_select %p134, %s12, 1
          %s136 = smul.addr %s135, 2
          %s137 = scalar_lea.vmem %s0, %s136
        $region28: #{tpu_custom_call.1} parent=23 // pred_fallthru
          _
      $region24: #{tpu_custom_call.1} parent=5 // pred_fallthru
        _
      %p138 = scmp.le.s32.totalorder 1, %s12
      %p139 = scmp.lt.s32.totalorder %s12, 3
      %p140 = pnand %p138, %p139
      %p141 = pneg %p140
      // Predicated region
      $region29: #{tpu_custom_call.1} parent=5 // pred_check
        _
      $region30: #{tpu_custom_call.1} parent=5 // pred_check_branch
        %143 = sbr.rel (%p140) target = $region32
      $region31: #{tpu_custom_call.1} parent=5 // pred_region
        %s144 = ssub.s32 %s12, 1
        %p145 = scmp.lt.s32.totalorder %s17, 1
        %s146 = scalar_select %p145, %s17, 1
        %s147 = smul.addr %s146, 2
        %s148 = scalar_lea.vmem %s0, %s147
        %p149 = pneg %p38
        %p150 = pneg %p35
        %p151 = pneg %p59
        %p152 = pneg %p56
        %p153 = pneg %p80
        %p154 = pneg %p77
        %p155 = pneg %p106
        %p156 = pneg %p103
        %s157 = sand.u32 %s93, 1
        %s158 = scalar_lea.sflag [#allocation3], %s157
        %s159 = sand.u32 %s93, 1
        %s160 = smul.addr %s159, 128
        %s161 = scalar_lea.vmem [#allocation2], %s160
        %p162 = scmp.lt.s32.totalorder %s17, 1
        %s163 = scalar_select %p162, %s17, 1
        %s164 = smul.addr %s163, 2
        %s165 = scalar_lea.vmem %s0, %s164
        %s166 = smul.u32 16, %s17
        %s167 = ssub.s32 25, %s166
        %p168 = scmp.lt.s32.totalorder %s167, 16
        %s169 = scalar_select %p168, %s167, 16
        %s170 = smul.u32 128, %s169
        %v171 = vld [vmem:[%s165] sm:$0x1]
        %v172 = vld [vmem:[%s165 + $0x1] sm:$0x1]
        %v173 = vld [vmem:[%s1] sm:$0xff]
        %v174 = vld [vmem:[%s1 + $0x8] sm:$0xff]
        %v175 = vld [vmem:[%s1 + $0x10] sm:$0xff]
        %v176 = vld [vmem:[%s1 + $0x18] sm:$0xff]
        %178 = vset.pattern.permute.xlu0 0
        %179 = vperm.xlu0 %178, %v173
        %v180 = vpop.permute.xlu0 %179
        %183 = vset.pattern.permute.xlu0 0
        %184 = vperm.xlu0 %183, %v174
        %v185 = vpop.permute.xlu0 %184
        %188 = vset.pattern.permute.xlu0 0
        %189 = vperm.xlu0 %188, %v175
        %v190 = vpop.permute.xlu0 %189
        %193 = vset.pattern.permute.xlu0 0
        %194 = vperm.xlu0 %193, %v176
        %v195 = vpop.permute.xlu0 %194
        %v197 = vlaneseq
        %v198 = vshrl.u32 %v197, 7
        %v199 = vsub.s32 0, %v198
        %v200 = vrot.slane %v171, %v199
        %v201 = vmul.f32 %v180, %v200
        %v202 = vmul.f32 %v185, %v200
        %v203 = vmul.f32 %v190, %v200
        %v204 = vmul.f32 %v195, %v200
        %v205 = vlaneseq
        %v206 = vshrl.u32 %v205, 7
        %v207 = vsub.s32 0, %v206
        %v208 = vrot.slane %v172, %v207
        %v209 = vmul.f32 %v180, %v208
        %v210 = vmul.f32 %v185, %v208
        %v211 = vmul.f32 %v190, %v208
        %v212 = vmul.f32 %v195, %v208
        %v213 = vand.u32 2147483647, %v201
        %vm214 = vcmp.le.f32.partialorder %v213, 0.7853982
        %vm215 = vcmp.lt.s32.totalorder %v201, 0
        %v216 = vand.u32 %v201, 2139095040
        %v217 = vshrl.u32 %v216, 23
        %v218 = vsub.s32 %v217, 127
        %v219 = vand.u32 2147483647, %v201
        %v220 = vand.u32 %v219, 8388607
        %v221 = vor.u32 %v220, 8388608
        %v222 = vsub.s32 0, %v221
        %v223 = vadd.s32 %v218, 1
        %vm224 = vcmp.gt.s32.totalorder %v223, 0
        %v225 = vsel %vm224, %v223, 0
        %v226 = vshrl.u32 %v225, 5
        %v227 = vand.u32 %v225, 31
        %v228 = vsub.s32 32, %v227
        %v229 = vshrl.u32 683565275, %v228
        %v230 = vshll.u32 683565275, %v227
        %v231 = vshrl.u32 2475754826, %v228
        %v232 = vor.u32 %v230, %v231
        %v233 = vshll.u32 2475754826, %v227
        %v234 = vshrl.u32 2131351028, %v228
        %v235 = vor.u32 %v233, %v234
        %v236 = vshll.u32 2131351028, %v227
        %v237 = vshrl.u32 2102212464, %v228
        %v238 = vor.u32 %v236, %v237
        %v239 = vshll.u32 2102212464, %v227
        %v240 = vshrl.u32 920167782, %v228
        %v241 = vor.u32 %v239, %v240
        %v242 = vshll.u32 920167782, %v227
        %v243 = vshrl.u32 1326507024, %v228
        %v244 = vor.u32 %v242, %v243
        %vm245 = vcmp.lt.s32.totalorder %v226, 1
        %vm246 = vcmp.lt.s32.totalorder %v226, 2
        %vm247 = vcmp.lt.s32.totalorder %v226, 3
        %vm248 = vcmp.lt.s32.totalorder %v226, 4
        %v249 = vsel %vm245, %v229, %v232
        %v250 = vsel %vm248, %v238, 2102212464
        %v251 = vsel %vm247, %v235, %v250
        %v252 = vsel %vm246, %v249, %v251
        %v253 = vsel %vm245, %v232, %v235
        %v254 = vsel %vm248, %v241, 920167782
        %v255 = vsel %vm247, %v238, %v254
        %v256 = vsel %vm246, %v253, %v255
        %v257 = vsel %vm245, %v235, %v238
        %v258 = vsel %vm248, %v244, 1326507024
        %v259 = vsel %vm247, %v241, %v258
        %v260 = vsel %vm246, %v257, %v259
        %v261 = vshll.u32 %v221, 8
        %v262 = vmul.u32.u64.compose %v261, %v260
        %v263 = vextract.low.u32 %v262
        %v264 = vextract.high.u32 %v262
        %v265 = vmul.u32.u64.compose %v261, %v256
        %v266 = vextract.low.u32 %v265
        %v267 = vextract.high.u32 %v265
        %v268 = vmul.u32 %v261, %v252
        %v269 = vadd.s32 %v264, %v266
        %vm270 = vc.u32 %v264, %v266
        %v271 = vadd.s32 %v267, 1
        %v272 = vsel %vm270, %v271, %v267
        %v273 = vadd.s32 %v268, %v272
        %v274 = vadd.s32 %v273, 536870912
        %v275 = vshrl.u32 %v274, 30
        %v276 = vshll.u32 %v275, 30
        %v277 = vsub.s32 %v273, %v276
        %vm278 = vcmp.lt.s32.totalorder %v277, 0
        %v279 = vsub.s32 0, %v277
        %v280 = vsel %vm278, %v279, %v277
        %v281 = vclz %v280
        %v282 = vsub.s32 %v281, 2
        %vm283 = vcmp.gt.s32.totalorder 0, %v282
        %v284 = vsel %vm283, 0, %v282
        %v285 = vsub.s32 32, %v284
        %v286 = vshll.u32 %v277, %v284
        %v287 = vshrl.u32 %v269, %v285
        %v288 = vor.u32 %v286, %v287
        %v289 = vsub.s32 4294967266, %v284
        %v290 = vadd.s32 %v289, 127
        %v291 = vshll.u32 %v290, 23
        %v292 = vor.u32 4788187, %v291
        %v293 = vand.u32 2147483647, %v292
        %v295 = vcvt.s32.f32 %v288
        %v296 = vmul.f32 %v295, %v293
        %v297 = vxor.u32 %v296, 2147483648
        %v298 = vsel %vm215, %v297, %v296
        %v299 = vsub.s32 4, %v275
        %v300 = vsel %vm215, %v299, %v275
        %v301 = vsel %vm214, %v201, %v298
        %v302 = vsel %vm214, 0, %v300
        %v303 = vcosq.f32.pop %v301
        %v304 = vsinq.f32.pop %v301
        %vm305 = vweird.f32 %v201
        %v306 = vadd.s32 %v302, 3
        %v307 = vand.u32 %v306, 3
        %vm308 = vcmp.lt.s32.totalorder %v307, 2
        %vm309 = vcmp.eq.s32.totalorder %v307, 0
        %v310 = vxor.u32 %v304, 2147483648
        %v311 = vsel %vm309, %v303, %v310
        %vm312 = vcmp.eq.s32.totalorder %v307, 2
        %v313 = vxor.u32 %v303, 2147483648
        %v314 = vsel %vm312, %v313, %v304
        %v315 = vsel %vm308, %v311, %v314
        %v316 = vsel %vm305, nan, %v315
        %v317 = vand.u32 2147483647, %v202
        %vm318 = vcmp.le.f32.partialorder %v317, 0.7853982
        %vm319 = vcmp.lt.s32.totalorder %v202, 0
        %v320 = vand.u32 %v202, 2139095040
        %v321 = vshrl.u32 %v320, 23
        %v322 = vsub.s32 %v321, 127
        %v323 = vand.u32 2147483647, %v202
        %v324 = vand.u32 %v323, 8388607
        %v325 = vor.u32 %v324, 8388608
        %v326 = vsub.s32 0, %v325
        %v327 = vadd.s32 %v322, 1
        %vm328 = vcmp.gt.s32.totalorder %v327, 0
        %v329 = vsel %vm328, %v327, 0
        %v330 = vshrl.u32 %v329, 5
        %v331 = vand.u32 %v329, 31
        %v332 = vsub.s32 32, %v331
        %v333 = vshrl.u32 683565275, %v332
        %v334 = vshll.u32 683565275, %v331
        %v335 = vshrl.u32 2475754826, %v332
        %v336 = vor.u32 %v334, %v335
        %v337 = vshll.u32 2475754826, %v331
        %v338 = vshrl.u32 2131351028, %v332
        %v339 = vor.u32 %v337, %v338
        %v340 = vshll.u32 2131351028, %v331
        %v341 = vshrl.u32 2102212464, %v332
        %v342 = vor.u32 %v340, %v341
        %v343 = vshll.u32 2102212464, %v331
        %v344 = vshrl.u32 920167782, %v332
        %v345 = vor.u32 %v343, %v344
        %v346 = vshll.u32 920167782, %v331
        %v347 = vshrl.u32 1326507024, %v332
        %v348 = vor.u32 %v346, %v347
        %vm349 = vcmp.lt.s32.totalorder %v330, 1
        %vm350 = vcmp.lt.s32.totalorder %v330, 2
        %vm351 = vcmp.lt.s32.totalorder %v330, 3
        %vm352 = vcmp.lt.s32.totalorder %v330, 4
        %v353 = vsel %vm349, %v333, %v336
        %v354 = vsel %vm352, %v342, 2102212464
        %v355 = vsel %vm351, %v339, %v354
        %v356 = vsel %vm350, %v353, %v355
        %v357 = vsel %vm349, %v336, %v339
        %v358 = vsel %vm352, %v345, 920167782
        %v359 = vsel %vm351, %v342, %v358
        %v360 = vsel %vm350, %v357, %v359
        %v361 = vsel %vm349, %v339, %v342
        %v362 = vsel %vm352, %v348, 1326507024
        %v363 = vsel %vm351, %v345, %v362
        %v364 = vsel %vm350, %v361, %v363
        %v365 = vshll.u32 %v325, 8
        %v366 = vmul.u32.u64.compose %v365, %v364
        %v367 = vextract.low.u32 %v366
        %v368 = vextract.high.u32 %v366
        %v369 = vmul.u32.u64.compose %v365, %v360
        %v370 = vextract.low.u32 %v369
        %v371 = vextract.high.u32 %v369
        %v372 = vmul.u32 %v365, %v356
        %v373 = vadd.s32 %v368, %v370
        %vm374 = vc.u32 %v368, %v370
        %v375 = vadd.s32 %v371, 1
        %v376 = vsel %vm374, %v375, %v371
        %v377 = vadd.s32 %v372, %v376
        %v378 = vadd.s32 %v377, 536870912
        %v379 = vshrl.u32 %v378, 30
        %v380 = vshll.u32 %v379, 30
        %v381 = vsub.s32 %v377, %v380
        %vm382 = vcmp.lt.s32.totalorder %v381, 0
        %v383 = vsub.s32 0, %v381
        %v384 = vsel %vm382, %v383, %v381
        %v385 = vclz %v384
        %v386 = vsub.s32 %v385, 2
        %vm387 = vcmp.gt.s32.totalorder 0, %v386
        %v388 = vsel %vm387, 0, %v386
        %v389 = vsub.s32 32, %v388
        %v390 = vshll.u32 %v381, %v388
        %v391 = vshrl.u32 %v373, %v389
        %v392 = vor.u32 %v390, %v391
        %v393 = vsub.s32 4294967266, %v388
        %v394 = vadd.s32 %v393, 127
        %v395 = vshll.u32 %v394, 23
        %v396 = vor.u32 4788187, %v395
        %v397 = vand.u32 2147483647, %v396
        %v399 = vcvt.s32.f32 %v392
        %v400 = vmul.f32 %v399, %v397
        %v401 = vxor.u32 %v400, 2147483648
        %v402 = vsel %vm319, %v401, %v400
        %v403 = vsub.s32 4, %v379
        %v404 = vsel %vm319, %v403, %v379
        %v405 = vsel %vm318, %v202, %v402
        %v406 = vsel %vm318, 0, %v404
        %v407 = vcosq.f32.pop %v405
        %v408 = vsinq.f32.pop %v405
        %vm409 = vweird.f32 %v202
        %v410 = vadd.s32 %v406, 3
        %v411 = vand.u32 %v410, 3
        %vm412 = vcmp.lt.s32.totalorder %v411, 2
        %vm413 = vcmp.eq.s32.totalorder %v411, 0
        %v414 = vxor.u32 %v408, 2147483648
        %v415 = vsel %vm413, %v407, %v414
        %vm416 = vcmp.eq.s32.totalorder %v411, 2
        %v417 = vxor.u32 %v407, 2147483648
        %v418 = vsel %vm416, %v417, %v408
        %v419 = vsel %vm412, %v415, %v418
        %v420 = vsel %vm409, nan, %v419
        %v421 = vand.u32 2147483647, %v203
        %vm422 = vcmp.le.f32.partialorder %v421, 0.7853982
        %vm423 = vcmp.lt.s32.totalorder %v203, 0
        %v424 = vand.u32 %v203, 2139095040
        %v425 = vshrl.u32 %v424, 23
        %v426 = vsub.s32 %v425, 127
        %v427 = vand.u32 2147483647, %v203
        %v428 = vand.u32 %v427, 8388607
        %v429 = vor.u32 %v428, 8388608
        %v430 = vsub.s32 0, %v429
        %v431 = vadd.s32 %v426, 1
        %vm432 = vcmp.gt.s32.totalorder %v431, 0
        %v433 = vsel %vm432, %v431, 0
        %v434 = vshrl.u32 %v433, 5
        %v435 = vand.u32 %v433, 31
        %v436 = vsub.s32 32, %v435
        %v437 = vshrl.u32 683565275, %v436
        %v438 = vshll.u32 683565275, %v435
        %v439 = vshrl.u32 2475754826, %v436
        %v440 = vor.u32 %v438, %v439
        %v441 = vshll.u32 2475754826, %v435
        %v442 = vshrl.u32 2131351028, %v436
        %v443 = vor.u32 %v441, %v442
        %v444 = vshll.u32 2131351028, %v435
        %v445 = vshrl.u32 2102212464, %v436
        %v446 = vor.u32 %v444, %v445
        %v447 = vshll.u32 2102212464, %v435
        %v448 = vshrl.u32 920167782, %v436
        %v449 = vor.u32 %v447, %v448
        %v450 = vshll.u32 920167782, %v435
        %v451 = vshrl.u32 1326507024, %v436
        %v452 = vor.u32 %v450, %v451
        %vm453 = vcmp.lt.s32.totalorder %v434, 1
        %vm454 = vcmp.lt.s32.totalorder %v434, 2
        %vm455 = vcmp.lt.s32.totalorder %v434, 3
        %vm456 = vcmp.lt.s32.totalorder %v434, 4
        %v457 = vsel %vm453, %v437, %v440
        %v458 = vsel %vm456, %v446, 2102212464
        %v459 = vsel %vm455, %v443, %v458
        %v460 = vsel %vm454, %v457, %v459
        %v461 = vsel %vm453, %v440, %v443
        %v462 = vsel %vm456, %v449, 920167782
        %v463 = vsel %vm455, %v446, %v462
        %v464 = vsel %vm454, %v461, %v463
        %v465 = vsel %vm453, %v443, %v446
        %v466 = vsel %vm456, %v452, 1326507024
        %v467 = vsel %vm455, %v449, %v466
        %v468 = vsel %vm454, %v465, %v467
        %v469 = vshll.u32 %v429, 8
        %v470 = vmul.u32.u64.compose %v469, %v468
        %v471 = vextract.low.u32 %v470
        %v472 = vextract.high.u32 %v470
        %v473 = vmul.u32.u64.compose %v469, %v464
        %v474 = vextract.low.u32 %v473
        %v475 = vextract.high.u32 %v473
        %v476 = vmul.u32 %v469, %v460
        %v477 = vadd.s32 %v472, %v474
        %vm478 = vc.u32 %v472, %v474
        %v479 = vadd.s32 %v475, 1
        %v480 = vsel %vm478, %v479, %v475
        %v481 = vadd.s32 %v476, %v480
        %v482 = vadd.s32 %v481, 536870912
        %v483 = vshrl.u32 %v482, 30
        %v484 = vshll.u32 %v483, 30
        %v485 = vsub.s32 %v481, %v484
        %vm486 = vcmp.lt.s32.totalorder %v485, 0
        %v487 = vsub.s32 0, %v485
        %v488 = vsel %vm486, %v487, %v485
        %v489 = vclz %v488
        %v490 = vsub.s32 %v489, 2
        %vm491 = vcmp.gt.s32.totalorder 0, %v490
        %v492 = vsel %vm491, 0, %v490
        %v493 = vsub.s32 32, %v492
        %v494 = vshll.u32 %v485, %v492
        %v495 = vshrl.u32 %v477, %v493
        %v496 = vor.u32 %v494, %v495
        %v497 = vsub.s32 4294967266, %v492
        %v498 = vadd.s32 %v497, 127
        %v499 = vshll.u32 %v498, 23
        %v500 = vor.u32 4788187, %v499
        %v501 = vand.u32 2147483647, %v500
        %v503 = vcvt.s32.f32 %v496
        %v504 = vmul.f32 %v503, %v501
        %v505 = vxor.u32 %v504, 2147483648
        %v506 = vsel %vm423, %v505, %v504
        %v507 = vsub.s32 4, %v483
        %v508 = vsel %vm423, %v507, %v483
        %v509 = vsel %vm422, %v203, %v506
        %v510 = vsel %vm422, 0, %v508
        %v511 = vcosq.f32.pop %v509
        %v512 = vsinq.f32.pop %v509
        %vm513 = vweird.f32 %v203
        %v514 = vadd.s32 %v510, 3
        %v515 = vand.u32 %v514, 3
        %vm516 = vcmp.lt.s32.totalorder %v515, 2
        %vm517 = vcmp.eq.s32.totalorder %v515, 0
        %v518 = vxor.u32 %v512, 2147483648
        %v519 = vsel %vm517, %v511, %v518
        %vm520 = vcmp.eq.s32.totalorder %v515, 2
        %v521 = vxor.u32 %v511, 2147483648
        %v522 = vsel %vm520, %v521, %v512
        %v523 = vsel %vm516, %v519, %v522
        %v524 = vsel %vm513, nan, %v523
        %v525 = vand.u32 2147483647, %v204
        %vm526 = vcmp.le.f32.partialorder %v525, 0.7853982
        %vm527 = vcmp.lt.s32.totalorder %v204, 0
        %v528 = vand.u32 %v204, 2139095040
        %v529 = vshrl.u32 %v528, 23
        %v530 = vsub.s32 %v529, 127
        %v531 = vand.u32 2147483647, %v204
        %v532 = vand.u32 %v531, 8388607
        %v533 = vor.u32 %v532, 8388608
        %v534 = vsub.s32 0, %v533
        %v535 = vadd.s32 %v530, 1
        %vm536 = vcmp.gt.s32.totalorder %v535, 0
        %v537 = vsel %vm536, %v535, 0
        %v538 = vshrl.u32 %v537, 5
        %v539 = vand.u32 %v537, 31
        %v540 = vsub.s32 32, %v539
        %v541 = vshrl.u32 683565275, %v540
        %v542 = vshll.u32 683565275, %v539
        %v543 = vshrl.u32 2475754826, %v540
        %v544 = vor.u32 %v542, %v543
        %v545 = vshll.u32 2475754826, %v539
        %v546 = vshrl.u32 2131351028, %v540
        %v547 = vor.u32 %v545, %v546
        %v548 = vshll.u32 2131351028, %v539
        %v549 = vshrl.u32 2102212464, %v540
        %v550 = vor.u32 %v548, %v549
        %v551 = vshll.u32 2102212464, %v539
        %v552 = vshrl.u32 920167782, %v540
        %v553 = vor.u32 %v551, %v552
        %v554 = vshll.u32 920167782, %v539
        %v555 = vshrl.u32 1326507024, %v540
        %v556 = vor.u32 %v554, %v555
        %vm557 = vcmp.lt.s32.totalorder %v538, 1
        %vm558 = vcmp.lt.s32.totalorder %v538, 2
        %vm559 = vcmp.lt.s32.totalorder %v538, 3
        %vm560 = vcmp.lt.s32.totalorder %v538, 4
        %v561 = vsel %vm557, %v541, %v544
        %v562 = vsel %vm560, %v550, 2102212464
        %v563 = vsel %vm559, %v547, %v562
        %v564 = vsel %vm558, %v561, %v563
        %v565 = vsel %vm557, %v544, %v547
        %v566 = vsel %vm560, %v553, 920167782
        %v567 = vsel %vm559, %v550, %v566
        %v568 = vsel %vm558, %v565, %v567
        %v569 = vsel %vm557, %v547, %v550
        %v570 = vsel %vm560, %v556, 1326507024
        %v571 = vsel %vm559, %v553, %v570
        %v572 = vsel %vm558, %v569, %v571
        %v573 = vshll.u32 %v533, 8
        %v574 = vmul.u32.u64.compose %v573, %v572
        %v575 = vextract.low.u32 %v574
        %v576 = vextract.high.u32 %v574
        %v577 = vmul.u32.u64.compose %v573, %v568
        %v578 = vextract.low.u32 %v577
        %v579 = vextract.high.u32 %v577
        %v580 = vmul.u32 %v573, %v564
        %v581 = vadd.s32 %v576, %v578
        %vm582 = vc.u32 %v576, %v578
        %v583 = vadd.s32 %v579, 1
        %v584 = vsel %vm582, %v583, %v579
        %v585 = vadd.s32 %v580, %v584
        %v586 = vadd.s32 %v585, 536870912
        %v587 = vshrl.u32 %v586, 30
        %v588 = vshll.u32 %v587, 30
        %v589 = vsub.s32 %v585, %v588
        %vm590 = vcmp.lt.s32.totalorder %v589, 0
        %v591 = vsub.s32 0, %v589
        %v592 = vsel %vm590, %v591, %v589
        %v593 = vclz %v592
        %v594 = vsub.s32 %v593, 2
        %vm595 = vcmp.gt.s32.totalorder 0, %v594
        %v596 = vsel %vm595, 0, %v594
        %v597 = vsub.s32 32, %v596
        %v598 = vshll.u32 %v589, %v596
        %v599 = vshrl.u32 %v581, %v597
        %v600 = vor.u32 %v598, %v599
        %v601 = vsub.s32 4294967266, %v596
        %v602 = vadd.s32 %v601, 127
        %v603 = vshll.u32 %v602, 23
        %v604 = vor.u32 4788187, %v603
        %v605 = vand.u32 2147483647, %v604
        %v607 = vcvt.s32.f32 %v600
        %v608 = vmul.f32 %v607, %v605
        %v609 = vxor.u32 %v608, 2147483648
        %v610 = vsel %vm527, %v609, %v608
        %v611 = vsub.s32 4, %v587
        %v612 = vsel %vm527, %v611, %v587
        %v613 = vsel %vm526, %v204, %v610
        %v614 = vsel %vm526, 0, %v612
        %v615 = vcosq.f32.pop %v613
        %v616 = vsinq.f32.pop %v613
        %vm617 = vweird.f32 %v204
        %v618 = vadd.s32 %v614, 3
        %v619 = vand.u32 %v618, 3
        %vm620 = vcmp.lt.s32.totalorder %v619, 2
        %vm621 = vcmp.eq.s32.totalorder %v619, 0
        %v622 = vxor.u32 %v616, 2147483648
        %v623 = vsel %vm621, %v615, %v622
        %vm624 = vcmp.eq.s32.totalorder %v619, 2
        %v625 = vxor.u32 %v615, 2147483648
        %v626 = vsel %vm624, %v625, %v616
        %v627 = vsel %vm620, %v623, %v626
        %v628 = vsel %vm617, nan, %v627
        %v629 = vand.u32 2147483647, %v201
        %vm630 = vcmp.le.f32.partialorder %v629, 0.7853982
        %vm631 = vcmp.lt.s32.totalorder %v201, 0
        %v632 = vand.u32 %v201, 2139095040
        %v633 = vshrl.u32 %v632, 23
        %v634 = vsub.s32 %v633, 127
        %v635 = vand.u32 2147483647, %v201
        %v636 = vand.u32 %v635, 8388607
        %v637 = vor.u32 %v636, 8388608
        %v638 = vsub.s32 0, %v637
        %v639 = vadd.s32 %v634, 1
        %vm640 = vcmp.gt.s32.totalorder %v639, 0
        %v641 = vsel %vm640, %v639, 0
        %v642 = vshrl.u32 %v641, 5
        %v643 = vand.u32 %v641, 31
        %v644 = vsub.s32 32, %v643
        %v645 = vshrl.u32 683565275, %v644
        %v646 = vshll.u32 683565275, %v643
        %v647 = vshrl.u32 2475754826, %v644
        %v648 = vor.u32 %v646, %v647
        %v649 = vshll.u32 2475754826, %v643
        %v650 = vshrl.u32 2131351028, %v644
        %v651 = vor.u32 %v649, %v650
        %v652 = vshll.u32 2131351028, %v643
        %v653 = vshrl.u32 2102212464, %v644
        %v654 = vor.u32 %v652, %v653
        %v655 = vshll.u32 2102212464, %v643
        %v656 = vshrl.u32 920167782, %v644
        %v657 = vor.u32 %v655, %v656
        %v658 = vshll.u32 920167782, %v643
        %v659 = vshrl.u32 1326507024, %v644
        %v660 = vor.u32 %v658, %v659
        %vm661 = vcmp.lt.s32.totalorder %v642, 1
        %vm662 = vcmp.lt.s32.totalorder %v642, 2
        %vm663 = vcmp.lt.s32.totalorder %v642, 3
        %vm664 = vcmp.lt.s32.totalorder %v642, 4
        %v665 = vsel %vm661, %v645, %v648
        %v666 = vsel %vm664, %v654, 2102212464
        %v667 = vsel %vm663, %v651, %v666
        %v668 = vsel %vm662, %v665, %v667
        %v669 = vsel %vm661, %v648, %v651
        %v670 = vsel %vm664, %v657, 920167782
        %v671 = vsel %vm663, %v654, %v670
        %v672 = vsel %vm662, %v669, %v671
        %v673 = vsel %vm661, %v651, %v654
        %v674 = vsel %vm664, %v660, 1326507024
        %v675 = vsel %vm663, %v657, %v674
        %v676 = vsel %vm662, %v673, %v675
        %v677 = vshll.u32 %v637, 8
        %v678 = vmul.u32.u64.compose %v677, %v676
        %v679 = vextract.low.u32 %v678
        %v680 = vextract.high.u32 %v678
        %v681 = vmul.u32.u64.compose %v677, %v672
        %v682 = vextract.low.u32 %v681
        %v683 = vextract.high.u32 %v681
        %v684 = vmul.u32 %v677, %v668
        %v685 = vadd.s32 %v680, %v682
        %vm686 = vc.u32 %v680, %v682
        %v687 = vadd.s32 %v683, 1
        %v688 = vsel %vm686, %v687, %v683
        %v689 = vadd.s32 %v684, %v688
        %v690 = vadd.s32 %v689, 536870912
        %v691 = vshrl.u32 %v690, 30
        %v692 = vshll.u32 %v691, 30
        %v693 = vsub.s32 %v689, %v692
        %vm694 = vcmp.lt.s32.totalorder %v693, 0
        %v695 = vsub.s32 0, %v693
        %v696 = vsel %vm694, %v695, %v693
        %v697 = vclz %v696
        %v698 = vsub.s32 %v697, 2
        %vm699 = vcmp.gt.s32.totalorder 0, %v698
        %v700 = vsel %vm699, 0, %v698
        %v701 = vsub.s32 32, %v700
        %v702 = vshll.u32 %v693, %v700
        %v703 = vshrl.u32 %v685, %v701
        %v704 = vor.u32 %v702, %v703
        %v705 = vsub.s32 4294967266, %v700
        %v706 = vadd.s32 %v705, 127
        %v707 = vshll.u32 %v706, 23
        %v708 = vor.u32 4788187, %v707
        %v709 = vand.u32 2147483647, %v708
        %v711 = vcvt.s32.f32 %v704
        %v712 = vmul.f32 %v711, %v709
        %v713 = vxor.u32 %v712, 2147483648
        %v714 = vsel %vm631, %v713, %v712
        %v715 = vsub.s32 4, %v691
        %v716 = vsel %vm631, %v715, %v691
        %v717 = vsel %vm630, %v201, %v714
        %v718 = vsel %vm630, 0, %v716
        %v719 = vcosq.f32.pop %v717
        %v720 = vsinq.f32.pop %v717
        %vm721 = vweird.f32 %v201
        %v722 = vand.u32 %v718, 3
        %vm723 = vcmp.lt.s32.totalorder %v722, 2
        %vm724 = vcmp.eq.s32.totalorder %v722, 0
        %v725 = vxor.u32 %v720, 2147483648
        %v726 = vsel %vm724, %v719, %v725
        %vm727 = vcmp.eq.s32.totalorder %v722, 2
        %v728 = vxor.u32 %v719, 2147483648
        %v729 = vsel %vm727, %v728, %v720
        %v730 = vsel %vm723, %v726, %v729
        %v731 = vsel %vm721, nan, %v730
        %v732 = vand.u32 2147483647, %v202
        %vm733 = vcmp.le.f32.partialorder %v732, 0.7853982
        %vm734 = vcmp.lt.s32.totalorder %v202, 0
        %v735 = vand.u32 %v202, 2139095040
        %v736 = vshrl.u32 %v735, 23
        %v737 = vsub.s32 %v736, 127
        %v738 = vand.u32 2147483647, %v202
        %v739 = vand.u32 %v738, 8388607
        %v740 = vor.u32 %v739, 8388608
        %v741 = vsub.s32 0, %v740
        %v742 = vadd.s32 %v737, 1
        %vm743 = vcmp.gt.s32.totalorder %v742, 0
        %v744 = vsel %vm743, %v742, 0
        %v745 = vshrl.u32 %v744, 5
        %v746 = vand.u32 %v744, 31
        %v747 = vsub.s32 32, %v746
        %v748 = vshrl.u32 683565275, %v747
        %v749 = vshll.u32 683565275, %v746
        %v750 = vshrl.u32 2475754826, %v747
        %v751 = vor.u32 %v749, %v750
        %v752 = vshll.u32 2475754826, %v746
        %v753 = vshrl.u32 2131351028, %v747
        %v754 = vor.u32 %v752, %v753
        %v755 = vshll.u32 2131351028, %v746
        %v756 = vshrl.u32 2102212464, %v747
        %v757 = vor.u32 %v755, %v756
        %v758 = vshll.u32 2102212464, %v746
        %v759 = vshrl.u32 920167782, %v747
        %v760 = vor.u32 %v758, %v759
        %v761 = vshll.u32 920167782, %v746
        %v762 = vshrl.u32 1326507024, %v747
        %v763 = vor.u32 %v761, %v762
        %vm764 = vcmp.lt.s32.totalorder %v745, 1
        %vm765 = vcmp.lt.s32.totalorder %v745, 2
        %vm766 = vcmp.lt.s32.totalorder %v745, 3
        %vm767 = vcmp.lt.s32.totalorder %v745, 4
        %v768 = vsel %vm764, %v748, %v751
        %v769 = vsel %vm767, %v757, 2102212464
        %v770 = vsel %vm766, %v754, %v769
        %v771 = vsel %vm765, %v768, %v770
        %v772 = vsel %vm764, %v751, %v754
        %v773 = vsel %vm767, %v760, 920167782
        %v774 = vsel %vm766, %v757, %v773
        %v775 = vsel %vm765, %v772, %v774
        %v776 = vsel %vm764, %v754, %v757
        %v777 = vsel %vm767, %v763, 1326507024
        %v778 = vsel %vm766, %v760, %v777
        %v779 = vsel %vm765, %v776, %v778
        %v780 = vshll.u32 %v740, 8
        %v781 = vmul.u32.u64.compose %v780, %v779
        %v782 = vextract.low.u32 %v781
        %v783 = vextract.high.u32 %v781
        %v784 = vmul.u32.u64.compose %v780, %v775
        %v785 = vextract.low.u32 %v784
        %v786 = vextract.high.u32 %v784
        %v787 = vmul.u32 %v780, %v771
        %v788 = vadd.s32 %v783, %v785
        %vm789 = vc.u32 %v783, %v785
        %v790 = vadd.s32 %v786, 1
        %v791 = vsel %vm789, %v790, %v786
        %v792 = vadd.s32 %v787, %v791
        %v793 = vadd.s32 %v792, 536870912
        %v794 = vshrl.u32 %v793, 30
        %v795 = vshll.u32 %v794, 30
        %v796 = vsub.s32 %v792, %v795
        %vm797 = vcmp.lt.s32.totalorder %v796, 0
        %v798 = vsub.s32 0, %v796
        %v799 = vsel %vm797, %v798, %v796
        %v800 = vclz %v799
        %v801 = vsub.s32 %v800, 2
        %vm802 = vcmp.gt.s32.totalorder 0, %v801
        %v803 = vsel %vm802, 0, %v801
        %v804 = vsub.s32 32, %v803
        %v805 = vshll.u32 %v796, %v803
        %v806 = vshrl.u32 %v788, %v804
        %v807 = vor.u32 %v805, %v806
        %v808 = vsub.s32 4294967266, %v803
        %v809 = vadd.s32 %v808, 127
        %v810 = vshll.u32 %v809, 23
        %v811 = vor.u32 4788187, %v810
        %v812 = vand.u32 2147483647, %v811
        %v814 = vcvt.s32.f32 %v807
        %v815 = vmul.f32 %v814, %v812
        %v816 = vxor.u32 %v815, 2147483648
        %v817 = vsel %vm734, %v816, %v815
        %v818 = vsub.s32 4, %v794
        %v819 = vsel %vm734, %v818, %v794
        %v820 = vsel %vm733, %v202, %v817
        %v821 = vsel %vm733, 0, %v819
        %v822 = vcosq.f32.pop %v820
        %v823 = vsinq.f32.pop %v820
        %vm824 = vweird.f32 %v202
        %v825 = vand.u32 %v821, 3
        %vm826 = vcmp.lt.s32.totalorder %v825, 2
        %vm827 = vcmp.eq.s32.totalorder %v825, 0
        %v828 = vxor.u32 %v823, 2147483648
        %v829 = vsel %vm827, %v822, %v828
        %vm830 = vcmp.eq.s32.totalorder %v825, 2
        %v831 = vxor.u32 %v822, 2147483648
        %v832 = vsel %vm830, %v831, %v823
        %v833 = vsel %vm826, %v829, %v832
        %v834 = vsel %vm824, nan, %v833
        %v835 = vand.u32 2147483647, %v203
        %vm836 = vcmp.le.f32.partialorder %v835, 0.7853982
        %vm837 = vcmp.lt.s32.totalorder %v203, 0
        %v838 = vand.u32 %v203, 2139095040
        %v839 = vshrl.u32 %v838, 23
        %v840 = vsub.s32 %v839, 127
        %v841 = vand.u32 2147483647, %v203
        %v842 = vand.u32 %v841, 8388607
        %v843 = vor.u32 %v842, 8388608
        %v844 = vsub.s32 0, %v843
        %v845 = vadd.s32 %v840, 1
        %vm846 = vcmp.gt.s32.totalorder %v845, 0
        %v847 = vsel %vm846, %v845, 0
        %v848 = vshrl.u32 %v847, 5
        %v849 = vand.u32 %v847, 31
        %v850 = vsub.s32 32, %v849
        %v851 = vshrl.u32 683565275, %v850
        %v852 = vshll.u32 683565275, %v849
        %v853 = vshrl.u32 2475754826, %v850
        %v854 = vor.u32 %v852, %v853
        %v855 = vshll.u32 2475754826, %v849
        %v856 = vshrl.u32 2131351028, %v850
        %v857 = vor.u32 %v855, %v856
        %v858 = vshll.u32 2131351028, %v849
        %v859 = vshrl.u32 2102212464, %v850
        %v860 = vor.u32 %v858, %v859
        %v861 = vshll.u32 2102212464, %v849
        %v862 = vshrl.u32 920167782, %v850
        %v863 = vor.u32 %v861, %v862
        %v864 = vshll.u32 920167782, %v849
        %v865 = vshrl.u32 1326507024, %v850
        %v866 = vor.u32 %v864, %v865
        %vm867 = vcmp.lt.s32.totalorder %v848, 1
        %vm868 = vcmp.lt.s32.totalorder %v848, 2
        %vm869 = vcmp.lt.s32.totalorder %v848, 3
        %vm870 = vcmp.lt.s32.totalorder %v848, 4
        %v871 = vsel %vm867, %v851, %v854
        %v872 = vsel %vm870, %v860, 2102212464
        %v873 = vsel %vm869, %v857, %v872
        %v874 = vsel %vm868, %v871, %v873
        %v875 = vsel %vm867, %v854, %v857
        %v876 = vsel %vm870, %v863, 920167782
        %v877 = vsel %vm869, %v860, %v876
        %v878 = vsel %vm868, %v875, %v877
        %v879 = vsel %vm867, %v857, %v860
        %v880 = vsel %vm870, %v866, 1326507024
        %v881 = vsel %vm869, %v863, %v880
        %v882 = vsel %vm868, %v879, %v881
        %v883 = vshll.u32 %v843, 8
        %v884 = vmul.u32.u64.compose %v883, %v882
        %v885 = vextract.low.u32 %v884
        %v886 = vextract.high.u32 %v884
        %v887 = vmul.u32.u64.compose %v883, %v878
        %v888 = vextract.low.u32 %v887
        %v889 = vextract.high.u32 %v887
        %v890 = vmul.u32 %v883, %v874
        %v891 = vadd.s32 %v886, %v888
        %vm892 = vc.u32 %v886, %v888
        %v893 = vadd.s32 %v889, 1
        %v894 = vsel %vm892, %v893, %v889
        %v895 = vadd.s32 %v890, %v894
        %v896 = vadd.s32 %v895, 536870912
        %v897 = vshrl.u32 %v896, 30
        %v898 = vshll.u32 %v897, 30
        %v899 = vsub.s32 %v895, %v898
        %vm900 = vcmp.lt.s32.totalorder %v899, 0
        %v901 = vsub.s32 0, %v899
        %v902 = vsel %vm900, %v901, %v899
        %v903 = vclz %v902
        %v904 = vsub.s32 %v903, 2
        %vm905 = vcmp.gt.s32.totalorder 0, %v904
        %v906 = vsel %vm905, 0, %v904
        %v907 = vsub.s32 32, %v906
        %v908 = vshll.u32 %v899, %v906
        %v909 = vshrl.u32 %v891, %v907
        %v910 = vor.u32 %v908, %v909
        %v911 = vsub.s32 4294967266, %v906
        %v912 = vadd.s32 %v911, 127
        %v913 = vshll.u32 %v912, 23
        %v914 = vor.u32 4788187, %v913
        %v915 = vand.u32 2147483647, %v914
        %v917 = vcvt.s32.f32 %v910
        %v918 = vmul.f32 %v917, %v915
        %v919 = vxor.u32 %v918, 2147483648
        %v920 = vsel %vm837, %v919, %v918
        %v921 = vsub.s32 4, %v897
        %v922 = vsel %vm837, %v921, %v897
        %v923 = vsel %vm836, %v203, %v920
        %v924 = vsel %vm836, 0, %v922
        %v925 = vcosq.f32.pop %v923
        %v926 = vsinq.f32.pop %v923
        %vm927 = vweird.f32 %v203
        %v928 = vand.u32 %v924, 3
        %vm929 = vcmp.lt.s32.totalorder %v928, 2
        %vm930 = vcmp.eq.s32.totalorder %v928, 0
        %v931 = vxor.u32 %v926, 2147483648
        %v932 = vsel %vm930, %v925, %v931
        %vm933 = vcmp.eq.s32.totalorder %v928, 2
        %v934 = vxor.u32 %v925, 2147483648
        %v935 = vsel %vm933, %v934, %v926
        %v936 = vsel %vm929, %v932, %v935
        %v937 = vsel %vm927, nan, %v936
        %v938 = vand.u32 2147483647, %v204
        %vm939 = vcmp.le.f32.partialorder %v938, 0.7853982
        %vm940 = vcmp.lt.s32.totalorder %v204, 0
        %v941 = vand.u32 %v204, 2139095040
        %v942 = vshrl.u32 %v941, 23
        %v943 = vsub.s32 %v942, 127
        %v944 = vand.u32 2147483647, %v204
        %v945 = vand.u32 %v944, 8388607
        %v946 = vor.u32 %v945, 8388608
        %v947 = vsub.s32 0, %v946
        %v948 = vadd.s32 %v943, 1
        %vm949 = vcmp.gt.s32.totalorder %v948, 0
        %v950 = vsel %vm949, %v948, 0
        %v951 = vshrl.u32 %v950, 5
        %v952 = vand.u32 %v950, 31
        %v953 = vsub.s32 32, %v952
        %v954 = vshrl.u32 683565275, %v953
        %v955 = vshll.u32 683565275, %v952
        %v956 = vshrl.u32 2475754826, %v953
        %v957 = vor.u32 %v955, %v956
        %v958 = vshll.u32 2475754826, %v952
        %v959 = vshrl.u32 2131351028, %v953
        %v960 = vor.u32 %v958, %v959
        %v961 = vshll.u32 2131351028, %v952
        %v962 = vshrl.u32 2102212464, %v953
        %v963 = vor.u32 %v961, %v962
        %v964 = vshll.u32 2102212464, %v952
        %v965 = vshrl.u32 920167782, %v953
        %v966 = vor.u32 %v964, %v965
        %v967 = vshll.u32 920167782, %v952
        %v968 = vshrl.u32 1326507024, %v953
        %v969 = vor.u32 %v967, %v968
        %vm970 = vcmp.lt.s32.totalorder %v951, 1
        %vm971 = vcmp.lt.s32.totalorder %v951, 2
        %vm972 = vcmp.lt.s32.totalorder %v951, 3
        %vm973 = vcmp.lt.s32.totalorder %v951, 4
        %v974 = vsel %vm970, %v954, %v957
        %v975 = vsel %vm973, %v963, 2102212464
        %v976 = vsel %vm972, %v960, %v975
        %v977 = vsel %vm971, %v974, %v976
        %v978 = vsel %vm970, %v957, %v960
        %v979 = vsel %vm973, %v966, 920167782
        %v980 = vsel %vm972, %v963, %v979
        %v981 = vsel %vm971, %v978, %v980
        %v982 = vsel %vm970, %v960, %v963
        %v983 = vsel %vm973, %v969, 1326507024
        %v984 = vsel %vm972, %v966, %v983
        %v985 = vsel %vm971, %v982, %v984
        %v986 = vshll.u32 %v946, 8
        %v987 = vmul.u32.u64.compose %v986, %v985
        %v988 = vextract.low.u32 %v987
        %v989 = vextract.high.u32 %v987
        %v990 = vmul.u32.u64.compose %v986, %v981
        %v991 = vextract.low.u32 %v990
        %v992 = vextract.high.u32 %v990
        %v993 = vmul.u32 %v986, %v977
        %v994 = vadd.s32 %v989, %v991
        %vm995 = vc.u32 %v989, %v991
        %v996 = vadd.s32 %v992, 1
        %v997 = vsel %vm995, %v996, %v992
        %v998 = vadd.s32 %v993, %v997
        %v999 = vadd.s32 %v998, 536870912
        %v1000 = vshrl.u32 %v999, 30
        %v1001 = vshll.u32 %v1000, 30
        %v1002 = vsub.s32 %v998, %v1001
        %vm1003 = vcmp.lt.s32.totalorder %v1002, 0
        %v1004 = vsub.s32 0, %v1002
        %v1005 = vsel %vm1003, %v1004, %v1002
        %v1006 = vclz %v1005
        %v1007 = vsub.s32 %v1006, 2
        %vm1008 = vcmp.gt.s32.totalorder 0, %v1007
        %v1009 = vsel %vm1008, 0, %v1007
        %v1010 = vsub.s32 32, %v1009
        %v1011 = vshll.u32 %v1002, %v1009
        %v1012 = vshrl.u32 %v994, %v1010
        %v1013 = vor.u32 %v1011, %v1012
        %v1014 = vsub.s32 4294967266, %v1009
        %v1015 = vadd.s32 %v1014, 127
        %v1016 = vshll.u32 %v1015, 23
        %v1017 = vor.u32 4788187, %v1016
        %v1018 = vand.u32 2147483647, %v1017
        %v1020 = vcvt.s32.f32 %v1013
        %v1021 = vmul.f32 %v1020, %v1018
        %v1022 = vxor.u32 %v1021, 2147483648
        %v1023 = vsel %vm940, %v1022, %v1021
        %v1024 = vsub.s32 4, %v1000
        %v1025 = vsel %vm940, %v1024, %v1000
        %v1026 = vsel %vm939, %v204, %v1023
        %v1027 = vsel %vm939, 0, %v1025
        %v1028 = vcosq.f32.pop %v1026
        %v1029 = vsinq.f32.pop %v1026
        %vm1030 = vweird.f32 %v204
        %v1031 = vand.u32 %v1027, 3
        %vm1032 = vcmp.lt.s32.totalorder %v1031, 2
        %vm1033 = vcmp.eq.s32.totalorder %v1031, 0
        %v1034 = vxor.u32 %v1029, 2147483648
        %v1035 = vsel %vm1033, %v1028, %v1034
        %vm1036 = vcmp.eq.s32.totalorder %v1031, 2
        %v1037 = vxor.u32 %v1028, 2147483648
        %v1038 = vsel %vm1036, %v1037, %v1029
        %v1039 = vsel %vm1032, %v1035, %v1038
        %v1040 = vsel %vm1030, nan, %v1039
        %v1041 = vand.u32 2147483647, %v209
        %vm1042 = vcmp.le.f32.partialorder %v1041, 0.7853982
        %vm1043 = vcmp.lt.s32.totalorder %v209, 0
        %v1044 = vand.u32 %v209, 2139095040
        %v1045 = vshrl.u32 %v1044, 23
        %v1046 = vsub.s32 %v1045, 127
        %v1047 = vand.u32 2147483647, %v209
        %v1048 = vand.u32 %v1047, 8388607
        %v1049 = vor.u32 %v1048, 8388608
        %v1050 = vsub.s32 0, %v1049
        %v1051 = vadd.s32 %v1046, 1
        %vm1052 = vcmp.gt.s32.totalorder %v1051, 0
        %v1053 = vsel %vm1052, %v1051, 0
        %v1054 = vshrl.u32 %v1053, 5
        %v1055 = vand.u32 %v1053, 31
        %v1056 = vsub.s32 32, %v1055
        %v1057 = vshrl.u32 683565275, %v1056
        %v1058 = vshll.u32 683565275, %v1055
        %v1059 = vshrl.u32 2475754826, %v1056
        %v1060 = vor.u32 %v1058, %v1059
        %v1061 = vshll.u32 2475754826, %v1055
        %v1062 = vshrl.u32 2131351028, %v1056
        %v1063 = vor.u32 %v1061, %v1062
        %v1064 = vshll.u32 2131351028, %v1055
        %v1065 = vshrl.u32 2102212464, %v1056
        %v1066 = vor.u32 %v1064, %v1065
        %v1067 = vshll.u32 2102212464, %v1055
        %v1068 = vshrl.u32 920167782, %v1056
        %v1069 = vor.u32 %v1067, %v1068
        %v1070 = vshll.u32 920167782, %v1055
        %v1071 = vshrl.u32 1326507024, %v1056
        %v1072 = vor.u32 %v1070, %v1071
        %vm1073 = vcmp.lt.s32.totalorder %v1054, 1
        %vm1074 = vcmp.lt.s32.totalorder %v1054, 2
        %vm1075 = vcmp.lt.s32.totalorder %v1054, 3
        %vm1076 = vcmp.lt.s32.totalorder %v1054, 4
        %v1077 = vsel %vm1073, %v1057, %v1060
        %v1078 = vsel %vm1076, %v1066, 2102212464
        %v1079 = vsel %vm1075, %v1063, %v1078
        %v1080 = vsel %vm1074, %v1077, %v1079
        %v1081 = vsel %vm1073, %v1060, %v1063
        %v1082 = vsel %vm1076, %v1069, 920167782
        %v1083 = vsel %vm1075, %v1066, %v1082
        %v1084 = vsel %vm1074, %v1081, %v1083
        %v1085 = vsel %vm1073, %v1063, %v1066
        %v1086 = vsel %vm1076, %v1072, 1326507024
        %v1087 = vsel %vm1075, %v1069, %v1086
        %v1088 = vsel %vm1074, %v1085, %v1087
        %v1089 = vshll.u32 %v1049, 8
        %v1090 = vmul.u32.u64.compose %v1089, %v1088
        %v1091 = vextract.low.u32 %v1090
        %v1092 = vextract.high.u32 %v1090
        %v1093 = vmul.u32.u64.compose %v1089, %v1084
        %v1094 = vextract.low.u32 %v1093
        %v1095 = vextract.high.u32 %v1093
        %v1096 = vmul.u32 %v1089, %v1080
        %v1097 = vadd.s32 %v1092, %v1094
        %vm1098 = vc.u32 %v1092, %v1094
        %v1099 = vadd.s32 %v1095, 1
        %v1100 = vsel %vm1098, %v1099, %v1095
        %v1101 = vadd.s32 %v1096, %v1100
        %v1102 = vadd.s32 %v1101, 536870912
        %v1103 = vshrl.u32 %v1102, 30
        %v1104 = vshll.u32 %v1103, 30
        %v1105 = vsub.s32 %v1101, %v1104
        %vm1106 = vcmp.lt.s32.totalorder %v1105, 0
        %v1107 = vsub.s32 0, %v1105
        %v1108 = vsel %vm1106, %v1107, %v1105
        %v1109 = vclz %v1108
        %v1110 = vsub.s32 %v1109, 2
        %vm1111 = vcmp.gt.s32.totalorder 0, %v1110
        %v1112 = vsel %vm1111, 0, %v1110
        %v1113 = vsub.s32 32, %v1112
        %v1114 = vshll.u32 %v1105, %v1112
        %v1115 = vshrl.u32 %v1097, %v1113
        %v1116 = vor.u32 %v1114, %v1115
        %v1117 = vsub.s32 4294967266, %v1112
        %v1118 = vadd.s32 %v1117, 127
        %v1119 = vshll.u32 %v1118, 23
        %v1120 = vor.u32 4788187, %v1119
        %v1121 = vand.u32 2147483647, %v1120
        %v1123 = vcvt.s32.f32 %v1116
        %v1124 = vmul.f32 %v1123, %v1121
        %v1125 = vxor.u32 %v1124, 2147483648
        %v1126 = vsel %vm1043, %v1125, %v1124
        %v1127 = vsub.s32 4, %v1103
        %v1128 = vsel %vm1043, %v1127, %v1103
        %v1129 = vsel %vm1042, %v209, %v1126
        %v1130 = vsel %vm1042, 0, %v1128
        %v1131 = vcosq.f32.pop %v1129
        %v1132 = vsinq.f32.pop %v1129
        %vm1133 = vweird.f32 %v209
        %v1134 = vadd.s32 %v1130, 3
        %v1135 = vand.u32 %v1134, 3
        %vm1136 = vcmp.lt.s32.totalorder %v1135, 2
        %vm1137 = vcmp.eq.s32.totalorder %v1135, 0
        %v1138 = vxor.u32 %v1132, 2147483648
        %v1139 = vsel %vm1137, %v1131, %v1138
        %vm1140 = vcmp.eq.s32.totalorder %v1135, 2
        %v1141 = vxor.u32 %v1131, 2147483648
        %v1142 = vsel %vm1140, %v1141, %v1132
        %v1143 = vsel %vm1136, %v1139, %v1142
        %v1144 = vsel %vm1133, nan, %v1143
        %v1145 = vand.u32 2147483647, %v210
        %vm1146 = vcmp.le.f32.partialorder %v1145, 0.7853982
        %vm1147 = vcmp.lt.s32.totalorder %v210, 0
        %v1148 = vand.u32 %v210, 2139095040
        %v1149 = vshrl.u32 %v1148, 23
        %v1150 = vsub.s32 %v1149, 127
        %v1151 = vand.u32 2147483647, %v210
        %v1152 = vand.u32 %v1151, 8388607
        %v1153 = vor.u32 %v1152, 8388608
        %v1154 = vsub.s32 0, %v1153
        %v1155 = vadd.s32 %v1150, 1
        %vm1156 = vcmp.gt.s32.totalorder %v1155, 0
        %v1157 = vsel %vm1156, %v1155, 0
        %v1158 = vshrl.u32 %v1157, 5
        %v1159 = vand.u32 %v1157, 31
        %v1160 = vsub.s32 32, %v1159
        %v1161 = vshrl.u32 683565275, %v1160
        %v1162 = vshll.u32 683565275, %v1159
        %v1163 = vshrl.u32 2475754826, %v1160
        %v1164 = vor.u32 %v1162, %v1163
        %v1165 = vshll.u32 2475754826, %v1159
        %v1166 = vshrl.u32 2131351028, %v1160
        %v1167 = vor.u32 %v1165, %v1166
        %v1168 = vshll.u32 2131351028, %v1159
        %v1169 = vshrl.u32 2102212464, %v1160
        %v1170 = vor.u32 %v1168, %v1169
        %v1171 = vshll.u32 2102212464, %v1159
        %v1172 = vshrl.u32 920167782, %v1160
        %v1173 = vor.u32 %v1171, %v1172
        %v1174 = vshll.u32 920167782, %v1159
        %v1175 = vshrl.u32 1326507024, %v1160
        %v1176 = vor.u32 %v1174, %v1175
        %vm1177 = vcmp.lt.s32.totalorder %v1158, 1
        %vm1178 = vcmp.lt.s32.totalorder %v1158, 2
        %vm1179 = vcmp.lt.s32.totalorder %v1158, 3
        %vm1180 = vcmp.lt.s32.totalorder %v1158, 4
        %v1181 = vsel %vm1177, %v1161, %v1164
        %v1182 = vsel %vm1180, %v1170, 2102212464
        %v1183 = vsel %vm1179, %v1167, %v1182
        %v1184 = vsel %vm1178, %v1181, %v1183
        %v1185 = vsel %vm1177, %v1164, %v1167
        %v1186 = vsel %vm1180, %v1173, 920167782
        %v1187 = vsel %vm1179, %v1170, %v1186
        %v1188 = vsel %vm1178, %v1185, %v1187
        %v1189 = vsel %vm1177, %v1167, %v1170
        %v1190 = vsel %vm1180, %v1176, 1326507024
        %v1191 = vsel %vm1179, %v1173, %v1190
        %v1192 = vsel %vm1178, %v1189, %v1191
        %v1193 = vshll.u32 %v1153, 8
        %v1194 = vmul.u32.u64.compose %v1193, %v1192
        %v1195 = vextract.low.u32 %v1194
        %v1196 = vextract.high.u32 %v1194
        %v1197 = vmul.u32.u64.compose %v1193, %v1188
        %v1198 = vextract.low.u32 %v1197
        %v1199 = vextract.high.u32 %v1197
        %v1200 = vmul.u32 %v1193, %v1184
        %v1201 = vadd.s32 %v1196, %v1198
        %vm1202 = vc.u32 %v1196, %v1198
        %v1203 = vadd.s32 %v1199, 1
        %v1204 = vsel %vm1202, %v1203, %v1199
        %v1205 = vadd.s32 %v1200, %v1204
        %v1206 = vadd.s32 %v1205, 536870912
        %v1207 = vshrl.u32 %v1206, 30
        %v1208 = vshll.u32 %v1207, 30
        %v1209 = vsub.s32 %v1205, %v1208
        %vm1210 = vcmp.lt.s32.totalorder %v1209, 0
        %v1211 = vsub.s32 0, %v1209
        %v1212 = vsel %vm1210, %v1211, %v1209
        %v1213 = vclz %v1212
        %v1214 = vsub.s32 %v1213, 2
        %vm1215 = vcmp.gt.s32.totalorder 0, %v1214
        %v1216 = vsel %vm1215, 0, %v1214
        %v1217 = vsub.s32 32, %v1216
        %v1218 = vshll.u32 %v1209, %v1216
        %v1219 = vshrl.u32 %v1201, %v1217
        %v1220 = vor.u32 %v1218, %v1219
        %v1221 = vsub.s32 4294967266, %v1216
        %v1222 = vadd.s32 %v1221, 127
        %v1223 = vshll.u32 %v1222, 23
        %v1224 = vor.u32 4788187, %v1223
        %v1225 = vand.u32 2147483647, %v1224
        %v1227 = vcvt.s32.f32 %v1220
        %v1228 = vmul.f32 %v1227, %v1225
        %v1229 = vxor.u32 %v1228, 2147483648
        %v1230 = vsel %vm1147, %v1229, %v1228
        %v1231 = vsub.s32 4, %v1207
        %v1232 = vsel %vm1147, %v1231, %v1207
        %v1233 = vsel %vm1146, %v210, %v1230
        %v1234 = vsel %vm1146, 0, %v1232
        %v1235 = vcosq.f32.pop %v1233
        %v1236 = vsinq.f32.pop %v1233
        %vm1237 = vweird.f32 %v210
        %v1238 = vadd.s32 %v1234, 3
        %v1239 = vand.u32 %v1238, 3
        %vm1240 = vcmp.lt.s32.totalorder %v1239, 2
        %vm1241 = vcmp.eq.s32.totalorder %v1239, 0
        %v1242 = vxor.u32 %v1236, 2147483648
        %v1243 = vsel %vm1241, %v1235, %v1242
        %vm1244 = vcmp.eq.s32.totalorder %v1239, 2
        %v1245 = vxor.u32 %v1235, 2147483648
        %v1246 = vsel %vm1244, %v1245, %v1236
        %v1247 = vsel %vm1240, %v1243, %v1246
        %v1248 = vsel %vm1237, nan, %v1247
        %v1249 = vand.u32 2147483647, %v211
        %vm1250 = vcmp.le.f32.partialorder %v1249, 0.7853982
        %vm1251 = vcmp.lt.s32.totalorder %v211, 0
        %v1252 = vand.u32 %v211, 2139095040
        %v1253 = vshrl.u32 %v1252, 23
        %v1254 = vsub.s32 %v1253, 127
        %v1255 = vand.u32 2147483647, %v211
        %v1256 = vand.u32 %v1255, 8388607
        %v1257 = vor.u32 %v1256, 8388608
        %v1258 = vsub.s32 0, %v1257
        %v1259 = vadd.s32 %v1254, 1
        %vm1260 = vcmp.gt.s32.totalorder %v1259, 0
        %v1261 = vsel %vm1260, %v1259, 0
        %v1262 = vshrl.u32 %v1261, 5
        %v1263 = vand.u32 %v1261, 31
        %v1264 = vsub.s32 32, %v1263
        %v1265 = vshrl.u32 683565275, %v1264
        %v1266 = vshll.u32 683565275, %v1263
        %v1267 = vshrl.u32 2475754826, %v1264
        %v1268 = vor.u32 %v1266, %v1267
        %v1269 = vshll.u32 2475754826, %v1263
        %v1270 = vshrl.u32 2131351028, %v1264
        %v1271 = vor.u32 %v1269, %v1270
        %v1272 = vshll.u32 2131351028, %v1263
        %v1273 = vshrl.u32 2102212464, %v1264
        %v1274 = vor.u32 %v1272, %v1273
        %v1275 = vshll.u32 2102212464, %v1263
        %v1276 = vshrl.u32 920167782, %v1264
        %v1277 = vor.u32 %v1275, %v1276
        %v1278 = vshll.u32 920167782, %v1263
        %v1279 = vshrl.u32 1326507024, %v1264
        %v1280 = vor.u32 %v1278, %v1279
        %vm1281 = vcmp.lt.s32.totalorder %v1262, 1
        %vm1282 = vcmp.lt.s32.totalorder %v1262, 2
        %vm1283 = vcmp.lt.s32.totalorder %v1262, 3
        %vm1284 = vcmp.lt.s32.totalorder %v1262, 4
        %v1285 = vsel %vm1281, %v1265, %v1268
        %v1286 = vsel %vm1284, %v1274, 2102212464
        %v1287 = vsel %vm1283, %v1271, %v1286
        %v1288 = vsel %vm1282, %v1285, %v1287
        %v1289 = vsel %vm1281, %v1268, %v1271
        %v1290 = vsel %vm1284, %v1277, 920167782
        %v1291 = vsel %vm1283, %v1274, %v1290
        %v1292 = vsel %vm1282, %v1289, %v1291
        %v1293 = vsel %vm1281, %v1271, %v1274
        %v1294 = vsel %vm1284, %v1280, 1326507024
        %v1295 = vsel %vm1283, %v1277, %v1294
        %v1296 = vsel %vm1282, %v1293, %v1295
        %v1297 = vshll.u32 %v1257, 8
        %v1298 = vmul.u32.u64.compose %v1297, %v1296
        %v1299 = vextract.low.u32 %v1298
        %v1300 = vextract.high.u32 %v1298
        %v1301 = vmul.u32.u64.compose %v1297, %v1292
        %v1302 = vextract.low.u32 %v1301
        %v1303 = vextract.high.u32 %v1301
        %v1304 = vmul.u32 %v1297, %v1288
        %v1305 = vadd.s32 %v1300, %v1302
        %vm1306 = vc.u32 %v1300, %v1302
        %v1307 = vadd.s32 %v1303, 1
        %v1308 = vsel %vm1306, %v1307, %v1303
        %v1309 = vadd.s32 %v1304, %v1308
        %v1310 = vadd.s32 %v1309, 536870912
        %v1311 = vshrl.u32 %v1310, 30
        %v1312 = vshll.u32 %v1311, 30
        %v1313 = vsub.s32 %v1309, %v1312
        %vm1314 = vcmp.lt.s32.totalorder %v1313, 0
        %v1315 = vsub.s32 0, %v1313
        %v1316 = vsel %vm1314, %v1315, %v1313
        %v1317 = vclz %v1316
        %v1318 = vsub.s32 %v1317, 2
        %vm1319 = vcmp.gt.s32.totalorder 0, %v1318
        %v1320 = vsel %vm1319, 0, %v1318
        %v1321 = vsub.s32 32, %v1320
        %v1322 = vshll.u32 %v1313, %v1320
        %v1323 = vshrl.u32 %v1305, %v1321
        %v1324 = vor.u32 %v1322, %v1323
        %v1325 = vsub.s32 4294967266, %v1320
        %v1326 = vadd.s32 %v1325, 127
        %v1327 = vshll.u32 %v1326, 23
        %v1328 = vor.u32 4788187, %v1327
        %v1329 = vand.u32 2147483647, %v1328
        %v1331 = vcvt.s32.f32 %v1324
        %v1332 = vmul.f32 %v1331, %v1329
        %v1333 = vxor.u32 %v1332, 2147483648
        %v1334 = vsel %vm1251, %v1333, %v1332
        %v1335 = vsub.s32 4, %v1311
        %v1336 = vsel %vm1251, %v1335, %v1311
        %v1337 = vsel %vm1250, %v211, %v1334
        %v1338 = vsel %vm1250, 0, %v1336
        %v1339 = vcosq.f32.pop %v1337
        %v1340 = vsinq.f32.pop %v1337
        %vm1341 = vweird.f32 %v211
        %v1342 = vadd.s32 %v1338, 3
        %v1343 = vand.u32 %v1342, 3
        %vm1344 = vcmp.lt.s32.totalorder %v1343, 2
        %vm1345 = vcmp.eq.s32.totalorder %v1343, 0
        %v1346 = vxor.u32 %v1340, 2147483648
        %v1347 = vsel %vm1345, %v1339, %v1346
        %vm1348 = vcmp.eq.s32.totalorder %v1343, 2
        %v1349 = vxor.u32 %v1339, 2147483648
        %v1350 = vsel %vm1348, %v1349, %v1340
        %v1351 = vsel %vm1344, %v1347, %v1350
        %v1352 = vsel %vm1341, nan, %v1351
        %v1353 = vand.u32 2147483647, %v212
        %vm1354 = vcmp.le.f32.partialorder %v1353, 0.7853982
        %vm1355 = vcmp.lt.s32.totalorder %v212, 0
        %v1356 = vand.u32 %v212, 2139095040
        %v1357 = vshrl.u32 %v1356, 23
        %v1358 = vsub.s32 %v1357, 127
        %v1359 = vand.u32 2147483647, %v212
        %v1360 = vand.u32 %v1359, 8388607
        %v1361 = vor.u32 %v1360, 8388608
        %v1362 = vsub.s32 0, %v1361
        %v1363 = vadd.s32 %v1358, 1
        %vm1364 = vcmp.gt.s32.totalorder %v1363, 0
        %v1365 = vsel %vm1364, %v1363, 0
        %v1366 = vshrl.u32 %v1365, 5
        %v1367 = vand.u32 %v1365, 31
        %v1368 = vsub.s32 32, %v1367
        %v1369 = vshrl.u32 683565275, %v1368
        %v1370 = vshll.u32 683565275, %v1367
        %v1371 = vshrl.u32 2475754826, %v1368
        %v1372 = vor.u32 %v1370, %v1371
        %v1373 = vshll.u32 2475754826, %v1367
        %v1374 = vshrl.u32 2131351028, %v1368
        %v1375 = vor.u32 %v1373, %v1374
        %v1376 = vshll.u32 2131351028, %v1367
        %v1377 = vshrl.u32 2102212464, %v1368
        %v1378 = vor.u32 %v1376, %v1377
        %v1379 = vshll.u32 2102212464, %v1367
        %v1380 = vshrl.u32 920167782, %v1368
        %v1381 = vor.u32 %v1379, %v1380
        %v1382 = vshll.u32 920167782, %v1367
        %v1383 = vshrl.u32 1326507024, %v1368
        %v1384 = vor.u32 %v1382, %v1383
        %vm1385 = vcmp.lt.s32.totalorder %v1366, 1
        %vm1386 = vcmp.lt.s32.totalorder %v1366, 2
        %vm1387 = vcmp.lt.s32.totalorder %v1366, 3
        %vm1388 = vcmp.lt.s32.totalorder %v1366, 4
        %v1389 = vsel %vm1385, %v1369, %v1372
        %v1390 = vsel %vm1388, %v1378, 2102212464
        %v1391 = vsel %vm1387, %v1375, %v1390
        %v1392 = vsel %vm1386, %v1389, %v1391
        %v1393 = vsel %vm1385, %v1372, %v1375
        %v1394 = vsel %vm1388, %v1381, 920167782
        %v1395 = vsel %vm1387, %v1378, %v1394
        %v1396 = vsel %vm1386, %v1393, %v1395
        %v1397 = vsel %vm1385, %v1375, %v1378
        %v1398 = vsel %vm1388, %v1384, 1326507024
        %v1399 = vsel %vm1387, %v1381, %v1398
        %v1400 = vsel %vm1386, %v1397, %v1399
        %v1401 = vshll.u32 %v1361, 8
        %v1402 = vmul.u32.u64.compose %v1401, %v1400
        %v1403 = vextract.low.u32 %v1402
        %v1404 = vextract.high.u32 %v1402
        %v1405 = vmul.u32.u64.compose %v1401, %v1396
        %v1406 = vextract.low.u32 %v1405
        %v1407 = vextract.high.u32 %v1405
        %v1408 = vmul.u32 %v1401, %v1392
        %v1409 = vadd.s32 %v1404, %v1406
        %vm1410 = vc.u32 %v1404, %v1406
        %v1411 = vadd.s32 %v1407, 1
        %v1412 = vsel %vm1410, %v1411, %v1407
        %v1413 = vadd.s32 %v1408, %v1412
        %v1414 = vadd.s32 %v1413, 536870912
        %v1415 = vshrl.u32 %v1414, 30
        %v1416 = vshll.u32 %v1415, 30
        %v1417 = vsub.s32 %v1413, %v1416
        %vm1418 = vcmp.lt.s32.totalorder %v1417, 0
        %v1419 = vsub.s32 0, %v1417
        %v1420 = vsel %vm1418, %v1419, %v1417
        %v1421 = vclz %v1420
        %v1422 = vsub.s32 %v1421, 2
        %vm1423 = vcmp.gt.s32.totalorder 0, %v1422
        %v1424 = vsel %vm1423, 0, %v1422
        %v1425 = vsub.s32 32, %v1424
        %v1426 = vshll.u32 %v1417, %v1424
        %v1427 = vshrl.u32 %v1409, %v1425
        %v1428 = vor.u32 %v1426, %v1427
        %v1429 = vsub.s32 4294967266, %v1424
        %v1430 = vadd.s32 %v1429, 127
        %v1431 = vshll.u32 %v1430, 23
        %v1432 = vor.u32 4788187, %v1431
        %v1433 = vand.u32 2147483647, %v1432
        %v1435 = vcvt.s32.f32 %v1428
        %v1436 = vmul.f32 %v1435, %v1433
        %v1437 = vxor.u32 %v1436, 2147483648
        %v1438 = vsel %vm1355, %v1437, %v1436
        %v1439 = vsub.s32 4, %v1415
        %v1440 = vsel %vm1355, %v1439, %v1415
        %v1441 = vsel %vm1354, %v212, %v1438
        %v1442 = vsel %vm1354, 0, %v1440
        %v1443 = vcosq.f32.pop %v1441
        %v1444 = vsinq.f32.pop %v1441
        %vm1445 = vweird.f32 %v212
        %v1446 = vadd.s32 %v1442, 3
        %v1447 = vand.u32 %v1446, 3
        %vm1448 = vcmp.lt.s32.totalorder %v1447, 2
        %vm1449 = vcmp.eq.s32.totalorder %v1447, 0
        %v1450 = vxor.u32 %v1444, 2147483648
        %v1451 = vsel %vm1449, %v1443, %v1450
        %vm1452 = vcmp.eq.s32.totalorder %v1447, 2
        %v1453 = vxor.u32 %v1443, 2147483648
        %v1454 = vsel %vm1452, %v1453, %v1444
        %v1455 = vsel %vm1448, %v1451, %v1454
        %v1456 = vsel %vm1445, nan, %v1455
        %v1457 = vand.u32 2147483647, %v209
        %vm1458 = vcmp.le.f32.partialorder %v1457, 0.7853982
        %vm1459 = vcmp.lt.s32.totalorder %v209, 0
        %v1460 = vand.u32 %v209, 2139095040
        %v1461 = vshrl.u32 %v1460, 23
        %v1462 = vsub.s32 %v1461, 127
        %v1463 = vand.u32 2147483647, %v209
        %v1464 = vand.u32 %v1463, 8388607
        %v1465 = vor.u32 %v1464, 8388608
        %v1466 = vsub.s32 0, %v1465
        %v1467 = vadd.s32 %v1462, 1
        %vm1468 = vcmp.gt.s32.totalorder %v1467, 0
        %v1469 = vsel %vm1468, %v1467, 0
        %v1470 = vshrl.u32 %v1469, 5
        %v1471 = vand.u32 %v1469, 31
        %v1472 = vsub.s32 32, %v1471
        %v1473 = vshrl.u32 683565275, %v1472
        %v1474 = vshll.u32 683565275, %v1471
        %v1475 = vshrl.u32 2475754826, %v1472
        %v1476 = vor.u32 %v1474, %v1475
        %v1477 = vshll.u32 2475754826, %v1471
        %v1478 = vshrl.u32 2131351028, %v1472
        %v1479 = vor.u32 %v1477, %v1478
        %v1480 = vshll.u32 2131351028, %v1471
        %v1481 = vshrl.u32 2102212464, %v1472
        %v1482 = vor.u32 %v1480, %v1481
        %v1483 = vshll.u32 2102212464, %v1471
        %v1484 = vshrl.u32 920167782, %v1472
        %v1485 = vor.u32 %v1483, %v1484
        %v1486 = vshll.u32 920167782, %v1471
        %v1487 = vshrl.u32 1326507024, %v1472
        %v1488 = vor.u32 %v1486, %v1487
        %vm1489 = vcmp.lt.s32.totalorder %v1470, 1
        %vm1490 = vcmp.lt.s32.totalorder %v1470, 2
        %vm1491 = vcmp.lt.s32.totalorder %v1470, 3
        %vm1492 = vcmp.lt.s32.totalorder %v1470, 4
        %v1493 = vsel %vm1489, %v1473, %v1476
        %v1494 = vsel %vm1492, %v1482, 2102212464
        %v1495 = vsel %vm1491, %v1479, %v1494
        %v1496 = vsel %vm1490, %v1493, %v1495
        %v1497 = vsel %vm1489, %v1476, %v1479
        %v1498 = vsel %vm1492, %v1485, 920167782
        %v1499 = vsel %vm1491, %v1482, %v1498
        %v1500 = vsel %vm1490, %v1497, %v1499
        %v1501 = vsel %vm1489, %v1479, %v1482
        %v1502 = vsel %vm1492, %v1488, 1326507024
        %v1503 = vsel %vm1491, %v1485, %v1502
        %v1504 = vsel %vm1490, %v1501, %v1503
        %v1505 = vshll.u32 %v1465, 8
        %v1506 = vmul.u32.u64.compose %v1505, %v1504
        %v1507 = vextract.low.u32 %v1506
        %v1508 = vextract.high.u32 %v1506
        %v1509 = vmul.u32.u64.compose %v1505, %v1500
        %v1510 = vextract.low.u32 %v1509
        %v1511 = vextract.high.u32 %v1509
        %v1512 = vmul.u32 %v1505, %v1496
        %v1513 = vadd.s32 %v1508, %v1510
        %vm1514 = vc.u32 %v1508, %v1510
        %v1515 = vadd.s32 %v1511, 1
        %v1516 = vsel %vm1514, %v1515, %v1511
        %v1517 = vadd.s32 %v1512, %v1516
        %v1518 = vadd.s32 %v1517, 536870912
        %v1519 = vshrl.u32 %v1518, 30
        %v1520 = vshll.u32 %v1519, 30
        %v1521 = vsub.s32 %v1517, %v1520
        %vm1522 = vcmp.lt.s32.totalorder %v1521, 0
        %v1523 = vsub.s32 0, %v1521
        %v1524 = vsel %vm1522, %v1523, %v1521
        %v1525 = vclz %v1524
        %v1526 = vsub.s32 %v1525, 2
        %vm1527 = vcmp.gt.s32.totalorder 0, %v1526
        %v1528 = vsel %vm1527, 0, %v1526
        %v1529 = vsub.s32 32, %v1528
        %v1530 = vshll.u32 %v1521, %v1528
        %v1531 = vshrl.u32 %v1513, %v1529
        %v1532 = vor.u32 %v1530, %v1531
        %v1533 = vsub.s32 4294967266, %v1528
        %v1534 = vadd.s32 %v1533, 127
        %v1535 = vshll.u32 %v1534, 23
        %v1536 = vor.u32 4788187, %v1535
        %v1537 = vand.u32 2147483647, %v1536
        %v1539 = vcvt.s32.f32 %v1532
        %v1540 = vmul.f32 %v1539, %v1537
        %v1541 = vxor.u32 %v1540, 2147483648
        %v1542 = vsel %vm1459, %v1541, %v1540
        %v1543 = vsub.s32 4, %v1519
        %v1544 = vsel %vm1459, %v1543, %v1519
        %v1545 = vsel %vm1458, %v209, %v1542
        %v1546 = vsel %vm1458, 0, %v1544
        %v1547 = vcosq.f32.pop %v1545
        %v1548 = vsinq.f32.pop %v1545
        %vm1549 = vweird.f32 %v209
        %v1550 = vand.u32 %v1546, 3
        %vm1551 = vcmp.lt.s32.totalorder %v1550, 2
        %vm1552 = vcmp.eq.s32.totalorder %v1550, 0
        %v1553 = vxor.u32 %v1548, 2147483648
        %v1554 = vsel %vm1552, %v1547, %v1553
        %vm1555 = vcmp.eq.s32.totalorder %v1550, 2
        %v1556 = vxor.u32 %v1547, 2147483648
        %v1557 = vsel %vm1555, %v1556, %v1548
        %v1558 = vsel %vm1551, %v1554, %v1557
        %v1559 = vsel %vm1549, nan, %v1558
        %v1560 = vand.u32 2147483647, %v210
        %vm1561 = vcmp.le.f32.partialorder %v1560, 0.7853982
        %vm1562 = vcmp.lt.s32.totalorder %v210, 0
        %v1563 = vand.u32 %v210, 2139095040
        %v1564 = vshrl.u32 %v1563, 23
        %v1565 = vsub.s32 %v1564, 127
        %v1566 = vand.u32 2147483647, %v210
        %v1567 = vand.u32 %v1566, 8388607
        %v1568 = vor.u32 %v1567, 8388608
        %v1569 = vsub.s32 0, %v1568
        %v1570 = vadd.s32 %v1565, 1
        %vm1571 = vcmp.gt.s32.totalorder %v1570, 0
        %v1572 = vsel %vm1571, %v1570, 0
        %v1573 = vshrl.u32 %v1572, 5
        %v1574 = vand.u32 %v1572, 31
        %v1575 = vsub.s32 32, %v1574
        %v1576 = vshrl.u32 683565275, %v1575
        %v1577 = vshll.u32 683565275, %v1574
        %v1578 = vshrl.u32 2475754826, %v1575
        %v1579 = vor.u32 %v1577, %v1578
        %v1580 = vshll.u32 2475754826, %v1574
        %v1581 = vshrl.u32 2131351028, %v1575
        %v1582 = vor.u32 %v1580, %v1581
        %v1583 = vshll.u32 2131351028, %v1574
        %v1584 = vshrl.u32 2102212464, %v1575
        %v1585 = vor.u32 %v1583, %v1584
        %v1586 = vshll.u32 2102212464, %v1574
        %v1587 = vshrl.u32 920167782, %v1575
        %v1588 = vor.u32 %v1586, %v1587
        %v1589 = vshll.u32 920167782, %v1574
        %v1590 = vshrl.u32 1326507024, %v1575
        %v1591 = vor.u32 %v1589, %v1590
        %vm1592 = vcmp.lt.s32.totalorder %v1573, 1
        %vm1593 = vcmp.lt.s32.totalorder %v1573, 2
        %vm1594 = vcmp.lt.s32.totalorder %v1573, 3
        %vm1595 = vcmp.lt.s32.totalorder %v1573, 4
        %v1596 = vsel %vm1592, %v1576, %v1579
        %v1597 = vsel %vm1595, %v1585, 2102212464
        %v1598 = vsel %vm1594, %v1582, %v1597
        %v1599 = vsel %vm1593, %v1596, %v1598
        %v1600 = vsel %vm1592, %v1579, %v1582
        %v1601 = vsel %vm1595, %v1588, 920167782
        %v1602 = vsel %vm1594, %v1585, %v1601
        %v1603 = vsel %vm1593, %v1600, %v1602
        %v1604 = vsel %vm1592, %v1582, %v1585
        %v1605 = vsel %vm1595, %v1591, 1326507024
        %v1606 = vsel %vm1594, %v1588, %v1605
        %v1607 = vsel %vm1593, %v1604, %v1606
        %v1608 = vshll.u32 %v1568, 8
        %v1609 = vmul.u32.u64.compose %v1608, %v1607
        %v1610 = vextract.low.u32 %v1609
        %v1611 = vextract.high.u32 %v1609
        %v1612 = vmul.u32.u64.compose %v1608, %v1603
        %v1613 = vextract.low.u32 %v1612
        %v1614 = vextract.high.u32 %v1612
        %v1615 = vmul.u32 %v1608, %v1599
        %v1616 = vadd.s32 %v1611, %v1613
        %vm1617 = vc.u32 %v1611, %v1613
        %v1618 = vadd.s32 %v1614, 1
        %v1619 = vsel %vm1617, %v1618, %v1614
        %v1620 = vadd.s32 %v1615, %v1619
        %v1621 = vadd.s32 %v1620, 536870912
        %v1622 = vshrl.u32 %v1621, 30
        %v1623 = vshll.u32 %v1622, 30
        %v1624 = vsub.s32 %v1620, %v1623
        %vm1625 = vcmp.lt.s32.totalorder %v1624, 0
        %v1626 = vsub.s32 0, %v1624
        %v1627 = vsel %vm1625, %v1626, %v1624
        %v1628 = vclz %v1627
        %v1629 = vsub.s32 %v1628, 2
        %vm1630 = vcmp.gt.s32.totalorder 0, %v1629
        %v1631 = vsel %vm1630, 0, %v1629
        %v1632 = vsub.s32 32, %v1631
        %v1633 = vshll.u32 %v1624, %v1631
        %v1634 = vshrl.u32 %v1616, %v1632
        %v1635 = vor.u32 %v1633, %v1634
        %v1636 = vsub.s32 4294967266, %v1631
        %v1637 = vadd.s32 %v1636, 127
        %v1638 = vshll.u32 %v1637, 23
        %v1639 = vor.u32 4788187, %v1638
        %v1640 = vand.u32 2147483647, %v1639
        %v1642 = vcvt.s32.f32 %v1635
        %v1643 = vmul.f32 %v1642, %v1640
        %v1644 = vxor.u32 %v1643, 2147483648
        %v1645 = vsel %vm1562, %v1644, %v1643
        %v1646 = vsub.s32 4, %v1622
        %v1647 = vsel %vm1562, %v1646, %v1622
        %v1648 = vsel %vm1561, %v210, %v1645
        %v1649 = vsel %vm1561, 0, %v1647
        %v1650 = vcosq.f32.pop %v1648
        %v1651 = vsinq.f32.pop %v1648
        %vm1652 = vweird.f32 %v210
        %v1653 = vand.u32 %v1649, 3
        %vm1654 = vcmp.lt.s32.totalorder %v1653, 2
        %vm1655 = vcmp.eq.s32.totalorder %v1653, 0
        %v1656 = vxor.u32 %v1651, 2147483648
        %v1657 = vsel %vm1655, %v1650, %v1656
        %vm1658 = vcmp.eq.s32.totalorder %v1653, 2
        %v1659 = vxor.u32 %v1650, 2147483648
        %v1660 = vsel %vm1658, %v1659, %v1651
        %v1661 = vsel %vm1654, %v1657, %v1660
        %v1662 = vsel %vm1652, nan, %v1661
        %v1663 = vand.u32 2147483647, %v211
        %vm1664 = vcmp.le.f32.partialorder %v1663, 0.7853982
        %vm1665 = vcmp.lt.s32.totalorder %v211, 0
        %v1666 = vand.u32 %v211, 2139095040
        %v1667 = vshrl.u32 %v1666, 23
        %v1668 = vsub.s32 %v1667, 127
        %v1669 = vand.u32 2147483647, %v211
        %v1670 = vand.u32 %v1669, 8388607
        %v1671 = vor.u32 %v1670, 8388608
        %v1672 = vsub.s32 0, %v1671
        %v1673 = vadd.s32 %v1668, 1
        %vm1674 = vcmp.gt.s32.totalorder %v1673, 0
        %v1675 = vsel %vm1674, %v1673, 0
        %v1676 = vshrl.u32 %v1675, 5
        %v1677 = vand.u32 %v1675, 31
        %v1678 = vsub.s32 32, %v1677
        %v1679 = vshrl.u32 683565275, %v1678
        %v1680 = vshll.u32 683565275, %v1677
        %v1681 = vshrl.u32 2475754826, %v1678
        %v1682 = vor.u32 %v1680, %v1681
        %v1683 = vshll.u32 2475754826, %v1677
        %v1684 = vshrl.u32 2131351028, %v1678
        %v1685 = vor.u32 %v1683, %v1684
        %v1686 = vshll.u32 2131351028, %v1677
        %v1687 = vshrl.u32 2102212464, %v1678
        %v1688 = vor.u32 %v1686, %v1687
        %v1689 = vshll.u32 2102212464, %v1677
        %v1690 = vshrl.u32 920167782, %v1678
        %v1691 = vor.u32 %v1689, %v1690
        %v1692 = vshll.u32 920167782, %v1677
        %v1693 = vshrl.u32 1326507024, %v1678
        %v1694 = vor.u32 %v1692, %v1693
        %vm1695 = vcmp.lt.s32.totalorder %v1676, 1
        %vm1696 = vcmp.lt.s32.totalorder %v1676, 2
        %vm1697 = vcmp.lt.s32.totalorder %v1676, 3
        %vm1698 = vcmp.lt.s32.totalorder %v1676, 4
        %v1699 = vsel %vm1695, %v1679, %v1682
        %v1700 = vsel %vm1698, %v1688, 2102212464
        %v1701 = vsel %vm1697, %v1685, %v1700
        %v1702 = vsel %vm1696, %v1699, %v1701
        %v1703 = vsel %vm1695, %v1682, %v1685
        %v1704 = vsel %vm1698, %v1691, 920167782
        %v1705 = vsel %vm1697, %v1688, %v1704
        %v1706 = vsel %vm1696, %v1703, %v1705
        %v1707 = vsel %vm1695, %v1685, %v1688
        %v1708 = vsel %vm1698, %v1694, 1326507024
        %v1709 = vsel %vm1697, %v1691, %v1708
        %v1710 = vsel %vm1696, %v1707, %v1709
        %v1711 = vshll.u32 %v1671, 8
        %v1712 = vmul.u32.u64.compose %v1711, %v1710
        %v1713 = vextract.low.u32 %v1712
        %v1714 = vextract.high.u32 %v1712
        %v1715 = vmul.u32.u64.compose %v1711, %v1706
        %v1716 = vextract.low.u32 %v1715
        %v1717 = vextract.high.u32 %v1715
        %v1718 = vmul.u32 %v1711, %v1702
        %v1719 = vadd.s32 %v1714, %v1716
        %vm1720 = vc.u32 %v1714, %v1716
        %v1721 = vadd.s32 %v1717, 1
        %v1722 = vsel %vm1720, %v1721, %v1717
        %v1723 = vadd.s32 %v1718, %v1722
        %v1724 = vadd.s32 %v1723, 536870912
        %v1725 = vshrl.u32 %v1724, 30
        %v1726 = vshll.u32 %v1725, 30
        %v1727 = vsub.s32 %v1723, %v1726
        %vm1728 = vcmp.lt.s32.totalorder %v1727, 0
        %v1729 = vsub.s32 0, %v1727
        %v1730 = vsel %vm1728, %v1729, %v1727
        %v1731 = vclz %v1730
        %v1732 = vsub.s32 %v1731, 2
        %vm1733 = vcmp.gt.s32.totalorder 0, %v1732
        %v1734 = vsel %vm1733, 0, %v1732
        %v1735 = vsub.s32 32, %v1734
        %v1736 = vshll.u32 %v1727, %v1734
        %v1737 = vshrl.u32 %v1719, %v1735
        %v1738 = vor.u32 %v1736, %v1737
        %v1739 = vsub.s32 4294967266, %v1734
        %v1740 = vadd.s32 %v1739, 127
        %v1741 = vshll.u32 %v1740, 23
        %v1742 = vor.u32 4788187, %v1741
        %v1743 = vand.u32 2147483647, %v1742
        %v1745 = vcvt.s32.f32 %v1738
        %v1746 = vmul.f32 %v1745, %v1743
        %v1747 = vxor.u32 %v1746, 2147483648
        %v1748 = vsel %vm1665, %v1747, %v1746
        %v1749 = vsub.s32 4, %v1725
        %v1750 = vsel %vm1665, %v1749, %v1725
        %v1751 = vsel %vm1664, %v211, %v1748
        %v1752 = vsel %vm1664, 0, %v1750
        %v1753 = vcosq.f32.pop %v1751
        %v1754 = vsinq.f32.pop %v1751
        %vm1755 = vweird.f32 %v211
        %v1756 = vand.u32 %v1752, 3
        %vm1757 = vcmp.lt.s32.totalorder %v1756, 2
        %vm1758 = vcmp.eq.s32.totalorder %v1756, 0
        %v1759 = vxor.u32 %v1754, 2147483648
        %v1760 = vsel %vm1758, %v1753, %v1759
        %vm1761 = vcmp.eq.s32.totalorder %v1756, 2
        %v1762 = vxor.u32 %v1753, 2147483648
        %v1763 = vsel %vm1761, %v1762, %v1754
        %v1764 = vsel %vm1757, %v1760, %v1763
        %v1765 = vsel %vm1755, nan, %v1764
        %v1766 = vand.u32 2147483647, %v212
        %vm1767 = vcmp.le.f32.partialorder %v1766, 0.7853982
        %vm1768 = vcmp.lt.s32.totalorder %v212, 0
        %v1769 = vand.u32 %v212, 2139095040
        %v1770 = vshrl.u32 %v1769, 23
        %v1771 = vsub.s32 %v1770, 127
        %v1772 = vand.u32 2147483647, %v212
        %v1773 = vand.u32 %v1772, 8388607
        %v1774 = vor.u32 %v1773, 8388608
        %v1775 = vsub.s32 0, %v1774
        %v1776 = vadd.s32 %v1771, 1
        %vm1777 = vcmp.gt.s32.totalorder %v1776, 0
        %v1778 = vsel %vm1777, %v1776, 0
        %v1779 = vshrl.u32 %v1778, 5
        %v1780 = vand.u32 %v1778, 31
        %v1781 = vsub.s32 32, %v1780
        %v1782 = vshrl.u32 683565275, %v1781
        %v1783 = vshll.u32 683565275, %v1780
        %v1784 = vshrl.u32 2475754826, %v1781
        %v1785 = vor.u32 %v1783, %v1784
        %v1786 = vshll.u32 2475754826, %v1780
        %v1787 = vshrl.u32 2131351028, %v1781
        %v1788 = vor.u32 %v1786, %v1787
        %v1789 = vshll.u32 2131351028, %v1780
        %v1790 = vshrl.u32 2102212464, %v1781
        %v1791 = vor.u32 %v1789, %v1790
        %v1792 = vshll.u32 2102212464, %v1780
        %v1793 = vshrl.u32 920167782, %v1781
        %v1794 = vor.u32 %v1792, %v1793
        %v1795 = vshll.u32 920167782, %v1780
        %v1796 = vshrl.u32 1326507024, %v1781
        %v1797 = vor.u32 %v1795, %v1796
        %vm1798 = vcmp.lt.s32.totalorder %v1779, 1
        %vm1799 = vcmp.lt.s32.totalorder %v1779, 2
        %vm1800 = vcmp.lt.s32.totalorder %v1779, 3
        %vm1801 = vcmp.lt.s32.totalorder %v1779, 4
        %v1802 = vsel %vm1798, %v1782, %v1785
        %v1803 = vsel %vm1801, %v1791, 2102212464
        %v1804 = vsel %vm1800, %v1788, %v1803
        %v1805 = vsel %vm1799, %v1802, %v1804
        %v1806 = vsel %vm1798, %v1785, %v1788
        %v1807 = vsel %vm1801, %v1794, 920167782
        %v1808 = vsel %vm1800, %v1791, %v1807
        %v1809 = vsel %vm1799, %v1806, %v1808
        %v1810 = vsel %vm1798, %v1788, %v1791
        %v1811 = vsel %vm1801, %v1797, 1326507024
        %v1812 = vsel %vm1800, %v1794, %v1811
        %v1813 = vsel %vm1799, %v1810, %v1812
        %v1814 = vshll.u32 %v1774, 8
        %v1815 = vmul.u32.u64.compose %v1814, %v1813
        %v1816 = vextract.low.u32 %v1815
        %v1817 = vextract.high.u32 %v1815
        %v1818 = vmul.u32.u64.compose %v1814, %v1809
        %v1819 = vextract.low.u32 %v1818
        %v1820 = vextract.high.u32 %v1818
        %v1821 = vmul.u32 %v1814, %v1805
        %v1822 = vadd.s32 %v1817, %v1819
        %vm1823 = vc.u32 %v1817, %v1819
        %v1824 = vadd.s32 %v1820, 1
        %v1825 = vsel %vm1823, %v1824, %v1820
        %v1826 = vadd.s32 %v1821, %v1825
        %v1827 = vadd.s32 %v1826, 536870912
        %v1828 = vshrl.u32 %v1827, 30
        %v1829 = vshll.u32 %v1828, 30
        %v1830 = vsub.s32 %v1826, %v1829
        %vm1831 = vcmp.lt.s32.totalorder %v1830, 0
        %v1832 = vsub.s32 0, %v1830
        %v1833 = vsel %vm1831, %v1832, %v1830
        %v1834 = vclz %v1833
        %v1835 = vsub.s32 %v1834, 2
        %vm1836 = vcmp.gt.s32.totalorder 0, %v1835
        %v1837 = vsel %vm1836, 0, %v1835
        %v1838 = vsub.s32 32, %v1837
        %v1839 = vshll.u32 %v1830, %v1837
        %v1840 = vshrl.u32 %v1822, %v1838
        %v1841 = vor.u32 %v1839, %v1840
        %v1842 = vsub.s32 4294967266, %v1837
        %v1843 = vadd.s32 %v1842, 127
        %v1844 = vshll.u32 %v1843, 23
        %v1845 = vor.u32 4788187, %v1844
        %v1846 = vand.u32 2147483647, %v1845
        %v1848 = vcvt.s32.f32 %v1841
        %v1849 = vmul.f32 %v1848, %v1846
        %v1850 = vxor.u32 %v1849, 2147483648
        %v1851 = vsel %vm1768, %v1850, %v1849
        %v1852 = vsub.s32 4, %v1828
        %v1853 = vsel %vm1768, %v1852, %v1828
        %v1854 = vsel %vm1767, %v212, %v1851
        %v1855 = vsel %vm1767, 0, %v1853
        %v1856 = vcosq.f32.pop %v1854
        %v1857 = vsinq.f32.pop %v1854
        %vm1858 = vweird.f32 %v212
        %v1859 = vand.u32 %v1855, 3
        %vm1860 = vcmp.lt.s32.totalorder %v1859, 2
        %vm1861 = vcmp.eq.s32.totalorder %v1859, 0
        %v1862 = vxor.u32 %v1857, 2147483648
        %v1863 = vsel %vm1861, %v1856, %v1862
        %vm1864 = vcmp.eq.s32.totalorder %v1859, 2
        %v1865 = vxor.u32 %v1856, 2147483648
        %v1866 = vsel %vm1864, %v1865, %v1857
        %v1867 = vsel %vm1860, %v1863, %v1866
        %v1868 = vsel %vm1858, nan, %v1867
        %1869 = vxpose.xlu0.b32.start [1/16] %v316, 128
        %1870 = vxpose.xlu0.b32.cont [2/16] %v420, 128
        %1871 = vxpose.xlu0.b32.cont [3/16] %v524, 128
        %1872 = vxpose.xlu0.b32.cont [4/16] %v628, 128
        %1873 = vxpose.xlu0.b32.cont [5/16] %v731, 128
        %1874 = vxpose.xlu0.b32.cont [6/16] %v834, 128
        %1875 = vxpose.xlu0.b32.cont [7/16] %v937, 128
        %1876 = vxpose.xlu0.b32.cont [8/16] %v1040, 128
        %1877 = vxpose.xlu0.b32.cont [9/16] %v1144, 128
        %1878 = vxpose.xlu0.b32.cont [10/16] %v1248, 128
        %1879 = vxpose.xlu0.b32.cont [11/16] %v1352, 128
        %1880 = vxpose.xlu0.b32.cont [12/16] %v1456, 128
        %1881 = vxpose.xlu0.b32.cont [13/16] %v1559, 128
        %1882 = vxpose.xlu0.b32.cont [14/16] %v1662, 128
        %1883 = vxpose.xlu0.b32.cont [15/16] %v1765, 128
        %1884 = vxpose.xlu0.b32.end [16/16] %v1868, 128
        %v1885 = vpop.trf.xlu0
        %v1886 = vpop.trf.xlu0
        %v1887 = vpop.trf.xlu0
        %v1888 = vpop.trf.xlu0
        %v1889 = vpop.trf.xlu0
        %v1890 = vpop.trf.xlu0
        %v1891 = vpop.trf.xlu0
        %v1892 = vpop.trf.xlu0
        %v1893 = vpop.trf.xlu0
        %v1894 = vpop.trf.xlu0
        %v1895 = vpop.trf.xlu0
        %v1896 = vpop.trf.xlu0
        %v1897 = vpop.trf.xlu0
        %v1898 = vpop.trf.xlu0
        %v1899 = vpop.trf.xlu0
        %v1900 = vpop.trf.xlu0
        %1901 = vst [vmem:[%s161] sm:$0xff] %v1885
        %1902 = vst [vmem:[%s161 + $0x8] sm:$0xff] %v1886
        %1903 = vst [vmem:[%s161 + $0x10] sm:$0xff] %v1887
        %1904 = vst [vmem:[%s161 + $0x18] sm:$0xff] %v1888
        %1905 = vst [vmem:[%s161 + $0x20] sm:$0xff] %v1889
        %1906 = vst [vmem:[%s161 + $0x28] sm:$0xff] %v1890
        %1907 = vst [vmem:[%s161 + $0x30] sm:$0xff] %v1891
        %1908 = vst [vmem:[%s161 + $0x38] sm:$0xff] %v1892
        %1909 = vst [vmem:[%s161 + $0x40] sm:$0xff] %v1893
        %1910 = vst [vmem:[%s161 + $0x48] sm:$0xff] %v1894
        %1911 = vst [vmem:[%s161 + $0x50] sm:$0xff] %v1895
        %1912 = vst [vmem:[%s161 + $0x58] sm:$0xff] %v1896
        %1913 = vst [vmem:[%s161 + $0x60] sm:$0xff] %v1897
        %1914 = vst [vmem:[%s161 + $0x68] sm:$0xff] %v1898
        %1915 = vst [vmem:[%s161 + $0x70] sm:$0xff] %v1899
        %1916 = vst [vmem:[%s161 + $0x78] sm:$0xff] %v1900
        %s1917 = sand.u32 %s93, 1
        %s1918 = scalar_lea.sflag [#allocation3], %s1917
        %s1919 = sand.u32 %s93, 1
        %s1920 = smul.addr %s1919, 128
        %s1921 = scalar_lea.vmem [#allocation2], %s1920
        // Predicated region
        $region33: #{tpu_custom_call.1} parent=31 // pred_check
          %p1922 = pneg %p103
        $region34: #{tpu_custom_call.1} parent=31 // pred_check_branch
          %1924 = sbr.rel (%p1922) target = $region36
        $region35: #{tpu_custom_call.1} parent=31 // pred_region
          %s1925 = smul.u32 16, %s17
          %s1926 = ssub.s32 25, %s1925
          %p1927 = scmp.lt.s32.totalorder %s1926, 16
          %s1928 = scalar_select %p1927, %s1926, 16
          %s1929 = smul.u32 128, %s1928
          %s1931 = ssub.s32 2048, %s1929
          %1932 = vsyncadd %s1918, %s1931
          %p1933 = scmp.ne.s32.totalorder 0, %s1929
          %s1934 = smul.addr %s1925, 128
          %s1935 = scalar_lea.hbm %s3, %s1934
          %s1936 = smul.u32 8, %s1928
          %s1937 = sshll.u32 %s1921, 4
          %s1938 = int_to_ptr.vmem [resolvable:$true] %s1937
          %s1939 = sshll.u32 %s1936, 4
          %1943 = dma.vmem_to_hbm [thread:$0]  (%p1933), %s1938, %s1939, %s1935, %s1918, 128, 128, 8
        $region36: #{tpu_custom_call.1} parent=31 // pred_fallthru
          _
      $region32: #{tpu_custom_call.1} parent=5 // pred_fallthru
        _
      %p1944 = scmp.le.s32.totalorder 2, %s12
      // Predicated region
      $region37: #{tpu_custom_call.1} parent=5 // pred_check
        %p1945 = pneg %p1944
      $region38: #{tpu_custom_call.1} parent=5 // pred_check_branch
        %1947 = sbr.rel (%p1945) target = $region40
      $region39: #{tpu_custom_call.1} parent=5 // pred_region
        %s1948 = ssub.s32 %s12, 2
        // Predicated region
        $region41: #{tpu_custom_call.1} parent=39 // pred_check
          %p1949 = pneg %p109
        $region42: #{tpu_custom_call.1} parent=39 // pred_check_branch
          %1951 = sbr.rel (%p1949) target = $region44
        $region43: #{tpu_custom_call.1} parent=39 // pred_region
          %s1952 = sand.u32 %s94, 1
          %s1953 = scalar_lea.sflag [#allocation3], %s1952
          %s1954 = sand.u32 %s94, 1
          %s1955 = smul.addr %s1954, 128
          %s1956 = scalar_lea.vmem [#allocation2], %s1955
          %1957 = dma.done %s1953, 2048
        $region44: #{tpu_custom_call.1} parent=39 // pred_fallthru
          _
      $region40: #{tpu_custom_call.1} parent=5 // pred_fallthru
        _
    $region6: #{tpu_custom_call.1} parent=1 // loop_footer
      %s16 = sadd.s32 1, %s12
    $region7: #{tpu_custom_call.1} parent=1 // loop_footer_branch
      %11 = sbr.rel target = $region3
    $region8: #{tpu_custom_call.1} parent=1 // loop_exit
      _
    %1958 = vsyncpa [#allocation3], 1
    %s1959 = scalar_lea.sflag [#allocation3], 1
    %1960 = vsyncpa %s1959, 1

// kernel: tpu_custom_call.1
$region0: #{tpu_custom_call.1}
  #allocation0 [shape = 'u32[]', space=smem, size = 0x4, offset = 0x4, fixed_abs, tag = 'smem constant byte address 0x4 - core index']
  #allocation1 [shape = 'u32[144,128]{1,0:T(1,128)}', space=vmem, size = 0x12000, scoped, tag = 'internal scratch']
  %s0 = inlined_call_operand.vmem [shape: f32[128,2], index: 0, kind: input, shape index: {}]
  %s1 = inlined_call_operand.vmem [shape: f32[4,128], index: 1, kind: input, shape index: {}]
  %s2 = inlined_call_operand.hbm [shape: f32[128,128], index: 2, kind: output, shape index: {}]
  %s3 = sld [smem:[#allocation0]]
  $region18: #{tpu_custom_call.1} parent=0
    _
  %s5 = ssub.s32 1, %s3
  %s6 = scalar_select 0, %s5, %s3
  $region1: #{tpu_custom_call.1} parent=0
    #allocation2 [shape = 'u8[65536]{0}', space=vmem, size = 0x10000, scoped, tag = 'output window, operand 0, single buffered']
    #allocation3 [shape = 's32[1]{0}', space=sflag, size = 0x4, scoped, tag = 'scoped memory for tpu_custom_call.1']
    %7 = vsyncpa [#allocation3], 0
    // Predicated region
    $region2: #{tpu_custom_call.1} parent=1 // pred_check
      _
    $region3: #{tpu_custom_call.1} parent=1 // pred_check_branch
      %9 = sbr.rel (0) target = $region5
    $region4: #{tpu_custom_call.1} parent=1 // pred_region
      _
    $region5: #{tpu_custom_call.1} parent=1 // pred_fallthru
      _
    // Predicated region
    $region6: #{tpu_custom_call.1} parent=1 // pred_check
      _
    $region7: #{tpu_custom_call.1} parent=1 // pred_check_branch
      %11 = sbr.rel (0) target = $region9
    $region8: #{tpu_custom_call.1} parent=1 // pred_region
      _
    $region9: #{tpu_custom_call.1} parent=1 // pred_fallthru
      _
    %v12 = vld [vmem:[%s0] sm:$0xff]
    %v13 = vld [vmem:[%s0 + $0x8] sm:$0xff]
    %v14 = vld [vmem:[%s0 + $0x10] sm:$0xff]
    %v15 = vld [vmem:[%s0 + $0x18] sm:$0xff]
    %v16 = vld [vmem:[%s0 + $0x20] sm:$0xff]
    %v17 = vld [vmem:[%s0 + $0x28] sm:$0xff]
    %v18 = vld [vmem:[%s0 + $0x30] sm:$0xff]
    %v19 = vld [vmem:[%s0 + $0x38] sm:$0xff]
    %v20 = vld [vmem:[%s0 + $0x40] sm:$0xff]
    %v21 = vld [vmem:[%s0 + $0x48] sm:$0xff]
    %v22 = vld [vmem:[%s0 + $0x50] sm:$0xff]
    %v23 = vld [vmem:[%s0 + $0x58] sm:$0xff]
    %v24 = vld [vmem:[%s0 + $0x60] sm:$0xff]
    %v25 = vld [vmem:[%s0 + $0x68] sm:$0xff]
    %v26 = vld [vmem:[%s0 + $0x70] sm:$0xff]
    %v27 = vld [vmem:[%s0 + $0x78] sm:$0xff]
    %v28 = vld [vmem:[%s1] sm:$0x1]
    %30 = vset.pattern.permute.xlu0 0
    %31 = vperm.xlu0 %30, %v12
    %v32 = vpop.permute.xlu0 %31
    %35 = vset.pattern.permute.xlu0 0
    %36 = vperm.xlu0 %35, %v13
    %v37 = vpop.permute.xlu0 %36
    %40 = vset.pattern.permute.xlu0 0
    %41 = vperm.xlu0 %40, %v14
    %v42 = vpop.permute.xlu0 %41
    %45 = vset.pattern.permute.xlu0 0
    %46 = vperm.xlu0 %45, %v15
    %v47 = vpop.permute.xlu0 %46
    %50 = vset.pattern.permute.xlu0 0
    %51 = vperm.xlu0 %50, %v16
    %v52 = vpop.permute.xlu0 %51
    %55 = vset.pattern.permute.xlu0 0
    %56 = vperm.xlu0 %55, %v17
    %v57 = vpop.permute.xlu0 %56
    %60 = vset.pattern.permute.xlu0 0
    %61 = vperm.xlu0 %60, %v18
    %v62 = vpop.permute.xlu0 %61
    %65 = vset.pattern.permute.xlu0 0
    %66 = vperm.xlu0 %65, %v19
    %v67 = vpop.permute.xlu0 %66
    %70 = vset.pattern.permute.xlu0 0
    %71 = vperm.xlu0 %70, %v20
    %v72 = vpop.permute.xlu0 %71
    %75 = vset.pattern.permute.xlu0 0
    %76 = vperm.xlu0 %75, %v21
    %v77 = vpop.permute.xlu0 %76
    %80 = vset.pattern.permute.xlu0 0
    %81 = vperm.xlu0 %80, %v22
    %v82 = vpop.permute.xlu0 %81
    %85 = vset.pattern.permute.xlu0 0
    %86 = vperm.xlu0 %85, %v23
    %v87 = vpop.permute.xlu0 %86
    %90 = vset.pattern.permute.xlu0 0
    %91 = vperm.xlu0 %90, %v24
    %v92 = vpop.permute.xlu0 %91
    %95 = vset.pattern.permute.xlu0 0
    %96 = vperm.xlu0 %95, %v25
    %v97 = vpop.permute.xlu0 %96
    %100 = vset.pattern.permute.xlu0 0
    %101 = vperm.xlu0 %100, %v26
    %v102 = vpop.permute.xlu0 %101
    %105 = vset.pattern.permute.xlu0 0
    %106 = vperm.xlu0 %105, %v27
    %v107 = vpop.permute.xlu0 %106
    %v109 = vlaneseq
    %v110 = vshrl.u32 %v109, 7
    %v111 = vsub.s32 0, %v110
    %v112 = vrot.slane %v28, %v111
    %v113 = vmul.f32 %v32, %v112
    %v114 = vmul.f32 %v37, %v112
    %v115 = vmul.f32 %v42, %v112
    %v116 = vmul.f32 %v47, %v112
    %v117 = vmul.f32 %v52, %v112
    %v118 = vmul.f32 %v57, %v112
    %v119 = vmul.f32 %v62, %v112
    %v120 = vmul.f32 %v67, %v112
    %v121 = vmul.f32 %v72, %v112
    %v122 = vmul.f32 %v77, %v112
    %v123 = vmul.f32 %v82, %v112
    %v124 = vmul.f32 %v87, %v112
    %v125 = vmul.f32 %v92, %v112
    %v126 = vmul.f32 %v97, %v112
    %v127 = vmul.f32 %v102, %v112
    %v128 = vmul.f32 %v107, %v112
    %v129 = vld [vmem:[%s1 + $0x1] sm:$0x1]
    %130 = vset.pattern.permute.xlu0 1
    %131 = vperm.xlu0 %130, %v12
    %v132 = vpop.permute.xlu0 %131
    %134 = vset.pattern.permute.xlu0 1
    %135 = vperm.xlu0 %134, %v13
    %v136 = vpop.permute.xlu0 %135
    %138 = vset.pattern.permute.xlu0 1
    %139 = vperm.xlu0 %138, %v14
    %v140 = vpop.permute.xlu0 %139
    %142 = vset.pattern.permute.xlu0 1
    %143 = vperm.xlu0 %142, %v15
    %v144 = vpop.permute.xlu0 %143
    %146 = vset.pattern.permute.xlu0 1
    %147 = vperm.xlu0 %146, %v16
    %v148 = vpop.permute.xlu0 %147
    %150 = vset.pattern.permute.xlu0 1
    %151 = vperm.xlu0 %150, %v17
    %v152 = vpop.permute.xlu0 %151
    %154 = vset.pattern.permute.xlu0 1
    %155 = vperm.xlu0 %154, %v18
    %v156 = vpop.permute.xlu0 %155
    %158 = vset.pattern.permute.xlu0 1
    %159 = vperm.xlu0 %158, %v19
    %v160 = vpop.permute.xlu0 %159
    %162 = vset.pattern.permute.xlu0 1
    %163 = vperm.xlu0 %162, %v20
    %v164 = vpop.permute.xlu0 %163
    %166 = vset.pattern.permute.xlu0 1
    %167 = vperm.xlu0 %166, %v21
    %v168 = vpop.permute.xlu0 %167
    %170 = vset.pattern.permute.xlu0 1
    %171 = vperm.xlu0 %170, %v22
    %v172 = vpop.permute.xlu0 %171
    %174 = vset.pattern.permute.xlu0 1
    %175 = vperm.xlu0 %174, %v23
    %v176 = vpop.permute.xlu0 %175
    %178 = vset.pattern.permute.xlu0 1
    %179 = vperm.xlu0 %178, %v24
    %v180 = vpop.permute.xlu0 %179
    %182 = vset.pattern.permute.xlu0 1
    %183 = vperm.xlu0 %182, %v25
    %v184 = vpop.permute.xlu0 %183
    %186 = vset.pattern.permute.xlu0 1
    %187 = vperm.xlu0 %186, %v26
    %v188 = vpop.permute.xlu0 %187
    %190 = vset.pattern.permute.xlu0 1
    %191 = vperm.xlu0 %190, %v27
    %v192 = vpop.permute.xlu0 %191
    %v194 = vlaneseq
    %v195 = vshrl.u32 %v194, 7
    %v196 = vsub.s32 0, %v195
    %v197 = vrot.slane %v129, %v196
    %v198 = vmul.f32 %v132, %v197
    %v199 = vmul.f32 %v136, %v197
    %v200 = vmul.f32 %v140, %v197
    %v201 = vmul.f32 %v144, %v197
    %v202 = vmul.f32 %v148, %v197
    %v203 = vmul.f32 %v152, %v197
    %v204 = vmul.f32 %v156, %v197
    %v205 = vmul.f32 %v160, %v197
    %v206 = vmul.f32 %v164, %v197
    %v207 = vmul.f32 %v168, %v197
    %v208 = vmul.f32 %v172, %v197
    %v209 = vmul.f32 %v176, %v197
    %v210 = vmul.f32 %v180, %v197
    %v211 = vmul.f32 %v184, %v197
    %v212 = vmul.f32 %v188, %v197
    %v213 = vmul.f32 %v192, %v197
    %v214 = vadd.f32 %v113, %v198
    %v215 = vadd.f32 %v114, %v199
    %v216 = vadd.f32 %v115, %v200
    %v217 = vadd.f32 %v116, %v201
    %v218 = vadd.f32 %v117, %v202
    %v219 = vadd.f32 %v118, %v203
    %v220 = vadd.f32 %v119, %v204
    %v221 = vadd.f32 %v120, %v205
    %v222 = vadd.f32 %v121, %v206
    %v223 = vadd.f32 %v122, %v207
    %v224 = vadd.f32 %v123, %v208
    %v225 = vadd.f32 %v124, %v209
    %v226 = vadd.f32 %v125, %v210
    %v227 = vadd.f32 %v126, %v211
    %v228 = vadd.f32 %v127, %v212
    %v229 = vadd.f32 %v128, %v213
    %v230 = vand.u32 2147483647, %v214
    %vm231 = vcmp.le.f32.partialorder %v230, 0.7853982
    %vm232 = vcmp.lt.s32.totalorder %v214, 0
    %v233 = vand.u32 %v214, 2139095040
    %v234 = vshrl.u32 %v233, 23
    %v235 = vsub.s32 %v234, 127
    %v236 = vand.u32 2147483647, %v214
    %v237 = vand.u32 %v236, 8388607
    %v238 = vor.u32 %v237, 8388608
    %v239 = vsub.s32 0, %v238
    %v240 = vadd.s32 %v235, 1
    %vm241 = vcmp.gt.s32.totalorder %v240, 0
    %v242 = vsel %vm241, %v240, 0
    %v243 = vshrl.u32 %v242, 5
    %v244 = vand.u32 %v242, 31
    %v245 = vsub.s32 32, %v244
    %v246 = vshrl.u32 683565275, %v245
    %v247 = vshll.u32 683565275, %v244
    %v248 = vshrl.u32 2475754826, %v245
    %v249 = vor.u32 %v247, %v248
    %v250 = vshll.u32 2475754826, %v244
    %v251 = vshrl.u32 2131351028, %v245
    %v252 = vor.u32 %v250, %v251
    %v253 = vshll.u32 2131351028, %v244
    %v254 = vshrl.u32 2102212464, %v245
    %v255 = vor.u32 %v253, %v254
    %v256 = vshll.u32 2102212464, %v244
    %v257 = vshrl.u32 920167782, %v245
    %v258 = vor.u32 %v256, %v257
    %v259 = vshll.u32 920167782, %v244
    %v260 = vshrl.u32 1326507024, %v245
    %v261 = vor.u32 %v259, %v260
    %vm262 = vcmp.lt.s32.totalorder %v243, 1
    %vm263 = vcmp.lt.s32.totalorder %v243, 2
    %vm264 = vcmp.lt.s32.totalorder %v243, 3
    %vm265 = vcmp.lt.s32.totalorder %v243, 4
    %v266 = vsel %vm262, %v246, %v249
    %v267 = vsel %vm265, %v255, 2102212464
    %v268 = vsel %vm264, %v252, %v267
    %v269 = vsel %vm263, %v266, %v268
    %v270 = vsel %vm262, %v249, %v252
    %v271 = vsel %vm265, %v258, 920167782
    %v272 = vsel %vm264, %v255, %v271
    %v273 = vsel %vm263, %v270, %v272
    %v274 = vsel %vm262, %v252, %v255
    %v275 = vsel %vm265, %v261, 1326507024
    %v276 = vsel %vm264, %v258, %v275
    %v277 = vsel %vm263, %v274, %v276
    %v278 = vshll.u32 %v238, 8
    %v279 = vmul.u32.u64.compose %v278, %v277
    %v280 = vextract.low.u32 %v279
    %v281 = vextract.high.u32 %v279
    %v282 = vmul.u32.u64.compose %v278, %v273
    %v283 = vextract.low.u32 %v282
    %v284 = vextract.high.u32 %v282
    %v285 = vmul.u32 %v278, %v269
    %v286 = vadd.s32 %v281, %v283
    %vm287 = vc.u32 %v281, %v283
    %v288 = vadd.s32 %v284, 1
    %v289 = vsel %vm287, %v288, %v284
    %v290 = vadd.s32 %v285, %v289
    %v291 = vadd.s32 %v290, 536870912
    %v292 = vshrl.u32 %v291, 30
    %v293 = vshll.u32 %v292, 30
    %v294 = vsub.s32 %v290, %v293
    %vm295 = vcmp.lt.s32.totalorder %v294, 0
    %v296 = vsub.s32 0, %v294
    %v297 = vsel %vm295, %v296, %v294
    %v298 = vclz %v297
    %v299 = vsub.s32 %v298, 2
    %vm300 = vcmp.gt.s32.totalorder 0, %v299
    %v301 = vsel %vm300, 0, %v299
    %v302 = vsub.s32 32, %v301
    %v303 = vshll.u32 %v294, %v301
    %v304 = vshrl.u32 %v286, %v302
    %v305 = vor.u32 %v303, %v304
    %v306 = vsub.s32 4294967266, %v301
    %v307 = vadd.s32 %v306, 127
    %v308 = vshll.u32 %v307, 23
    %v309 = vor.u32 4788187, %v308
    %v310 = vand.u32 2147483647, %v309
    %v312 = vcvt.s32.f32 %v305
    %v313 = vmul.f32 %v312, %v310
    %v314 = vxor.u32 %v313, 2147483648
    %v315 = vsel %vm232, %v314, %v313
    %v316 = vsub.s32 4, %v292
    %v317 = vsel %vm232, %v316, %v292
    %v318 = vsel %vm231, %v214, %v315
    %v319 = vsel %vm231, 0, %v317
    %v320 = vcosq.f32.pop %v318
    %v321 = vsinq.f32.pop %v318
    %vm322 = vweird.f32 %v214
    %v323 = vadd.s32 %v319, 3
    %v324 = vand.u32 %v323, 3
    %vm325 = vcmp.lt.s32.totalorder %v324, 2
    %vm326 = vcmp.eq.s32.totalorder %v324, 0
    %v327 = vxor.u32 %v321, 2147483648
    %v328 = vsel %vm326, %v320, %v327
    %vm329 = vcmp.eq.s32.totalorder %v324, 2
    %v330 = vxor.u32 %v320, 2147483648
    %v331 = vsel %vm329, %v330, %v321
    %v332 = vsel %vm325, %v328, %v331
    %v333 = vsel %vm322, nan, %v332
    %v334 = vand.u32 2147483647, %v215
    %vm335 = vcmp.le.f32.partialorder %v334, 0.7853982
    %vm336 = vcmp.lt.s32.totalorder %v215, 0
    %v337 = vand.u32 %v215, 2139095040
    %v338 = vshrl.u32 %v337, 23
    %v339 = vsub.s32 %v338, 127
    %v340 = vand.u32 2147483647, %v215
    %v341 = vand.u32 %v340, 8388607
    %v342 = vor.u32 %v341, 8388608
    %v343 = vsub.s32 0, %v342
    %v344 = vadd.s32 %v339, 1
    %vm345 = vcmp.gt.s32.totalorder %v344, 0
    %v346 = vsel %vm345, %v344, 0
    %v347 = vshrl.u32 %v346, 5
    %v348 = vand.u32 %v346, 31
    %v349 = vsub.s32 32, %v348
    %v350 = vshrl.u32 683565275, %v349
    %v351 = vshll.u32 683565275, %v348
    %v352 = vshrl.u32 2475754826, %v349
    %v353 = vor.u32 %v351, %v352
    %v354 = vshll.u32 2475754826, %v348
    %v355 = vshrl.u32 2131351028, %v349
    %v356 = vor.u32 %v354, %v355
    %v357 = vshll.u32 2131351028, %v348
    %v358 = vshrl.u32 2102212464, %v349
    %v359 = vor.u32 %v357, %v358
    %v360 = vshll.u32 2102212464, %v348
    %v361 = vshrl.u32 920167782, %v349
    %v362 = vor.u32 %v360, %v361
    %v363 = vshll.u32 920167782, %v348
    %v364 = vshrl.u32 1326507024, %v349
    %v365 = vor.u32 %v363, %v364
    %vm366 = vcmp.lt.s32.totalorder %v347, 1
    %vm367 = vcmp.lt.s32.totalorder %v347, 2
    %vm368 = vcmp.lt.s32.totalorder %v347, 3
    %vm369 = vcmp.lt.s32.totalorder %v347, 4
    %v370 = vsel %vm366, %v350, %v353
    %v371 = vsel %vm369, %v359, 2102212464
    %v372 = vsel %vm368, %v356, %v371
    %v373 = vsel %vm367, %v370, %v372
    %v374 = vsel %vm366, %v353, %v356
    %v375 = vsel %vm369, %v362, 920167782
    %v376 = vsel %vm368, %v359, %v375
    %v377 = vsel %vm367, %v374, %v376
    %v378 = vsel %vm366, %v356, %v359
    %v379 = vsel %vm369, %v365, 1326507024
    %v380 = vsel %vm368, %v362, %v379
    %v381 = vsel %vm367, %v378, %v380
    %v382 = vshll.u32 %v342, 8
    %v383 = vmul.u32.u64.compose %v382, %v381
    %v384 = vextract.low.u32 %v383
    %v385 = vextract.high.u32 %v383
    %v386 = vmul.u32.u64.compose %v382, %v377
    %v387 = vextract.low.u32 %v386
    %v388 = vextract.high.u32 %v386
    %v389 = vmul.u32 %v382, %v373
    %v390 = vadd.s32 %v385, %v387
    %vm391 = vc.u32 %v385, %v387
    %v392 = vadd.s32 %v388, 1
    %v393 = vsel %vm391, %v392, %v388
    %v394 = vadd.s32 %v389, %v393
    %v395 = vadd.s32 %v394, 536870912
    %v396 = vshrl.u32 %v395, 30
    %v397 = vshll.u32 %v396, 30
    %v398 = vsub.s32 %v394, %v397
    %vm399 = vcmp.lt.s32.totalorder %v398, 0
    %v400 = vsub.s32 0, %v398
    %v401 = vsel %vm399, %v400, %v398
    %v402 = vclz %v401
    %v403 = vsub.s32 %v402, 2
    %vm404 = vcmp.gt.s32.totalorder 0, %v403
    %v405 = vsel %vm404, 0, %v403
    %v406 = vsub.s32 32, %v405
    %v407 = vshll.u32 %v398, %v405
    %v408 = vshrl.u32 %v390, %v406
    %v409 = vor.u32 %v407, %v408
    %v410 = vsub.s32 4294967266, %v405
    %v411 = vadd.s32 %v410, 127
    %v412 = vshll.u32 %v411, 23
    %v413 = vor.u32 4788187, %v412
    %v414 = vand.u32 2147483647, %v413
    %v416 = vcvt.s32.f32 %v409
    %v417 = vmul.f32 %v416, %v414
    %v418 = vxor.u32 %v417, 2147483648
    %v419 = vsel %vm336, %v418, %v417
    %v420 = vsub.s32 4, %v396
    %v421 = vsel %vm336, %v420, %v396
    %v422 = vsel %vm335, %v215, %v419
    %v423 = vsel %vm335, 0, %v421
    %v424 = vcosq.f32.pop %v422
    %v425 = vsinq.f32.pop %v422
    %vm426 = vweird.f32 %v215
    %v427 = vadd.s32 %v423, 3
    %v428 = vand.u32 %v427, 3
    %vm429 = vcmp.lt.s32.totalorder %v428, 2
    %vm430 = vcmp.eq.s32.totalorder %v428, 0
    %v431 = vxor.u32 %v425, 2147483648
    %v432 = vsel %vm430, %v424, %v431
    %vm433 = vcmp.eq.s32.totalorder %v428, 2
    %v434 = vxor.u32 %v424, 2147483648
    %v435 = vsel %vm433, %v434, %v425
    %v436 = vsel %vm429, %v432, %v435
    %v437 = vsel %vm426, nan, %v436
    %v438 = vand.u32 2147483647, %v216
    %vm439 = vcmp.le.f32.partialorder %v438, 0.7853982
    %vm440 = vcmp.lt.s32.totalorder %v216, 0
    %v441 = vand.u32 %v216, 2139095040
    %v442 = vshrl.u32 %v441, 23
    %v443 = vsub.s32 %v442, 127
    %v444 = vand.u32 2147483647, %v216
    %v445 = vand.u32 %v444, 8388607
    %v446 = vor.u32 %v445, 8388608
    %v447 = vsub.s32 0, %v446
    %v448 = vadd.s32 %v443, 1
    %vm449 = vcmp.gt.s32.totalorder %v448, 0
    %v450 = vsel %vm449, %v448, 0
    %v451 = vshrl.u32 %v450, 5
    %v452 = vand.u32 %v450, 31
    %v453 = vsub.s32 32, %v452
    %v454 = vshrl.u32 683565275, %v453
    %v455 = vshll.u32 683565275, %v452
    %v456 = vshrl.u32 2475754826, %v453
    %v457 = vor.u32 %v455, %v456
    %v458 = vshll.u32 2475754826, %v452
    %v459 = vshrl.u32 2131351028, %v453
    %v460 = vor.u32 %v458, %v459
    %v461 = vshll.u32 2131351028, %v452
    %v462 = vshrl.u32 2102212464, %v453
    %v463 = vor.u32 %v461, %v462
    %v464 = vshll.u32 2102212464, %v452
    %v465 = vshrl.u32 920167782, %v453
    %v466 = vor.u32 %v464, %v465
    %v467 = vshll.u32 920167782, %v452
    %v468 = vshrl.u32 1326507024, %v453
    %v469 = vor.u32 %v467, %v468
    %vm470 = vcmp.lt.s32.totalorder %v451, 1
    %vm471 = vcmp.lt.s32.totalorder %v451, 2
    %vm472 = vcmp.lt.s32.totalorder %v451, 3
    %vm473 = vcmp.lt.s32.totalorder %v451, 4
    %v474 = vsel %vm470, %v454, %v457
    %v475 = vsel %vm473, %v463, 2102212464
    %v476 = vsel %vm472, %v460, %v475
    %v477 = vsel %vm471, %v474, %v476
    %v478 = vsel %vm470, %v457, %v460
    %v479 = vsel %vm473, %v466, 920167782
    %v480 = vsel %vm472, %v463, %v479
    %v481 = vsel %vm471, %v478, %v480
    %v482 = vsel %vm470, %v460, %v463
    %v483 = vsel %vm473, %v469, 1326507024
    %v484 = vsel %vm472, %v466, %v483
    %v485 = vsel %vm471, %v482, %v484
    %v486 = vshll.u32 %v446, 8
    %v487 = vmul.u32.u64.compose %v486, %v485
    %v488 = vextract.low.u32 %v487
    %v489 = vextract.high.u32 %v487
    %v490 = vmul.u32.u64.compose %v486, %v481
    %v491 = vextract.low.u32 %v490
    %v492 = vextract.high.u32 %v490
    %v493 = vmul.u32 %v486, %v477
    %v494 = vadd.s32 %v489, %v491
    %vm495 = vc.u32 %v489, %v491
    %v496 = vadd.s32 %v492, 1
    %v497 = vsel %vm495, %v496, %v492
    %v498 = vadd.s32 %v493, %v497
    %v499 = vadd.s32 %v498, 536870912
    %v500 = vshrl.u32 %v499, 30
    %v501 = vshll.u32 %v500, 30
    %v502 = vsub.s32 %v498, %v501
    %vm503 = vcmp.lt.s32.totalorder %v502, 0
    %v504 = vsub.s32 0, %v502
    %v505 = vsel %vm503, %v504, %v502
    %v506 = vclz %v505
    %v507 = vsub.s32 %v506, 2
    %vm508 = vcmp.gt.s32.totalorder 0, %v507
    %v509 = vsel %vm508, 0, %v507
    %v510 = vsub.s32 32, %v509
    %v511 = vshll.u32 %v502, %v509
    %v512 = vshrl.u32 %v494, %v510
    %v513 = vor.u32 %v511, %v512
    %v514 = vsub.s32 4294967266, %v509
    %v515 = vadd.s32 %v514, 127
    %v516 = vshll.u32 %v515, 23
    %v517 = vor.u32 4788187, %v516
    %v518 = vand.u32 2147483647, %v517
    %v520 = vcvt.s32.f32 %v513
    %v521 = vmul.f32 %v520, %v518
    %v522 = vxor.u32 %v521, 2147483648
    %v523 = vsel %vm440, %v522, %v521
    %v524 = vsub.s32 4, %v500
    %v525 = vsel %vm440, %v524, %v500
    %v526 = vsel %vm439, %v216, %v523
    %v527 = vsel %vm439, 0, %v525
    %v528 = vcosq.f32.pop %v526
    %v529 = vsinq.f32.pop %v526
    %vm530 = vweird.f32 %v216
    %v531 = vadd.s32 %v527, 3
    %v532 = vand.u32 %v531, 3
    %vm533 = vcmp.lt.s32.totalorder %v532, 2
    %vm534 = vcmp.eq.s32.totalorder %v532, 0
    %v535 = vxor.u32 %v529, 2147483648
    %v536 = vsel %vm534, %v528, %v535
    %vm537 = vcmp.eq.s32.totalorder %v532, 2
    %v538 = vxor.u32 %v528, 2147483648
    %v539 = vsel %vm537, %v538, %v529
    %v540 = vsel %vm533, %v536, %v539
    %v541 = vsel %vm530, nan, %v540
    %v542 = vand.u32 2147483647, %v217
    %vm543 = vcmp.le.f32.partialorder %v542, 0.7853982
    %vm544 = vcmp.lt.s32.totalorder %v217, 0
    %v545 = vand.u32 %v217, 2139095040
    %v546 = vshrl.u32 %v545, 23
    %v547 = vsub.s32 %v546, 127
    %v548 = vand.u32 2147483647, %v217
    %v549 = vand.u32 %v548, 8388607
    %v550 = vor.u32 %v549, 8388608
    %v551 = vsub.s32 0, %v550
    %v552 = vadd.s32 %v547, 1
    %vm553 = vcmp.gt.s32.totalorder %v552, 0
    %v554 = vsel %vm553, %v552, 0
    %v555 = vshrl.u32 %v554, 5
    %v556 = vand.u32 %v554, 31
    %v557 = vsub.s32 32, %v556
    %v558 = vshrl.u32 683565275, %v557
    %v559 = vshll.u32 683565275, %v556
    %v560 = vshrl.u32 2475754826, %v557
    %v561 = vor.u32 %v559, %v560
    %v562 = vshll.u32 2475754826, %v556
    %v563 = vshrl.u32 2131351028, %v557
    %v564 = vor.u32 %v562, %v563
    %v565 = vshll.u32 2131351028, %v556
    %v566 = vshrl.u32 2102212464, %v557
    %v567 = vor.u32 %v565, %v566
    %v568 = vshll.u32 2102212464, %v556
    %v569 = vshrl.u32 920167782, %v557
    %v570 = vor.u32 %v568, %v569
    %v571 = vshll.u32 920167782, %v556
    %v572 = vshrl.u32 1326507024, %v557
    %v573 = vor.u32 %v571, %v572
    %vm574 = vcmp.lt.s32.totalorder %v555, 1
    %vm575 = vcmp.lt.s32.totalorder %v555, 2
    %vm576 = vcmp.lt.s32.totalorder %v555, 3
    %vm577 = vcmp.lt.s32.totalorder %v555, 4
    %v578 = vsel %vm574, %v558, %v561
    %v579 = vsel %vm577, %v567, 2102212464
    %v580 = vsel %vm576, %v564, %v579
    %v581 = vsel %vm575, %v578, %v580
    %v582 = vsel %vm574, %v561, %v564
    %v583 = vsel %vm577, %v570, 920167782
    %v584 = vsel %vm576, %v567, %v583
    %v585 = vsel %vm575, %v582, %v584
    %v586 = vsel %vm574, %v564, %v567
    %v587 = vsel %vm577, %v573, 1326507024
    %v588 = vsel %vm576, %v570, %v587
    %v589 = vsel %vm575, %v586, %v588
    %v590 = vshll.u32 %v550, 8
    %v591 = vmul.u32.u64.compose %v590, %v589
    %v592 = vextract.low.u32 %v591
    %v593 = vextract.high.u32 %v591
    %v594 = vmul.u32.u64.compose %v590, %v585
    %v595 = vextract.low.u32 %v594
    %v596 = vextract.high.u32 %v594
    %v597 = vmul.u32 %v590, %v581
    %v598 = vadd.s32 %v593, %v595
    %vm599 = vc.u32 %v593, %v595
    %v600 = vadd.s32 %v596, 1
    %v601 = vsel %vm599, %v600, %v596
    %v602 = vadd.s32 %v597, %v601
    %v603 = vadd.s32 %v602, 536870912
    %v604 = vshrl.u32 %v603, 30
    %v605 = vshll.u32 %v604, 30
    %v606 = vsub.s32 %v602, %v605
    %vm607 = vcmp.lt.s32.totalorder %v606, 0
    %v608 = vsub.s32 0, %v606
    %v609 = vsel %vm607, %v608, %v606
    %v610 = vclz %v609
    %v611 = vsub.s32 %v610, 2
    %vm612 = vcmp.gt.s32.totalorder 0, %v611
    %v613 = vsel %vm612, 0, %v611
    %v614 = vsub.s32 32, %v613
    %v615 = vshll.u32 %v606, %v613
    %v616 = vshrl.u32 %v598, %v614
    %v617 = vor.u32 %v615, %v616
    %v618 = vsub.s32 4294967266, %v613
    %v619 = vadd.s32 %v618, 127
    %v620 = vshll.u32 %v619, 23
    %v621 = vor.u32 4788187, %v620
    %v622 = vand.u32 2147483647, %v621
    %v624 = vcvt.s32.f32 %v617
    %v625 = vmul.f32 %v624, %v622
    %v626 = vxor.u32 %v625, 2147483648
    %v627 = vsel %vm544, %v626, %v625
    %v628 = vsub.s32 4, %v604
    %v629 = vsel %vm544, %v628, %v604
    %v630 = vsel %vm543, %v217, %v627
    %v631 = vsel %vm543, 0, %v629
    %v632 = vcosq.f32.pop %v630
    %v633 = vsinq.f32.pop %v630
    %vm634 = vweird.f32 %v217
    %v635 = vadd.s32 %v631, 3
    %v636 = vand.u32 %v635, 3
    %vm637 = vcmp.lt.s32.totalorder %v636, 2
    %vm638 = vcmp.eq.s32.totalorder %v636, 0
    %v639 = vxor.u32 %v633, 2147483648
    %v640 = vsel %vm638, %v632, %v639
    %vm641 = vcmp.eq.s32.totalorder %v636, 2
    %v642 = vxor.u32 %v632, 2147483648
    %v643 = vsel %vm641, %v642, %v633
    %v644 = vsel %vm637, %v640, %v643
    %v645 = vsel %vm634, nan, %v644
    %v646 = vand.u32 2147483647, %v218
    %vm647 = vcmp.le.f32.partialorder %v646, 0.7853982
    %vm648 = vcmp.lt.s32.totalorder %v218, 0
    %v649 = vand.u32 %v218, 2139095040
    %v650 = vshrl.u32 %v649, 23
    %v651 = vsub.s32 %v650, 127
    %v652 = vand.u32 2147483647, %v218
    %v653 = vand.u32 %v652, 8388607
    %v654 = vor.u32 %v653, 8388608
    %v655 = vsub.s32 0, %v654
    %v656 = vadd.s32 %v651, 1
    %vm657 = vcmp.gt.s32.totalorder %v656, 0
    %v658 = vsel %vm657, %v656, 0
    %v659 = vshrl.u32 %v658, 5
    %v660 = vand.u32 %v658, 31
    %v661 = vsub.s32 32, %v660
    %v662 = vshrl.u32 683565275, %v661
    %v663 = vshll.u32 683565275, %v660
    %v664 = vshrl.u32 2475754826, %v661
    %v665 = vor.u32 %v663, %v664
    %v666 = vshll.u32 2475754826, %v660
    %v667 = vshrl.u32 2131351028, %v661
    %v668 = vor.u32 %v666, %v667
    %v669 = vshll.u32 2131351028, %v660
    %v670 = vshrl.u32 2102212464, %v661
    %v671 = vor.u32 %v669, %v670
    %v672 = vshll.u32 2102212464, %v660
    %v673 = vshrl.u32 920167782, %v661
    %v674 = vor.u32 %v672, %v673
    %v675 = vshll.u32 920167782, %v660
    %v676 = vshrl.u32 1326507024, %v661
    %v677 = vor.u32 %v675, %v676
    %vm678 = vcmp.lt.s32.totalorder %v659, 1
    %vm679 = vcmp.lt.s32.totalorder %v659, 2
    %vm680 = vcmp.lt.s32.totalorder %v659, 3
    %vm681 = vcmp.lt.s32.totalorder %v659, 4
    %v682 = vsel %vm678, %v662, %v665
    %v683 = vsel %vm681, %v671, 2102212464
    %v684 = vsel %vm680, %v668, %v683
    %v685 = vsel %vm679, %v682, %v684
    %v686 = vsel %vm678, %v665, %v668
    %v687 = vsel %vm681, %v674, 920167782
    %v688 = vsel %vm680, %v671, %v687
    %v689 = vsel %vm679, %v686, %v688
    %v690 = vsel %vm678, %v668, %v671
    %v691 = vsel %vm681, %v677, 1326507024
    %v692 = vsel %vm680, %v674, %v691
    %v693 = vsel %vm679, %v690, %v692
    %v694 = vshll.u32 %v654, 8
    %v695 = vmul.u32.u64.compose %v694, %v693
    %v696 = vextract.low.u32 %v695
    %v697 = vextract.high.u32 %v695
    %v698 = vmul.u32.u64.compose %v694, %v689
    %v699 = vextract.low.u32 %v698
    %v700 = vextract.high.u32 %v698
    %v701 = vmul.u32 %v694, %v685
    %v702 = vadd.s32 %v697, %v699
    %vm703 = vc.u32 %v697, %v699
    %v704 = vadd.s32 %v700, 1
    %v705 = vsel %vm703, %v704, %v700
    %v706 = vadd.s32 %v701, %v705
    %v707 = vadd.s32 %v706, 536870912
    %v708 = vshrl.u32 %v707, 30
    %v709 = vshll.u32 %v708, 30
    %v710 = vsub.s32 %v706, %v709
    %vm711 = vcmp.lt.s32.totalorder %v710, 0
    %v712 = vsub.s32 0, %v710
    %v713 = vsel %vm711, %v712, %v710
    %v714 = vclz %v713
    %v715 = vsub.s32 %v714, 2
    %vm716 = vcmp.gt.s32.totalorder 0, %v715
    %v717 = vsel %vm716, 0, %v715
    %v718 = vsub.s32 32, %v717
    %v719 = vshll.u32 %v710, %v717
    %v720 = vshrl.u32 %v702, %v718
    %v721 = vor.u32 %v719, %v720
    %v722 = vsub.s32 4294967266, %v717
    %v723 = vadd.s32 %v722, 127
    %v724 = vshll.u32 %v723, 23
    %v725 = vor.u32 4788187, %v724
    %v726 = vand.u32 2147483647, %v725
    %v728 = vcvt.s32.f32 %v721
    %v729 = vmul.f32 %v728, %v726
    %v730 = vxor.u32 %v729, 2147483648
    %v731 = vsel %vm648, %v730, %v729
    %v732 = vsub.s32 4, %v708
    %v733 = vsel %vm648, %v732, %v708
    %v734 = vsel %vm647, %v218, %v731
    %v735 = vsel %vm647, 0, %v733
    %v736 = vcosq.f32.pop %v734
    %v737 = vsinq.f32.pop %v734
    %vm738 = vweird.f32 %v218
    %v739 = vadd.s32 %v735, 3
    %v740 = vand.u32 %v739, 3
    %vm741 = vcmp.lt.s32.totalorder %v740, 2
    %vm742 = vcmp.eq.s32.totalorder %v740, 0
    %v743 = vxor.u32 %v737, 2147483648
    %v744 = vsel %vm742, %v736, %v743
    %vm745 = vcmp.eq.s32.totalorder %v740, 2
    %v746 = vxor.u32 %v736, 2147483648
    %v747 = vsel %vm745, %v746, %v737
    %v748 = vsel %vm741, %v744, %v747
    %v749 = vsel %vm738, nan, %v748
    %v750 = vand.u32 2147483647, %v219
    %vm751 = vcmp.le.f32.partialorder %v750, 0.7853982
    %vm752 = vcmp.lt.s32.totalorder %v219, 0
    %v753 = vand.u32 %v219, 2139095040
    %v754 = vshrl.u32 %v753, 23
    %v755 = vsub.s32 %v754, 127
    %v756 = vand.u32 2147483647, %v219
    %v757 = vand.u32 %v756, 8388607
    %v758 = vor.u32 %v757, 8388608
    %v759 = vsub.s32 0, %v758
    %v760 = vadd.s32 %v755, 1
    %vm761 = vcmp.gt.s32.totalorder %v760, 0
    %v762 = vsel %vm761, %v760, 0
    %v763 = vshrl.u32 %v762, 5
    %v764 = vand.u32 %v762, 31
    %v765 = vsub.s32 32, %v764
    %v766 = vshrl.u32 683565275, %v765
    %v767 = vshll.u32 683565275, %v764
    %v768 = vshrl.u32 2475754826, %v765
    %v769 = vor.u32 %v767, %v768
    %v770 = vshll.u32 2475754826, %v764
    %v771 = vshrl.u32 2131351028, %v765
    %v772 = vor.u32 %v770, %v771
    %v773 = vshll.u32 2131351028, %v764
    %v774 = vshrl.u32 2102212464, %v765
    %v775 = vor.u32 %v773, %v774
    %v776 = vshll.u32 2102212464, %v764
    %v777 = vshrl.u32 920167782, %v765
    %v778 = vor.u32 %v776, %v777
    %v779 = vshll.u32 920167782, %v764
    %v780 = vshrl.u32 1326507024, %v765
    %v781 = vor.u32 %v779, %v780
    %vm782 = vcmp.lt.s32.totalorder %v763, 1
    %vm783 = vcmp.lt.s32.totalorder %v763, 2
    %vm784 = vcmp.lt.s32.totalorder %v763, 3
    %vm785 = vcmp.lt.s32.totalorder %v763, 4
    %v786 = vsel %vm782, %v766, %v769
    %v787 = vsel %vm785, %v775, 2102212464
    %v788 = vsel %vm784, %v772, %v787
    %v789 = vsel %vm783, %v786, %v788
    %v790 = vsel %vm782, %v769, %v772
    %v791 = vsel %vm785, %v778, 920167782
    %v792 = vsel %vm784, %v775, %v791
    %v793 = vsel %vm783, %v790, %v792
    %v794 = vsel %vm782, %v772, %v775
    %v795 = vsel %vm785, %v781, 1326507024
    %v796 = vsel %vm784, %v778, %v795
    %v797 = vsel %vm783, %v794, %v796
    %v798 = vshll.u32 %v758, 8
    %v799 = vmul.u32.u64.compose %v798, %v797
    %v800 = vextract.low.u32 %v799
    %v801 = vextract.high.u32 %v799
    %v802 = vmul.u32.u64.compose %v798, %v793
    %v803 = vextract.low.u32 %v802
    %v804 = vextract.high.u32 %v802
    %v805 = vmul.u32 %v798, %v789
    %v806 = vadd.s32 %v801, %v803
    %vm807 = vc.u32 %v801, %v803
    %v808 = vadd.s32 %v804, 1
    %v809 = vsel %vm807, %v808, %v804
    %v810 = vadd.s32 %v805, %v809
    %v811 = vadd.s32 %v810, 536870912
    %v812 = vshrl.u32 %v811, 30
    %v813 = vshll.u32 %v812, 30
    %v814 = vsub.s32 %v810, %v813
    %vm815 = vcmp.lt.s32.totalorder %v814, 0
    %v816 = vsub.s32 0, %v814
    %v817 = vsel %vm815, %v816, %v814
    %v818 = vclz %v817
    %v819 = vsub.s32 %v818, 2
    %vm820 = vcmp.gt.s32.totalorder 0, %v819
    %v821 = vsel %vm820, 0, %v819
    %v822 = vsub.s32 32, %v821
    %v823 = vshll.u32 %v814, %v821
    %v824 = vshrl.u32 %v806, %v822
    %v825 = vor.u32 %v823, %v824
    %v826 = vsub.s32 4294967266, %v821
    %v827 = vadd.s32 %v826, 127
    %v828 = vshll.u32 %v827, 23
    %v829 = vor.u32 4788187, %v828
    %v830 = vand.u32 2147483647, %v829
    %v832 = vcvt.s32.f32 %v825
    %v833 = vmul.f32 %v832, %v830
    %v834 = vxor.u32 %v833, 2147483648
    %v835 = vsel %vm752, %v834, %v833
    %v836 = vsub.s32 4, %v812
    %v837 = vsel %vm752, %v836, %v812
    %v838 = vsel %vm751, %v219, %v835
    %v839 = vsel %vm751, 0, %v837
    %v840 = vcosq.f32.pop %v838
    %v841 = vsinq.f32.pop %v838
    %vm842 = vweird.f32 %v219
    %v843 = vadd.s32 %v839, 3
    %v844 = vand.u32 %v843, 3
    %vm845 = vcmp.lt.s32.totalorder %v844, 2
    %vm846 = vcmp.eq.s32.totalorder %v844, 0
    %v847 = vxor.u32 %v841, 2147483648
    %v848 = vsel %vm846, %v840, %v847
    %vm849 = vcmp.eq.s32.totalorder %v844, 2
    %v850 = vxor.u32 %v840, 2147483648
    %v851 = vsel %vm849, %v850, %v841
    %v852 = vsel %vm845, %v848, %v851
    %v853 = vsel %vm842, nan, %v852
    %v854 = vand.u32 2147483647, %v220
    %vm855 = vcmp.le.f32.partialorder %v854, 0.7853982
    %vm856 = vcmp.lt.s32.totalorder %v220, 0
    %v857 = vand.u32 %v220, 2139095040
    %v858 = vshrl.u32 %v857, 23
    %v859 = vsub.s32 %v858, 127
    %v860 = vand.u32 2147483647, %v220
    %v861 = vand.u32 %v860, 8388607
    %v862 = vor.u32 %v861, 8388608
    %v863 = vsub.s32 0, %v862
    %v864 = vadd.s32 %v859, 1
    %vm865 = vcmp.gt.s32.totalorder %v864, 0
    %v866 = vsel %vm865, %v864, 0
    %v867 = vshrl.u32 %v866, 5
    %v868 = vand.u32 %v866, 31
    %v869 = vsub.s32 32, %v868
    %v870 = vshrl.u32 683565275, %v869
    %v871 = vshll.u32 683565275, %v868
    %v872 = vshrl.u32 2475754826, %v869
    %v873 = vor.u32 %v871, %v872
    %v874 = vshll.u32 2475754826, %v868
    %v875 = vshrl.u32 2131351028, %v869
    %v876 = vor.u32 %v874, %v875
    %v877 = vshll.u32 2131351028, %v868
    %v878 = vshrl.u32 2102212464, %v869
    %v879 = vor.u32 %v877, %v878
    %v880 = vshll.u32 2102212464, %v868
    %v881 = vshrl.u32 920167782, %v869
    %v882 = vor.u32 %v880, %v881
    %v883 = vshll.u32 920167782, %v868
    %v884 = vshrl.u32 1326507024, %v869
    %v885 = vor.u32 %v883, %v884
    %vm886 = vcmp.lt.s32.totalorder %v867, 1
    %vm887 = vcmp.lt.s32.totalorder %v867, 2
    %vm888 = vcmp.lt.s32.totalorder %v867, 3
    %vm889 = vcmp.lt.s32.totalorder %v867, 4
    %v890 = vsel %vm886, %v870, %v873
    %v891 = vsel %vm889, %v879, 2102212464
    %v892 = vsel %vm888, %v876, %v891
    %v893 = vsel %vm887, %v890, %v892
    %v894 = vsel %vm886, %v873, %v876
    %v895 = vsel %vm889, %v882, 920167782
    %v896 = vsel %vm888, %v879, %v895
    %v897 = vsel %vm887, %v894, %v896
    %v898 = vsel %vm886, %v876, %v879
    %v899 = vsel %vm889, %v885, 1326507024
    %v900 = vsel %vm888, %v882, %v899
    %v901 = vsel %vm887, %v898, %v900
    %v902 = vshll.u32 %v862, 8
    %v903 = vmul.u32.u64.compose %v902, %v901
    %v904 = vextract.low.u32 %v903
    %v905 = vextract.high.u32 %v903
    %v906 = vmul.u32.u64.compose %v902, %v897
    %v907 = vextract.low.u32 %v906
    %v908 = vextract.high.u32 %v906
    %v909 = vmul.u32 %v902, %v893
    %v910 = vadd.s32 %v905, %v907
    %vm911 = vc.u32 %v905, %v907
    %v912 = vadd.s32 %v908, 1
    %v913 = vsel %vm911, %v912, %v908
    %v914 = vadd.s32 %v909, %v913
    %v915 = vadd.s32 %v914, 536870912
    %v916 = vshrl.u32 %v915, 30
    %v917 = vshll.u32 %v916, 30
    %v918 = vsub.s32 %v914, %v917
    %vm919 = vcmp.lt.s32.totalorder %v918, 0
    %v920 = vsub.s32 0, %v918
    %v921 = vsel %vm919, %v920, %v918
    %v922 = vclz %v921
    %v923 = vsub.s32 %v922, 2
    %vm924 = vcmp.gt.s32.totalorder 0, %v923
    %v925 = vsel %vm924, 0, %v923
    %v926 = vsub.s32 32, %v925
    %v927 = vshll.u32 %v918, %v925
    %v928 = vshrl.u32 %v910, %v926
    %v929 = vor.u32 %v927, %v928
    %v930 = vsub.s32 4294967266, %v925
    %v931 = vadd.s32 %v930, 127
    %v932 = vshll.u32 %v931, 23
    %v933 = vor.u32 4788187, %v932
    %v934 = vand.u32 2147483647, %v933
    %v936 = vcvt.s32.f32 %v929
    %v937 = vmul.f32 %v936, %v934
    %v938 = vxor.u32 %v937, 2147483648
    %v939 = vsel %vm856, %v938, %v937
    %v940 = vsub.s32 4, %v916
    %v941 = vsel %vm856, %v940, %v916
    %v942 = vsel %vm855, %v220, %v939
    %v943 = vsel %vm855, 0, %v941
    %v944 = vcosq.f32.pop %v942
    %v945 = vsinq.f32.pop %v942
    %vm946 = vweird.f32 %v220
    %v947 = vadd.s32 %v943, 3
    %v948 = vand.u32 %v947, 3
    %vm949 = vcmp.lt.s32.totalorder %v948, 2
    %vm950 = vcmp.eq.s32.totalorder %v948, 0
    %v951 = vxor.u32 %v945, 2147483648
    %v952 = vsel %vm950, %v944, %v951
    %vm953 = vcmp.eq.s32.totalorder %v948, 2
    %v954 = vxor.u32 %v944, 2147483648
    %v955 = vsel %vm953, %v954, %v945
    %v956 = vsel %vm949, %v952, %v955
    %v957 = vsel %vm946, nan, %v956
    %v958 = vand.u32 2147483647, %v221
    %vm959 = vcmp.le.f32.partialorder %v958, 0.7853982
    %vm960 = vcmp.lt.s32.totalorder %v221, 0
    %v961 = vand.u32 %v221, 2139095040
    %v962 = vshrl.u32 %v961, 23
    %v963 = vsub.s32 %v962, 127
    %v964 = vand.u32 2147483647, %v221
    %v965 = vand.u32 %v964, 8388607
    %v966 = vor.u32 %v965, 8388608
    %v967 = vsub.s32 0, %v966
    %v968 = vadd.s32 %v963, 1
    %vm969 = vcmp.gt.s32.totalorder %v968, 0
    %v970 = vsel %vm969, %v968, 0
    %v971 = vshrl.u32 %v970, 5
    %v972 = vand.u32 %v970, 31
    %v973 = vsub.s32 32, %v972
    %v974 = vshrl.u32 683565275, %v973
    %v975 = vshll.u32 683565275, %v972
    %v976 = vshrl.u32 2475754826, %v973
    %v977 = vor.u32 %v975, %v976
    %v978 = vshll.u32 2475754826, %v972
    %v979 = vshrl.u32 2131351028, %v973
    %v980 = vor.u32 %v978, %v979
    %v981 = vshll.u32 2131351028, %v972
    %v982 = vshrl.u32 2102212464, %v973
    %v983 = vor.u32 %v981, %v982
    %v984 = vshll.u32 2102212464, %v972
    %v985 = vshrl.u32 920167782, %v973
    %v986 = vor.u32 %v984, %v985
    %v987 = vshll.u32 920167782, %v972
    %v988 = vshrl.u32 1326507024, %v973
    %v989 = vor.u32 %v987, %v988
    %vm990 = vcmp.lt.s32.totalorder %v971, 1
    %vm991 = vcmp.lt.s32.totalorder %v971, 2
    %vm992 = vcmp.lt.s32.totalorder %v971, 3
    %vm993 = vcmp.lt.s32.totalorder %v971, 4
    %v994 = vsel %vm990, %v974, %v977
    %v995 = vsel %vm993, %v983, 2102212464
    %v996 = vsel %vm992, %v980, %v995
    %v997 = vsel %vm991, %v994, %v996
    %v998 = vsel %vm990, %v977, %v980
    %v999 = vsel %vm993, %v986, 920167782
    %v1000 = vsel %vm992, %v983, %v999
    %v1001 = vsel %vm991, %v998, %v1000
    %v1002 = vsel %vm990, %v980, %v983
    %v1003 = vsel %vm993, %v989, 1326507024
    %v1004 = vsel %vm992, %v986, %v1003
    %v1005 = vsel %vm991, %v1002, %v1004
    %v1006 = vshll.u32 %v966, 8
    %v1007 = vmul.u32.u64.compose %v1006, %v1005
    %v1008 = vextract.low.u32 %v1007
    %v1009 = vextract.high.u32 %v1007
    %v1010 = vmul.u32.u64.compose %v1006, %v1001
    %v1011 = vextract.low.u32 %v1010
    %v1012 = vextract.high.u32 %v1010
    %v1013 = vmul.u32 %v1006, %v997
    %v1014 = vadd.s32 %v1009, %v1011
    %vm1015 = vc.u32 %v1009, %v1011
    %v1016 = vadd.s32 %v1012, 1
    %v1017 = vsel %vm1015, %v1016, %v1012
    %v1018 = vadd.s32 %v1013, %v1017
    %v1019 = vadd.s32 %v1018, 536870912
    %v1020 = vshrl.u32 %v1019, 30
    %v1021 = vshll.u32 %v1020, 30
    %v1022 = vsub.s32 %v1018, %v1021
    %vm1023 = vcmp.lt.s32.totalorder %v1022, 0
    %v1024 = vsub.s32 0, %v1022
    %v1025 = vsel %vm1023, %v1024, %v1022
    %v1026 = vclz %v1025
    %v1027 = vsub.s32 %v1026, 2
    %vm1028 = vcmp.gt.s32.totalorder 0, %v1027
    %v1029 = vsel %vm1028, 0, %v1027
    %v1030 = vsub.s32 32, %v1029
    %v1031 = vshll.u32 %v1022, %v1029
    %v1032 = vshrl.u32 %v1014, %v1030
    %v1033 = vor.u32 %v1031, %v1032
    %v1034 = vsub.s32 4294967266, %v1029
    %v1035 = vadd.s32 %v1034, 127
    %v1036 = vshll.u32 %v1035, 23
    %v1037 = vor.u32 4788187, %v1036
    %v1038 = vand.u32 2147483647, %v1037
    %v1040 = vcvt.s32.f32 %v1033
    %v1041 = vmul.f32 %v1040, %v1038
    %v1042 = vxor.u32 %v1041, 2147483648
    %v1043 = vsel %vm960, %v1042, %v1041
    %v1044 = vsub.s32 4, %v1020
    %v1045 = vsel %vm960, %v1044, %v1020
    %v1046 = vsel %vm959, %v221, %v1043
    %v1047 = vsel %vm959, 0, %v1045
    %v1048 = vcosq.f32.pop %v1046
    %v1049 = vsinq.f32.pop %v1046
    %vm1050 = vweird.f32 %v221
    %v1051 = vadd.s32 %v1047, 3
    %v1052 = vand.u32 %v1051, 3
    %vm1053 = vcmp.lt.s32.totalorder %v1052, 2
    %vm1054 = vcmp.eq.s32.totalorder %v1052, 0
    %v1055 = vxor.u32 %v1049, 2147483648
    %v1056 = vsel %vm1054, %v1048, %v1055
    %vm1057 = vcmp.eq.s32.totalorder %v1052, 2
    %v1058 = vxor.u32 %v1048, 2147483648
    %v1059 = vsel %vm1057, %v1058, %v1049
    %v1060 = vsel %vm1053, %v1056, %v1059
    %v1061 = vsel %vm1050, nan, %v1060
    %v1062 = vand.u32 2147483647, %v222
    %vm1063 = vcmp.le.f32.partialorder %v1062, 0.7853982
    %vm1064 = vcmp.lt.s32.totalorder %v222, 0
    %v1065 = vand.u32 %v222, 2139095040
    %v1066 = vshrl.u32 %v1065, 23
    %v1067 = vsub.s32 %v1066, 127
    %v1068 = vand.u32 2147483647, %v222
    %v1069 = vand.u32 %v1068, 8388607
    %v1070 = vor.u32 %v1069, 8388608
    %v1071 = vsub.s32 0, %v1070
    %v1072 = vadd.s32 %v1067, 1
    %vm1073 = vcmp.gt.s32.totalorder %v1072, 0
    %v1074 = vsel %vm1073, %v1072, 0
    %v1075 = vshrl.u32 %v1074, 5
    %v1076 = vand.u32 %v1074, 31
    %v1077 = vsub.s32 32, %v1076
    %v1078 = vshrl.u32 683565275, %v1077
    %v1079 = vshll.u32 683565275, %v1076
    %v1080 = vshrl.u32 2475754826, %v1077
    %v1081 = vor.u32 %v1079, %v1080
    %v1082 = vshll.u32 2475754826, %v1076
    %v1083 = vshrl.u32 2131351028, %v1077
    %v1084 = vor.u32 %v1082, %v1083
    %v1085 = vshll.u32 2131351028, %v1076
    %v1086 = vshrl.u32 2102212464, %v1077
    %v1087 = vor.u32 %v1085, %v1086
    %v1088 = vshll.u32 2102212464, %v1076
    %v1089 = vshrl.u32 920167782, %v1077
    %v1090 = vor.u32 %v1088, %v1089
    %v1091 = vshll.u32 920167782, %v1076
    %v1092 = vshrl.u32 1326507024, %v1077
    %v1093 = vor.u32 %v1091, %v1092
    %vm1094 = vcmp.lt.s32.totalorder %v1075, 1
    %vm1095 = vcmp.lt.s32.totalorder %v1075, 2
    %vm1096 = vcmp.lt.s32.totalorder %v1075, 3
    %vm1097 = vcmp.lt.s32.totalorder %v1075, 4
    %v1098 = vsel %vm1094, %v1078, %v1081
    %v1099 = vsel %vm1097, %v1087, 2102212464
    %v1100 = vsel %vm1096, %v1084, %v1099
    %v1101 = vsel %vm1095, %v1098, %v1100
    %v1102 = vsel %vm1094, %v1081, %v1084
    %v1103 = vsel %vm1097, %v1090, 920167782
    %v1104 = vsel %vm1096, %v1087, %v1103
    %v1105 = vsel %vm1095, %v1102, %v1104
    %v1106 = vsel %vm1094, %v1084, %v1087
    %v1107 = vsel %vm1097, %v1093, 1326507024
    %v1108 = vsel %vm1096, %v1090, %v1107
    %v1109 = vsel %vm1095, %v1106, %v1108
    %v1110 = vshll.u32 %v1070, 8
    %v1111 = vmul.u32.u64.compose %v1110, %v1109
    %v1112 = vextract.low.u32 %v1111
    %v1113 = vextract.high.u32 %v1111
    %v1114 = vmul.u32.u64.compose %v1110, %v1105
    %v1115 = vextract.low.u32 %v1114
    %v1116 = vextract.high.u32 %v1114
    %v1117 = vmul.u32 %v1110, %v1101
    %v1118 = vadd.s32 %v1113, %v1115
    %vm1119 = vc.u32 %v1113, %v1115
    %v1120 = vadd.s32 %v1116, 1
    %v1121 = vsel %vm1119, %v1120, %v1116
    %v1122 = vadd.s32 %v1117, %v1121
    %v1123 = vadd.s32 %v1122, 536870912
    %v1124 = vshrl.u32 %v1123, 30
    %v1125 = vshll.u32 %v1124, 30
    %v1126 = vsub.s32 %v1122, %v1125
    %vm1127 = vcmp.lt.s32.totalorder %v1126, 0
    %v1128 = vsub.s32 0, %v1126
    %v1129 = vsel %vm1127, %v1128, %v1126
    %v1130 = vclz %v1129
    %v1131 = vsub.s32 %v1130, 2
    %vm1132 = vcmp.gt.s32.totalorder 0, %v1131
    %v1133 = vsel %vm1132, 0, %v1131
    %v1134 = vsub.s32 32, %v1133
    %v1135 = vshll.u32 %v1126, %v1133
    %v1136 = vshrl.u32 %v1118, %v1134
    %v1137 = vor.u32 %v1135, %v1136
    %v1138 = vsub.s32 4294967266, %v1133
    %v1139 = vadd.s32 %v1138, 127
    %v1140 = vshll.u32 %v1139, 23
    %v1141 = vor.u32 4788187, %v1140
    %v1142 = vand.u32 2147483647, %v1141
    %v1144 = vcvt.s32.f32 %v1137
    %v1145 = vmul.f32 %v1144, %v1142
    %v1146 = vxor.u32 %v1145, 2147483648
    %v1147 = vsel %vm1064, %v1146, %v1145
    %v1148 = vsub.s32 4, %v1124
    %v1149 = vsel %vm1064, %v1148, %v1124
    %v1150 = vsel %vm1063, %v222, %v1147
    %v1151 = vsel %vm1063, 0, %v1149
    %v1152 = vcosq.f32.pop %v1150
    %v1153 = vsinq.f32.pop %v1150
    %vm1154 = vweird.f32 %v222
    %v1155 = vadd.s32 %v1151, 3
    %v1156 = vand.u32 %v1155, 3
    %vm1157 = vcmp.lt.s32.totalorder %v1156, 2
    %vm1158 = vcmp.eq.s32.totalorder %v1156, 0
    %v1159 = vxor.u32 %v1153, 2147483648
    %v1160 = vsel %vm1158, %v1152, %v1159
    %vm1161 = vcmp.eq.s32.totalorder %v1156, 2
    %v1162 = vxor.u32 %v1152, 2147483648
    %v1163 = vsel %vm1161, %v1162, %v1153
    %v1164 = vsel %vm1157, %v1160, %v1163
    %v1165 = vsel %vm1154, nan, %v1164
    %v1166 = vand.u32 2147483647, %v223
    %vm1167 = vcmp.le.f32.partialorder %v1166, 0.7853982
    %vm1168 = vcmp.lt.s32.totalorder %v223, 0
    %v1169 = vand.u32 %v223, 2139095040
    %v1170 = vshrl.u32 %v1169, 23
    %v1171 = vsub.s32 %v1170, 127
    %v1172 = vand.u32 2147483647, %v223
    %v1173 = vand.u32 %v1172, 8388607
    %v1174 = vor.u32 %v1173, 8388608
    %v1175 = vsub.s32 0, %v1174
    %v1176 = vadd.s32 %v1171, 1
    %vm1177 = vcmp.gt.s32.totalorder %v1176, 0
    %v1178 = vsel %vm1177, %v1176, 0
    %v1179 = vshrl.u32 %v1178, 5
    %v1180 = vand.u32 %v1178, 31
    %v1181 = vsub.s32 32, %v1180
    %v1182 = vshrl.u32 683565275, %v1181
    %v1183 = vshll.u32 683565275, %v1180
    %v1184 = vshrl.u32 2475754826, %v1181
    %v1185 = vor.u32 %v1183, %v1184
    %v1186 = vshll.u32 2475754826, %v1180
    %v1187 = vshrl.u32 2131351028, %v1181
    %v1188 = vor.u32 %v1186, %v1187
    %v1189 = vshll.u32 2131351028, %v1180
    %v1190 = vshrl.u32 2102212464, %v1181
    %v1191 = vor.u32 %v1189, %v1190
    %v1192 = vshll.u32 2102212464, %v1180
    %v1193 = vshrl.u32 920167782, %v1181
    %v1194 = vor.u32 %v1192, %v1193
    %v1195 = vshll.u32 920167782, %v1180
    %v1196 = vshrl.u32 1326507024, %v1181
    %v1197 = vor.u32 %v1195, %v1196
    %vm1198 = vcmp.lt.s32.totalorder %v1179, 1
    %vm1199 = vcmp.lt.s32.totalorder %v1179, 2
    %vm1200 = vcmp.lt.s32.totalorder %v1179, 3
    %vm1201 = vcmp.lt.s32.totalorder %v1179, 4
    %v1202 = vsel %vm1198, %v1182, %v1185
    %v1203 = vsel %vm1201, %v1191, 2102212464
    %v1204 = vsel %vm1200, %v1188, %v1203
    %v1205 = vsel %vm1199, %v1202, %v1204
    %v1206 = vsel %vm1198, %v1185, %v1188
    %v1207 = vsel %vm1201, %v1194, 920167782
    %v1208 = vsel %vm1200, %v1191, %v1207
    %v1209 = vsel %vm1199, %v1206, %v1208
    %v1210 = vsel %vm1198, %v1188, %v1191
    %v1211 = vsel %vm1201, %v1197, 1326507024
    %v1212 = vsel %vm1200, %v1194, %v1211
    %v1213 = vsel %vm1199, %v1210, %v1212
    %v1214 = vshll.u32 %v1174, 8
    %v1215 = vmul.u32.u64.compose %v1214, %v1213
    %v1216 = vextract.low.u32 %v1215
    %v1217 = vextract.high.u32 %v1215
    %v1218 = vmul.u32.u64.compose %v1214, %v1209
    %v1219 = vextract.low.u32 %v1218
    %v1220 = vextract.high.u32 %v1218
    %v1221 = vmul.u32 %v1214, %v1205
    %v1222 = vadd.s32 %v1217, %v1219
    %vm1223 = vc.u32 %v1217, %v1219
    %v1224 = vadd.s32 %v1220, 1
    %v1225 = vsel %vm1223, %v1224, %v1220
    %v1226 = vadd.s32 %v1221, %v1225
    %v1227 = vadd.s32 %v1226, 536870912
    %v1228 = vshrl.u32 %v1227, 30
    %v1229 = vshll.u32 %v1228, 30
    %v1230 = vsub.s32 %v1226, %v1229
    %vm1231 = vcmp.lt.s32.totalorder %v1230, 0
    %v1232 = vsub.s32 0, %v1230
    %v1233 = vsel %vm1231, %v1232, %v1230
    %v1234 = vclz %v1233
    %v1235 = vsub.s32 %v1234, 2
    %vm1236 = vcmp.gt.s32.totalorder 0, %v1235
    %v1237 = vsel %vm1236, 0, %v1235
    %v1238 = vsub.s32 32, %v1237
    %v1239 = vshll.u32 %v1230, %v1237
    %v1240 = vshrl.u32 %v1222, %v1238
    %v1241 = vor.u32 %v1239, %v1240
    %v1242 = vsub.s32 4294967266, %v1237
    %v1243 = vadd.s32 %v1242, 127
    %v1244 = vshll.u32 %v1243, 23
    %v1245 = vor.u32 4788187, %v1244
    %v1246 = vand.u32 2147483647, %v1245
    %v1248 = vcvt.s32.f32 %v1241
    %v1249 = vmul.f32 %v1248, %v1246
    %v1250 = vxor.u32 %v1249, 2147483648
    %v1251 = vsel %vm1168, %v1250, %v1249
    %v1252 = vsub.s32 4, %v1228
    %v1253 = vsel %vm1168, %v1252, %v1228
    %v1254 = vsel %vm1167, %v223, %v1251
    %v1255 = vsel %vm1167, 0, %v1253
    %v1256 = vcosq.f32.pop %v1254
    %v1257 = vsinq.f32.pop %v1254
    %vm1258 = vweird.f32 %v223
    %v1259 = vadd.s32 %v1255, 3
    %v1260 = vand.u32 %v1259, 3
    %vm1261 = vcmp.lt.s32.totalorder %v1260, 2
    %vm1262 = vcmp.eq.s32.totalorder %v1260, 0
    %v1263 = vxor.u32 %v1257, 2147483648
    %v1264 = vsel %vm1262, %v1256, %v1263
    %vm1265 = vcmp.eq.s32.totalorder %v1260, 2
    %v1266 = vxor.u32 %v1256, 2147483648
    %v1267 = vsel %vm1265, %v1266, %v1257
    %v1268 = vsel %vm1261, %v1264, %v1267
    %v1269 = vsel %vm1258, nan, %v1268
    %v1270 = vand.u32 2147483647, %v224
    %vm1271 = vcmp.le.f32.partialorder %v1270, 0.7853982
    %vm1272 = vcmp.lt.s32.totalorder %v224, 0
    %v1273 = vand.u32 %v224, 2139095040
    %v1274 = vshrl.u32 %v1273, 23
    %v1275 = vsub.s32 %v1274, 127
    %v1276 = vand.u32 2147483647, %v224
    %v1277 = vand.u32 %v1276, 8388607
    %v1278 = vor.u32 %v1277, 8388608
    %v1279 = vsub.s32 0, %v1278
    %v1280 = vadd.s32 %v1275, 1
    %vm1281 = vcmp.gt.s32.totalorder %v1280, 0
    %v1282 = vsel %vm1281, %v1280, 0
    %v1283 = vshrl.u32 %v1282, 5
    %v1284 = vand.u32 %v1282, 31
    %v1285 = vsub.s32 32, %v1284
    %v1286 = vshrl.u32 683565275, %v1285
    %v1287 = vshll.u32 683565275, %v1284
    %v1288 = vshrl.u32 2475754826, %v1285
    %v1289 = vor.u32 %v1287, %v1288
    %v1290 = vshll.u32 2475754826, %v1284
    %v1291 = vshrl.u32 2131351028, %v1285
    %v1292 = vor.u32 %v1290, %v1291
    %v1293 = vshll.u32 2131351028, %v1284
    %v1294 = vshrl.u32 2102212464, %v1285
    %v1295 = vor.u32 %v1293, %v1294
    %v1296 = vshll.u32 2102212464, %v1284
    %v1297 = vshrl.u32 920167782, %v1285
    %v1298 = vor.u32 %v1296, %v1297
    %v1299 = vshll.u32 920167782, %v1284
    %v1300 = vshrl.u32 1326507024, %v1285
    %v1301 = vor.u32 %v1299, %v1300
    %vm1302 = vcmp.lt.s32.totalorder %v1283, 1
    %vm1303 = vcmp.lt.s32.totalorder %v1283, 2
    %vm1304 = vcmp.lt.s32.totalorder %v1283, 3
    %vm1305 = vcmp.lt.s32.totalorder %v1283, 4
    %v1306 = vsel %vm1302, %v1286, %v1289
    %v1307 = vsel %vm1305, %v1295, 2102212464
    %v1308 = vsel %vm1304, %v1292, %v1307
    %v1309 = vsel %vm1303, %v1306, %v1308
    %v1310 = vsel %vm1302, %v1289, %v1292
    %v1311 = vsel %vm1305, %v1298, 920167782
    %v1312 = vsel %vm1304, %v1295, %v1311
    %v1313 = vsel %vm1303, %v1310, %v1312
    %v1314 = vsel %vm1302, %v1292, %v1295
    %v1315 = vsel %vm1305, %v1301, 1326507024
    %v1316 = vsel %vm1304, %v1298, %v1315
    %v1317 = vsel %vm1303, %v1314, %v1316
    %v1318 = vshll.u32 %v1278, 8
    %v1319 = vmul.u32.u64.compose %v1318, %v1317
    %v1320 = vextract.low.u32 %v1319
    %v1321 = vextract.high.u32 %v1319
    %v1322 = vmul.u32.u64.compose %v1318, %v1313
    %v1323 = vextract.low.u32 %v1322
    %v1324 = vextract.high.u32 %v1322
    %v1325 = vmul.u32 %v1318, %v1309
    %v1326 = vadd.s32 %v1321, %v1323
    %vm1327 = vc.u32 %v1321, %v1323
    %v1328 = vadd.s32 %v1324, 1
    %v1329 = vsel %vm1327, %v1328, %v1324
    %v1330 = vadd.s32 %v1325, %v1329
    %v1331 = vadd.s32 %v1330, 536870912
    %v1332 = vshrl.u32 %v1331, 30
    %v1333 = vshll.u32 %v1332, 30
    %v1334 = vsub.s32 %v1330, %v1333
    %vm1335 = vcmp.lt.s32.totalorder %v1334, 0
    %v1336 = vsub.s32 0, %v1334
    %v1337 = vsel %vm1335, %v1336, %v1334
    %v1338 = vclz %v1337
    %v1339 = vsub.s32 %v1338, 2
    %vm1340 = vcmp.gt.s32.totalorder 0, %v1339
    %v1341 = vsel %vm1340, 0, %v1339
    %v1342 = vsub.s32 32, %v1341
    %v1343 = vshll.u32 %v1334, %v1341
    %v1344 = vshrl.u32 %v1326, %v1342
    %v1345 = vor.u32 %v1343, %v1344
    %v1346 = vsub.s32 4294967266, %v1341
    %v1347 = vadd.s32 %v1346, 127
    %v1348 = vshll.u32 %v1347, 23
    %v1349 = vor.u32 4788187, %v1348
    %v1350 = vand.u32 2147483647, %v1349
    %v1352 = vcvt.s32.f32 %v1345
    %v1353 = vmul.f32 %v1352, %v1350
    %v1354 = vxor.u32 %v1353, 2147483648
    %v1355 = vsel %vm1272, %v1354, %v1353
    %v1356 = vsub.s32 4, %v1332
    %v1357 = vsel %vm1272, %v1356, %v1332
    %v1358 = vsel %vm1271, %v224, %v1355
    %v1359 = vsel %vm1271, 0, %v1357
    %v1360 = vcosq.f32.pop %v1358
    %v1361 = vsinq.f32.pop %v1358
    %vm1362 = vweird.f32 %v224
    %v1363 = vadd.s32 %v1359, 3
    %v1364 = vand.u32 %v1363, 3
    %vm1365 = vcmp.lt.s32.totalorder %v1364, 2
    %vm1366 = vcmp.eq.s32.totalorder %v1364, 0
    %v1367 = vxor.u32 %v1361, 2147483648
    %v1368 = vsel %vm1366, %v1360, %v1367
    %vm1369 = vcmp.eq.s32.totalorder %v1364, 2
    %v1370 = vxor.u32 %v1360, 2147483648
    %v1371 = vsel %vm1369, %v1370, %v1361
    %v1372 = vsel %vm1365, %v1368, %v1371
    %v1373 = vsel %vm1362, nan, %v1372
    %v1374 = vand.u32 2147483647, %v225
    %vm1375 = vcmp.le.f32.partialorder %v1374, 0.7853982
    %vm1376 = vcmp.lt.s32.totalorder %v225, 0
    %v1377 = vand.u32 %v225, 2139095040
    %v1378 = vshrl.u32 %v1377, 23
    %v1379 = vsub.s32 %v1378, 127
    %v1380 = vand.u32 2147483647, %v225
    %v1381 = vand.u32 %v1380, 8388607
    %v1382 = vor.u32 %v1381, 8388608
    %v1383 = vsub.s32 0, %v1382
    %v1384 = vadd.s32 %v1379, 1
    %vm1385 = vcmp.gt.s32.totalorder %v1384, 0
    %v1386 = vsel %vm1385, %v1384, 0
    %v1387 = vshrl.u32 %v1386, 5
    %v1388 = vand.u32 %v1386, 31
    %v1389 = vsub.s32 32, %v1388
    %v1390 = vshrl.u32 683565275, %v1389
    %v1391 = vshll.u32 683565275, %v1388
    %v1392 = vshrl.u32 2475754826, %v1389
    %v1393 = vor.u32 %v1391, %v1392
    %v1394 = vshll.u32 2475754826, %v1388
    %v1395 = vshrl.u32 2131351028, %v1389
    %v1396 = vor.u32 %v1394, %v1395
    %v1397 = vshll.u32 2131351028, %v1388
    %v1398 = vshrl.u32 2102212464, %v1389
    %v1399 = vor.u32 %v1397, %v1398
    %v1400 = vshll.u32 2102212464, %v1388
    %v1401 = vshrl.u32 920167782, %v1389
    %v1402 = vor.u32 %v1400, %v1401
    %v1403 = vshll.u32 920167782, %v1388
    %v1404 = vshrl.u32 1326507024, %v1389
    %v1405 = vor.u32 %v1403, %v1404
    %vm1406 = vcmp.lt.s32.totalorder %v1387, 1
    %vm1407 = vcmp.lt.s32.totalorder %v1387, 2
    %vm1408 = vcmp.lt.s32.totalorder %v1387, 3
    %vm1409 = vcmp.lt.s32.totalorder %v1387, 4
    %v1410 = vsel %vm1406, %v1390, %v1393
    %v1411 = vsel %vm1409, %v1399, 2102212464
    %v1412 = vsel %vm1408, %v1396, %v1411
    %v1413 = vsel %vm1407, %v1410, %v1412
    %v1414 = vsel %vm1406, %v1393, %v1396
    %v1415 = vsel %vm1409, %v1402, 920167782
    %v1416 = vsel %vm1408, %v1399, %v1415
    %v1417 = vsel %vm1407, %v1414, %v1416
    %v1418 = vsel %vm1406, %v1396, %v1399
    %v1419 = vsel %vm1409, %v1405, 1326507024
    %v1420 = vsel %vm1408, %v1402, %v1419
    %v1421 = vsel %vm1407, %v1418, %v1420
    %v1422 = vshll.u32 %v1382, 8
    %v1423 = vmul.u32.u64.compose %v1422, %v1421
    %v1424 = vextract.low.u32 %v1423
    %v1425 = vextract.high.u32 %v1423
    %v1426 = vmul.u32.u64.compose %v1422, %v1417
    %v1427 = vextract.low.u32 %v1426
    %v1428 = vextract.high.u32 %v1426
    %v1429 = vmul.u32 %v1422, %v1413
    %v1430 = vadd.s32 %v1425, %v1427
    %vm1431 = vc.u32 %v1425, %v1427
    %v1432 = vadd.s32 %v1428, 1
    %v1433 = vsel %vm1431, %v1432, %v1428
    %v1434 = vadd.s32 %v1429, %v1433
    %v1435 = vadd.s32 %v1434, 536870912
    %v1436 = vshrl.u32 %v1435, 30
    %v1437 = vshll.u32 %v1436, 30
    %v1438 = vsub.s32 %v1434, %v1437
    %vm1439 = vcmp.lt.s32.totalorder %v1438, 0
    %v1440 = vsub.s32 0, %v1438
    %v1441 = vsel %vm1439, %v1440, %v1438
    %v1442 = vclz %v1441
    %v1443 = vsub.s32 %v1442, 2
    %vm1444 = vcmp.gt.s32.totalorder 0, %v1443
    %v1445 = vsel %vm1444, 0, %v1443
    %v1446 = vsub.s32 32, %v1445
    %v1447 = vshll.u32 %v1438, %v1445
    %v1448 = vshrl.u32 %v1430, %v1446
    %v1449 = vor.u32 %v1447, %v1448
    %v1450 = vsub.s32 4294967266, %v1445
    %v1451 = vadd.s32 %v1450, 127
    %v1452 = vshll.u32 %v1451, 23
    %v1453 = vor.u32 4788187, %v1452
    %v1454 = vand.u32 2147483647, %v1453
    %v1456 = vcvt.s32.f32 %v1449
    %v1457 = vmul.f32 %v1456, %v1454
    %v1458 = vxor.u32 %v1457, 2147483648
    %v1459 = vsel %vm1376, %v1458, %v1457
    %v1460 = vsub.s32 4, %v1436
    %v1461 = vsel %vm1376, %v1460, %v1436
    %v1462 = vsel %vm1375, %v225, %v1459
    %v1463 = vsel %vm1375, 0, %v1461
    %v1464 = vcosq.f32.pop %v1462
    %v1465 = vsinq.f32.pop %v1462
    %vm1466 = vweird.f32 %v225
    %v1467 = vadd.s32 %v1463, 3
    %v1468 = vand.u32 %v1467, 3
    %vm1469 = vcmp.lt.s32.totalorder %v1468, 2
    %vm1470 = vcmp.eq.s32.totalorder %v1468, 0
    %v1471 = vxor.u32 %v1465, 2147483648
    %v1472 = vsel %vm1470, %v1464, %v1471
    %vm1473 = vcmp.eq.s32.totalorder %v1468, 2
    %v1474 = vxor.u32 %v1464, 2147483648
    %v1475 = vsel %vm1473, %v1474, %v1465
    %v1476 = vsel %vm1469, %v1472, %v1475
    %v1477 = vsel %vm1466, nan, %v1476
    %v1478 = vand.u32 2147483647, %v226
    %vm1479 = vcmp.le.f32.partialorder %v1478, 0.7853982
    %vm1480 = vcmp.lt.s32.totalorder %v226, 0
    %v1481 = vand.u32 %v226, 2139095040
    %v1482 = vshrl.u32 %v1481, 23
    %v1483 = vsub.s32 %v1482, 127
    %v1484 = vand.u32 2147483647, %v226
    %v1485 = vand.u32 %v1484, 8388607
    %v1486 = vor.u32 %v1485, 8388608
    %v1487 = vsub.s32 0, %v1486
    %v1488 = vadd.s32 %v1483, 1
    %vm1489 = vcmp.gt.s32.totalorder %v1488, 0
    %v1490 = vsel %vm1489, %v1488, 0
    %v1491 = vshrl.u32 %v1490, 5
    %v1492 = vand.u32 %v1490, 31
    %v1493 = vsub.s32 32, %v1492
    %v1494 = vshrl.u32 683565275, %v1493
    %v1495 = vshll.u32 683565275, %v1492
    %v1496 = vshrl.u32 2475754826, %v1493
    %v1497 = vor.u32 %v1495, %v1496
    %v1498 = vshll.u32 2475754826, %v1492
    %v1499 = vshrl.u32 2131351028, %v1493
    %v1500 = vor.u32 %v1498, %v1499
    %v1501 = vshll.u32 2131351028, %v1492
    %v1502 = vshrl.u32 2102212464, %v1493
    %v1503 = vor.u32 %v1501, %v1502
    %v1504 = vshll.u32 2102212464, %v1492
    %v1505 = vshrl.u32 920167782, %v1493
    %v1506 = vor.u32 %v1504, %v1505
    %v1507 = vshll.u32 920167782, %v1492
    %v1508 = vshrl.u32 1326507024, %v1493
    %v1509 = vor.u32 %v1507, %v1508
    %vm1510 = vcmp.lt.s32.totalorder %v1491, 1
    %vm1511 = vcmp.lt.s32.totalorder %v1491, 2
    %vm1512 = vcmp.lt.s32.totalorder %v1491, 3
    %vm1513 = vcmp.lt.s32.totalorder %v1491, 4
    %v1514 = vsel %vm1510, %v1494, %v1497
    %v1515 = vsel %vm1513, %v1503, 2102212464
    %v1516 = vsel %vm1512, %v1500, %v1515
    %v1517 = vsel %vm1511, %v1514, %v1516
    %v1518 = vsel %vm1510, %v1497, %v1500
    %v1519 = vsel %vm1513, %v1506, 920167782
    %v1520 = vsel %vm1512, %v1503, %v1519
    %v1521 = vsel %vm1511, %v1518, %v1520
    %v1522 = vsel %vm1510, %v1500, %v1503
    %v1523 = vsel %vm1513, %v1509, 1326507024
    %v1524 = vsel %vm1512, %v1506, %v1523
    %v1525 = vsel %vm1511, %v1522, %v1524
    %v1526 = vshll.u32 %v1486, 8
    %v1527 = vmul.u32.u64.compose %v1526, %v1525
    %v1528 = vextract.low.u32 %v1527
    %v1529 = vextract.high.u32 %v1527
    %v1530 = vmul.u32.u64.compose %v1526, %v1521
    %v1531 = vextract.low.u32 %v1530
    %v1532 = vextract.high.u32 %v1530
    %v1533 = vmul.u32 %v1526, %v1517
    %v1534 = vadd.s32 %v1529, %v1531
    %vm1535 = vc.u32 %v1529, %v1531
    %v1536 = vadd.s32 %v1532, 1
    %v1537 = vsel %vm1535, %v1536, %v1532
    %v1538 = vadd.s32 %v1533, %v1537
    %v1539 = vadd.s32 %v1538, 536870912
    %v1540 = vshrl.u32 %v1539, 30
    %v1541 = vshll.u32 %v1540, 30
    %v1542 = vsub.s32 %v1538, %v1541
    %vm1543 = vcmp.lt.s32.totalorder %v1542, 0
    %v1544 = vsub.s32 0, %v1542
    %v1545 = vsel %vm1543, %v1544, %v1542
    %v1546 = vclz %v1545
    %v1547 = vsub.s32 %v1546, 2
    %vm1548 = vcmp.gt.s32.totalorder 0, %v1547
    %v1549 = vsel %vm1548, 0, %v1547
    %v1550 = vsub.s32 32, %v1549
    %v1551 = vshll.u32 %v1542, %v1549
    %v1552 = vshrl.u32 %v1534, %v1550
    %v1553 = vor.u32 %v1551, %v1552
    %v1554 = vsub.s32 4294967266, %v1549
    %v1555 = vadd.s32 %v1554, 127
    %v1556 = vshll.u32 %v1555, 23
    %v1557 = vor.u32 4788187, %v1556
    %v1558 = vand.u32 2147483647, %v1557
    %v1560 = vcvt.s32.f32 %v1553
    %v1561 = vmul.f32 %v1560, %v1558
    %v1562 = vxor.u32 %v1561, 2147483648
    %v1563 = vsel %vm1480, %v1562, %v1561
    %v1564 = vsub.s32 4, %v1540
    %v1565 = vsel %vm1480, %v1564, %v1540
    %v1566 = vsel %vm1479, %v226, %v1563
    %v1567 = vsel %vm1479, 0, %v1565
    %v1568 = vcosq.f32.pop %v1566
    %v1569 = vsinq.f32.pop %v1566
    %vm1570 = vweird.f32 %v226
    %v1571 = vadd.s32 %v1567, 3
    %v1572 = vand.u32 %v1571, 3
    %vm1573 = vcmp.lt.s32.totalorder %v1572, 2
    %vm1574 = vcmp.eq.s32.totalorder %v1572, 0
    %v1575 = vxor.u32 %v1569, 2147483648
    %v1576 = vsel %vm1574, %v1568, %v1575
    %vm1577 = vcmp.eq.s32.totalorder %v1572, 2
    %v1578 = vxor.u32 %v1568, 2147483648
    %v1579 = vsel %vm1577, %v1578, %v1569
    %v1580 = vsel %vm1573, %v1576, %v1579
    %v1581 = vsel %vm1570, nan, %v1580
    %v1582 = vand.u32 2147483647, %v227
    %vm1583 = vcmp.le.f32.partialorder %v1582, 0.7853982
    %vm1584 = vcmp.lt.s32.totalorder %v227, 0
    %v1585 = vand.u32 %v227, 2139095040
    %v1586 = vshrl.u32 %v1585, 23
    %v1587 = vsub.s32 %v1586, 127
    %v1588 = vand.u32 2147483647, %v227
    %v1589 = vand.u32 %v1588, 8388607
    %v1590 = vor.u32 %v1589, 8388608
    %v1591 = vsub.s32 0, %v1590
    %v1592 = vadd.s32 %v1587, 1
    %vm1593 = vcmp.gt.s32.totalorder %v1592, 0
    %v1594 = vsel %vm1593, %v1592, 0
    %v1595 = vshrl.u32 %v1594, 5
    %v1596 = vand.u32 %v1594, 31
    %v1597 = vsub.s32 32, %v1596
    %v1598 = vshrl.u32 683565275, %v1597
    %v1599 = vshll.u32 683565275, %v1596
    %v1600 = vshrl.u32 2475754826, %v1597
    %v1601 = vor.u32 %v1599, %v1600
    %v1602 = vshll.u32 2475754826, %v1596
    %v1603 = vshrl.u32 2131351028, %v1597
    %v1604 = vor.u32 %v1602, %v1603
    %v1605 = vshll.u32 2131351028, %v1596
    %v1606 = vshrl.u32 2102212464, %v1597
    %v1607 = vor.u32 %v1605, %v1606
    %v1608 = vshll.u32 2102212464, %v1596
    %v1609 = vshrl.u32 920167782, %v1597
    %v1610 = vor.u32 %v1608, %v1609
    %v1611 = vshll.u32 920167782, %v1596
    %v1612 = vshrl.u32 1326507024, %v1597
    %v1613 = vor.u32 %v1611, %v1612
    %vm1614 = vcmp.lt.s32.totalorder %v1595, 1
    %vm1615 = vcmp.lt.s32.totalorder %v1595, 2
    %vm1616 = vcmp.lt.s32.totalorder %v1595, 3
    %vm1617 = vcmp.lt.s32.totalorder %v1595, 4
    %v1618 = vsel %vm1614, %v1598, %v1601
    %v1619 = vsel %vm1617, %v1607, 2102212464
    %v1620 = vsel %vm1616, %v1604, %v1619
    %v1621 = vsel %vm1615, %v1618, %v1620
    %v1622 = vsel %vm1614, %v1601, %v1604
    %v1623 = vsel %vm1617, %v1610, 920167782
    %v1624 = vsel %vm1616, %v1607, %v1623
    %v1625 = vsel %vm1615, %v1622, %v1624
    %v1626 = vsel %vm1614, %v1604, %v1607
    %v1627 = vsel %vm1617, %v1613, 1326507024
    %v1628 = vsel %vm1616, %v1610, %v1627
    %v1629 = vsel %vm1615, %v1626, %v1628
    %v1630 = vshll.u32 %v1590, 8
    %v1631 = vmul.u32.u64.compose %v1630, %v1629
    %v1632 = vextract.low.u32 %v1631
    %v1633 = vextract.high.u32 %v1631
    %v1634 = vmul.u32.u64.compose %v1630, %v1625
    %v1635 = vextract.low.u32 %v1634
    %v1636 = vextract.high.u32 %v1634
    %v1637 = vmul.u32 %v1630, %v1621
    %v1638 = vadd.s32 %v1633, %v1635
    %vm1639 = vc.u32 %v1633, %v1635
    %v1640 = vadd.s32 %v1636, 1
    %v1641 = vsel %vm1639, %v1640, %v1636
    %v1642 = vadd.s32 %v1637, %v1641
    %v1643 = vadd.s32 %v1642, 536870912
    %v1644 = vshrl.u32 %v1643, 30
    %v1645 = vshll.u32 %v1644, 30
    %v1646 = vsub.s32 %v1642, %v1645
    %vm1647 = vcmp.lt.s32.totalorder %v1646, 0
    %v1648 = vsub.s32 0, %v1646
    %v1649 = vsel %vm1647, %v1648, %v1646
    %v1650 = vclz %v1649
    %v1651 = vsub.s32 %v1650, 2
    %vm1652 = vcmp.gt.s32.totalorder 0, %v1651
    %v1653 = vsel %vm1652, 0, %v1651
    %v1654 = vsub.s32 32, %v1653
    %v1655 = vshll.u32 %v1646, %v1653
    %v1656 = vshrl.u32 %v1638, %v1654
    %v1657 = vor.u32 %v1655, %v1656
    %v1658 = vsub.s32 4294967266, %v1653
    %v1659 = vadd.s32 %v1658, 127
    %v1660 = vshll.u32 %v1659, 23
    %v1661 = vor.u32 4788187, %v1660
    %v1662 = vand.u32 2147483647, %v1661
    %v1664 = vcvt.s32.f32 %v1657
    %v1665 = vmul.f32 %v1664, %v1662
    %v1666 = vxor.u32 %v1665, 2147483648
    %v1667 = vsel %vm1584, %v1666, %v1665
    %v1668 = vsub.s32 4, %v1644
    %v1669 = vsel %vm1584, %v1668, %v1644
    %v1670 = vsel %vm1583, %v227, %v1667
    %v1671 = vsel %vm1583, 0, %v1669
    %v1672 = vcosq.f32.pop %v1670
    %v1673 = vsinq.f32.pop %v1670
    %vm1674 = vweird.f32 %v227
    %v1675 = vadd.s32 %v1671, 3
    %v1676 = vand.u32 %v1675, 3
    %vm1677 = vcmp.lt.s32.totalorder %v1676, 2
    %vm1678 = vcmp.eq.s32.totalorder %v1676, 0
    %v1679 = vxor.u32 %v1673, 2147483648
    %v1680 = vsel %vm1678, %v1672, %v1679
    %vm1681 = vcmp.eq.s32.totalorder %v1676, 2
    %v1682 = vxor.u32 %v1672, 2147483648
    %v1683 = vsel %vm1681, %v1682, %v1673
    %v1684 = vsel %vm1677, %v1680, %v1683
    %v1685 = vsel %vm1674, nan, %v1684
    %v1686 = vand.u32 2147483647, %v228
    %vm1687 = vcmp.le.f32.partialorder %v1686, 0.7853982
    %vm1688 = vcmp.lt.s32.totalorder %v228, 0
    %v1689 = vand.u32 %v228, 2139095040
    %v1690 = vshrl.u32 %v1689, 23
    %v1691 = vsub.s32 %v1690, 127
    %v1692 = vand.u32 2147483647, %v228
    %v1693 = vand.u32 %v1692, 8388607
    %v1694 = vor.u32 %v1693, 8388608
    %v1695 = vsub.s32 0, %v1694
    %v1696 = vadd.s32 %v1691, 1
    %vm1697 = vcmp.gt.s32.totalorder %v1696, 0
    %v1698 = vsel %vm1697, %v1696, 0
    %v1699 = vshrl.u32 %v1698, 5
    %v1700 = vand.u32 %v1698, 31
    %v1701 = vsub.s32 32, %v1700
    %v1702 = vshrl.u32 683565275, %v1701
    %v1703 = vshll.u32 683565275, %v1700
    %v1704 = vshrl.u32 2475754826, %v1701
    %v1705 = vor.u32 %v1703, %v1704
    %v1706 = vshll.u32 2475754826, %v1700
    %v1707 = vshrl.u32 2131351028, %v1701
    %v1708 = vor.u32 %v1706, %v1707
    %v1709 = vshll.u32 2131351028, %v1700
    %v1710 = vshrl.u32 2102212464, %v1701
    %v1711 = vor.u32 %v1709, %v1710
    %v1712 = vshll.u32 2102212464, %v1700
    %v1713 = vshrl.u32 920167782, %v1701
    %v1714 = vor.u32 %v1712, %v1713
    %v1715 = vshll.u32 920167782, %v1700
    %v1716 = vshrl.u32 1326507024, %v1701
    %v1717 = vor.u32 %v1715, %v1716
    %vm1718 = vcmp.lt.s32.totalorder %v1699, 1
    %vm1719 = vcmp.lt.s32.totalorder %v1699, 2
    %vm1720 = vcmp.lt.s32.totalorder %v1699, 3
    %vm1721 = vcmp.lt.s32.totalorder %v1699, 4
    %v1722 = vsel %vm1718, %v1702, %v1705
    %v1723 = vsel %vm1721, %v1711, 2102212464
    %v1724 = vsel %vm1720, %v1708, %v1723
    %v1725 = vsel %vm1719, %v1722, %v1724
    %v1726 = vsel %vm1718, %v1705, %v1708
    %v1727 = vsel %vm1721, %v1714, 920167782
    %v1728 = vsel %vm1720, %v1711, %v1727
    %v1729 = vsel %vm1719, %v1726, %v1728
    %v1730 = vsel %vm1718, %v1708, %v1711
    %v1731 = vsel %vm1721, %v1717, 1326507024
    %v1732 = vsel %vm1720, %v1714, %v1731
    %v1733 = vsel %vm1719, %v1730, %v1732
    %v1734 = vshll.u32 %v1694, 8
    %v1735 = vmul.u32.u64.compose %v1734, %v1733
    %v1736 = vextract.low.u32 %v1735
    %v1737 = vextract.high.u32 %v1735
    %v1738 = vmul.u32.u64.compose %v1734, %v1729
    %v1739 = vextract.low.u32 %v1738
    %v1740 = vextract.high.u32 %v1738
    %v1741 = vmul.u32 %v1734, %v1725
    %v1742 = vadd.s32 %v1737, %v1739
    %vm1743 = vc.u32 %v1737, %v1739
    %v1744 = vadd.s32 %v1740, 1
    %v1745 = vsel %vm1743, %v1744, %v1740
    %v1746 = vadd.s32 %v1741, %v1745
    %v1747 = vadd.s32 %v1746, 536870912
    %v1748 = vshrl.u32 %v1747, 30
    %v1749 = vshll.u32 %v1748, 30
    %v1750 = vsub.s32 %v1746, %v1749
    %vm1751 = vcmp.lt.s32.totalorder %v1750, 0
    %v1752 = vsub.s32 0, %v1750
    %v1753 = vsel %vm1751, %v1752, %v1750
    %v1754 = vclz %v1753
    %v1755 = vsub.s32 %v1754, 2
    %vm1756 = vcmp.gt.s32.totalorder 0, %v1755
    %v1757 = vsel %vm1756, 0, %v1755
    %v1758 = vsub.s32 32, %v1757
    %v1759 = vshll.u32 %v1750, %v1757
    %v1760 = vshrl.u32 %v1742, %v1758
    %v1761 = vor.u32 %v1759, %v1760
    %v1762 = vsub.s32 4294967266, %v1757
    %v1763 = vadd.s32 %v1762, 127
    %v1764 = vshll.u32 %v1763, 23
    %v1765 = vor.u32 4788187, %v1764
    %v1766 = vand.u32 2147483647, %v1765
    %v1768 = vcvt.s32.f32 %v1761
    %v1769 = vmul.f32 %v1768, %v1766
    %v1770 = vxor.u32 %v1769, 2147483648
    %v1771 = vsel %vm1688, %v1770, %v1769
    %v1772 = vsub.s32 4, %v1748
    %v1773 = vsel %vm1688, %v1772, %v1748
    %v1774 = vsel %vm1687, %v228, %v1771
    %v1775 = vsel %vm1687, 0, %v1773
    %v1776 = vcosq.f32.pop %v1774
    %v1777 = vsinq.f32.pop %v1774
    %vm1778 = vweird.f32 %v228
    %v1779 = vadd.s32 %v1775, 3
    %v1780 = vand.u32 %v1779, 3
    %vm1781 = vcmp.lt.s32.totalorder %v1780, 2
    %vm1782 = vcmp.eq.s32.totalorder %v1780, 0
    %v1783 = vxor.u32 %v1777, 2147483648
    %v1784 = vsel %vm1782, %v1776, %v1783
    %vm1785 = vcmp.eq.s32.totalorder %v1780, 2
    %v1786 = vxor.u32 %v1776, 2147483648
    %v1787 = vsel %vm1785, %v1786, %v1777
    %v1788 = vsel %vm1781, %v1784, %v1787
    %v1789 = vsel %vm1778, nan, %v1788
    %v1790 = vand.u32 2147483647, %v229
    %vm1791 = vcmp.le.f32.partialorder %v1790, 0.7853982
    %vm1792 = vcmp.lt.s32.totalorder %v229, 0
    %v1793 = vand.u32 %v229, 2139095040
    %v1794 = vshrl.u32 %v1793, 23
    %v1795 = vsub.s32 %v1794, 127
    %v1796 = vand.u32 2147483647, %v229
    %v1797 = vand.u32 %v1796, 8388607
    %v1798 = vor.u32 %v1797, 8388608
    %v1799 = vsub.s32 0, %v1798
    %v1800 = vadd.s32 %v1795, 1
    %vm1801 = vcmp.gt.s32.totalorder %v1800, 0
    %v1802 = vsel %vm1801, %v1800, 0
    %v1803 = vshrl.u32 %v1802, 5
    %v1804 = vand.u32 %v1802, 31
    %v1805 = vsub.s32 32, %v1804
    %v1806 = vshrl.u32 683565275, %v1805
    %v1807 = vshll.u32 683565275, %v1804
    %v1808 = vshrl.u32 2475754826, %v1805
    %v1809 = vor.u32 %v1807, %v1808
    %v1810 = vshll.u32 2475754826, %v1804
    %v1811 = vshrl.u32 2131351028, %v1805
    %v1812 = vor.u32 %v1810, %v1811
    %v1813 = vshll.u32 2131351028, %v1804
    %v1814 = vshrl.u32 2102212464, %v1805
    %v1815 = vor.u32 %v1813, %v1814
    %v1816 = vshll.u32 2102212464, %v1804
    %v1817 = vshrl.u32 920167782, %v1805
    %v1818 = vor.u32 %v1816, %v1817
    %v1819 = vshll.u32 920167782, %v1804
    %v1820 = vshrl.u32 1326507024, %v1805
    %v1821 = vor.u32 %v1819, %v1820
    %vm1822 = vcmp.lt.s32.totalorder %v1803, 1
    %vm1823 = vcmp.lt.s32.totalorder %v1803, 2
    %vm1824 = vcmp.lt.s32.totalorder %v1803, 3
    %vm1825 = vcmp.lt.s32.totalorder %v1803, 4
    %v1826 = vsel %vm1822, %v1806, %v1809
    %v1827 = vsel %vm1825, %v1815, 2102212464
    %v1828 = vsel %vm1824, %v1812, %v1827
    %v1829 = vsel %vm1823, %v1826, %v1828
    %v1830 = vsel %vm1822, %v1809, %v1812
    %v1831 = vsel %vm1825, %v1818, 920167782
    %v1832 = vsel %vm1824, %v1815, %v1831
    %v1833 = vsel %vm1823, %v1830, %v1832
    %v1834 = vsel %vm1822, %v1812, %v1815
    %v1835 = vsel %vm1825, %v1821, 1326507024
    %v1836 = vsel %vm1824, %v1818, %v1835
    %v1837 = vsel %vm1823, %v1834, %v1836
    %v1838 = vshll.u32 %v1798, 8
    %v1839 = vmul.u32.u64.compose %v1838, %v1837
    %v1840 = vextract.low.u32 %v1839
    %v1841 = vextract.high.u32 %v1839
    %v1842 = vmul.u32.u64.compose %v1838, %v1833
    %v1843 = vextract.low.u32 %v1842
    %v1844 = vextract.high.u32 %v1842
    %v1845 = vmul.u32 %v1838, %v1829
    %v1846 = vadd.s32 %v1841, %v1843
    %vm1847 = vc.u32 %v1841, %v1843
    %v1848 = vadd.s32 %v1844, 1
    %v1849 = vsel %vm1847, %v1848, %v1844
    %v1850 = vadd.s32 %v1845, %v1849
    %v1851 = vadd.s32 %v1850, 536870912
    %v1852 = vshrl.u32 %v1851, 30
    %v1853 = vshll.u32 %v1852, 30
    %v1854 = vsub.s32 %v1850, %v1853
    %vm1855 = vcmp.lt.s32.totalorder %v1854, 0
    %v1856 = vsub.s32 0, %v1854
    %v1857 = vsel %vm1855, %v1856, %v1854
    %v1858 = vclz %v1857
    %v1859 = vsub.s32 %v1858, 2
    %vm1860 = vcmp.gt.s32.totalorder 0, %v1859
    %v1861 = vsel %vm1860, 0, %v1859
    %v1862 = vsub.s32 32, %v1861
    %v1863 = vshll.u32 %v1854, %v1861
    %v1864 = vshrl.u32 %v1846, %v1862
    %v1865 = vor.u32 %v1863, %v1864
    %v1866 = vsub.s32 4294967266, %v1861
    %v1867 = vadd.s32 %v1866, 127
    %v1868 = vshll.u32 %v1867, 23
    %v1869 = vor.u32 4788187, %v1868
    %v1870 = vand.u32 2147483647, %v1869
    %v1872 = vcvt.s32.f32 %v1865
    %v1873 = vmul.f32 %v1872, %v1870
    %v1874 = vxor.u32 %v1873, 2147483648
    %v1875 = vsel %vm1792, %v1874, %v1873
    %v1876 = vsub.s32 4, %v1852
    %v1877 = vsel %vm1792, %v1876, %v1852
    %v1878 = vsel %vm1791, %v229, %v1875
    %v1879 = vsel %vm1791, 0, %v1877
    %v1880 = vcosq.f32.pop %v1878
    %v1881 = vsinq.f32.pop %v1878
    %vm1882 = vweird.f32 %v229
    %v1883 = vadd.s32 %v1879, 3
    %v1884 = vand.u32 %v1883, 3
    %vm1885 = vcmp.lt.s32.totalorder %v1884, 2
    %vm1886 = vcmp.eq.s32.totalorder %v1884, 0
    %v1887 = vxor.u32 %v1881, 2147483648
    %v1888 = vsel %vm1886, %v1880, %v1887
    %vm1889 = vcmp.eq.s32.totalorder %v1884, 2
    %v1890 = vxor.u32 %v1880, 2147483648
    %v1891 = vsel %vm1889, %v1890, %v1881
    %v1892 = vsel %vm1885, %v1888, %v1891
    %v1893 = vsel %vm1882, nan, %v1892
    %v1894 = vand.u32 2147483647, %v214
    %vm1895 = vcmp.le.f32.partialorder %v1894, 0.7853982
    %vm1896 = vcmp.lt.s32.totalorder %v214, 0
    %v1897 = vand.u32 %v214, 2139095040
    %v1898 = vshrl.u32 %v1897, 23
    %v1899 = vsub.s32 %v1898, 127
    %v1900 = vand.u32 2147483647, %v214
    %v1901 = vand.u32 %v1900, 8388607
    %v1902 = vor.u32 %v1901, 8388608
    %v1903 = vsub.s32 0, %v1902
    %v1904 = vadd.s32 %v1899, 1
    %vm1905 = vcmp.gt.s32.totalorder %v1904, 0
    %v1906 = vsel %vm1905, %v1904, 0
    %v1907 = vshrl.u32 %v1906, 5
    %v1908 = vand.u32 %v1906, 31
    %v1909 = vsub.s32 32, %v1908
    %v1910 = vshrl.u32 683565275, %v1909
    %v1911 = vshll.u32 683565275, %v1908
    %v1912 = vshrl.u32 2475754826, %v1909
    %v1913 = vor.u32 %v1911, %v1912
    %v1914 = vshll.u32 2475754826, %v1908
    %v1915 = vshrl.u32 2131351028, %v1909
    %v1916 = vor.u32 %v1914, %v1915
    %v1917 = vshll.u32 2131351028, %v1908
    %v1918 = vshrl.u32 2102212464, %v1909
    %v1919 = vor.u32 %v1917, %v1918
    %v1920 = vshll.u32 2102212464, %v1908
    %v1921 = vshrl.u32 920167782, %v1909
    %v1922 = vor.u32 %v1920, %v1921
    %v1923 = vshll.u32 920167782, %v1908
    %v1924 = vshrl.u32 1326507024, %v1909
    %v1925 = vor.u32 %v1923, %v1924
    %vm1926 = vcmp.lt.s32.totalorder %v1907, 1
    %vm1927 = vcmp.lt.s32.totalorder %v1907, 2
    %vm1928 = vcmp.lt.s32.totalorder %v1907, 3
    %vm1929 = vcmp.lt.s32.totalorder %v1907, 4
    %v1930 = vsel %vm1926, %v1910, %v1913
    %v1931 = vsel %vm1929, %v1919, 2102212464
    %v1932 = vsel %vm1928, %v1916, %v1931
    %v1933 = vsel %vm1927, %v1930, %v1932
    %v1934 = vsel %vm1926, %v1913, %v1916
    %v1935 = vsel %vm1929, %v1922, 920167782
    %v1936 = vsel %vm1928, %v1919, %v1935
    %v1937 = vsel %vm1927, %v1934, %v1936
    %v1938 = vsel %vm1926, %v1916, %v1919
    %v1939 = vsel %vm1929, %v1925, 1326507024
    %v1940 = vsel %vm1928, %v1922, %v1939
    %v1941 = vsel %vm1927, %v1938, %v1940
    %v1942 = vshll.u32 %v1902, 8
    %v1943 = vmul.u32.u64.compose %v1942, %v1941
    %v1944 = vextract.low.u32 %v1943
    %v1945 = vextract.high.u32 %v1943
    %v1946 = vmul.u32.u64.compose %v1942, %v1937
    %v1947 = vextract.low.u32 %v1946
    %v1948 = vextract.high.u32 %v1946
    %v1949 = vmul.u32 %v1942, %v1933
    %v1950 = vadd.s32 %v1945, %v1947
    %vm1951 = vc.u32 %v1945, %v1947
    %v1952 = vadd.s32 %v1948, 1
    %v1953 = vsel %vm1951, %v1952, %v1948
    %v1954 = vadd.s32 %v1949, %v1953
    %v1955 = vadd.s32 %v1954, 536870912
    %v1956 = vshrl.u32 %v1955, 30
    %v1957 = vshll.u32 %v1956, 30
    %v1958 = vsub.s32 %v1954, %v1957
    %vm1959 = vcmp.lt.s32.totalorder %v1958, 0
    %v1960 = vsub.s32 0, %v1958
    %v1961 = vsel %vm1959, %v1960, %v1958
    %v1962 = vclz %v1961
    %v1963 = vsub.s32 %v1962, 2
    %vm1964 = vcmp.gt.s32.totalorder 0, %v1963
    %v1965 = vsel %vm1964, 0, %v1963
    %v1966 = vsub.s32 32, %v1965
    %v1967 = vshll.u32 %v1958, %v1965
    %v1968 = vshrl.u32 %v1950, %v1966
    %v1969 = vor.u32 %v1967, %v1968
    %v1970 = vsub.s32 4294967266, %v1965
    %v1971 = vadd.s32 %v1970, 127
    %v1972 = vshll.u32 %v1971, 23
    %v1973 = vor.u32 4788187, %v1972
    %v1974 = vand.u32 2147483647, %v1973
    %v1976 = vcvt.s32.f32 %v1969
    %v1977 = vmul.f32 %v1976, %v1974
    %v1978 = vxor.u32 %v1977, 2147483648
    %v1979 = vsel %vm1896, %v1978, %v1977
    %v1980 = vsub.s32 4, %v1956
    %v1981 = vsel %vm1896, %v1980, %v1956
    %v1982 = vsel %vm1895, %v214, %v1979
    %v1983 = vsel %vm1895, 0, %v1981
    %v1984 = vcosq.f32.pop %v1982
    %v1985 = vsinq.f32.pop %v1982
    %vm1986 = vweird.f32 %v214
    %v1987 = vand.u32 %v1983, 3
    %vm1988 = vcmp.lt.s32.totalorder %v1987, 2
    %vm1989 = vcmp.eq.s32.totalorder %v1987, 0
    %v1990 = vxor.u32 %v1985, 2147483648
    %v1991 = vsel %vm1989, %v1984, %v1990
    %vm1992 = vcmp.eq.s32.totalorder %v1987, 2
    %v1993 = vxor.u32 %v1984, 2147483648
    %v1994 = vsel %vm1992, %v1993, %v1985
    %v1995 = vsel %vm1988, %v1991, %v1994
    %v1996 = vsel %vm1986, nan, %v1995
    %v1997 = vand.u32 2147483647, %v215
    %vm1998 = vcmp.le.f32.partialorder %v1997, 0.7853982
    %vm1999 = vcmp.lt.s32.totalorder %v215, 0
    %v2000 = vand.u32 %v215, 2139095040
    %v2001 = vshrl.u32 %v2000, 23
    %v2002 = vsub.s32 %v2001, 127
    %v2003 = vand.u32 2147483647, %v215
    %v2004 = vand.u32 %v2003, 8388607
    %v2005 = vor.u32 %v2004, 8388608
    %v2006 = vsub.s32 0, %v2005
    %v2007 = vadd.s32 %v2002, 1
    %vm2008 = vcmp.gt.s32.totalorder %v2007, 0
    %v2009 = vsel %vm2008, %v2007, 0
    %v2010 = vshrl.u32 %v2009, 5
    %v2011 = vand.u32 %v2009, 31
    %v2012 = vsub.s32 32, %v2011
    %v2013 = vshrl.u32 683565275, %v2012
    %v2014 = vshll.u32 683565275, %v2011
    %v2015 = vshrl.u32 2475754826, %v2012
    %v2016 = vor.u32 %v2014, %v2015
    %v2017 = vshll.u32 2475754826, %v2011
    %v2018 = vshrl.u32 2131351028, %v2012
    %v2019 = vor.u32 %v2017, %v2018
    %v2020 = vshll.u32 2131351028, %v2011
    %v2021 = vshrl.u32 2102212464, %v2012
    %v2022 = vor.u32 %v2020, %v2021
    %v2023 = vshll.u32 2102212464, %v2011
    %v2024 = vshrl.u32 920167782, %v2012
    %v2025 = vor.u32 %v2023, %v2024
    %v2026 = vshll.u32 920167782, %v2011
    %v2027 = vshrl.u32 1326507024, %v2012
    %v2028 = vor.u32 %v2026, %v2027
    %vm2029 = vcmp.lt.s32.totalorder %v2010, 1
    %vm2030 = vcmp.lt.s32.totalorder %v2010, 2
    %vm2031 = vcmp.lt.s32.totalorder %v2010, 3
    %vm2032 = vcmp.lt.s32.totalorder %v2010, 4
    %v2033 = vsel %vm2029, %v2013, %v2016
    %v2034 = vsel %vm2032, %v2022, 2102212464
    %v2035 = vsel %vm2031, %v2019, %v2034
    %v2036 = vsel %vm2030, %v2033, %v2035
    %v2037 = vsel %vm2029, %v2016, %v2019
    %v2038 = vsel %vm2032, %v2025, 920167782
    %v2039 = vsel %vm2031, %v2022, %v2038
    %v2040 = vsel %vm2030, %v2037, %v2039
    %v2041 = vsel %vm2029, %v2019, %v2022
    %v2042 = vsel %vm2032, %v2028, 1326507024
    %v2043 = vsel %vm2031, %v2025, %v2042
    %v2044 = vsel %vm2030, %v2041, %v2043
    %v2045 = vshll.u32 %v2005, 8
    %v2046 = vmul.u32.u64.compose %v2045, %v2044
    %v2047 = vextract.low.u32 %v2046
    %v2048 = vextract.high.u32 %v2046
    %v2049 = vmul.u32.u64.compose %v2045, %v2040
    %v2050 = vextract.low.u32 %v2049
    %v2051 = vextract.high.u32 %v2049
    %v2052 = vmul.u32 %v2045, %v2036
    %v2053 = vadd.s32 %v2048, %v2050
    %vm2054 = vc.u32 %v2048, %v2050
    %v2055 = vadd.s32 %v2051, 1
    %v2056 = vsel %vm2054, %v2055, %v2051
    %v2057 = vadd.s32 %v2052, %v2056
    %v2058 = vadd.s32 %v2057, 536870912
    %v2059 = vshrl.u32 %v2058, 30
    %v2060 = vshll.u32 %v2059, 30
    %v2061 = vsub.s32 %v2057, %v2060
    %vm2062 = vcmp.lt.s32.totalorder %v2061, 0
    %v2063 = vsub.s32 0, %v2061
    %v2064 = vsel %vm2062, %v2063, %v2061
    %v2065 = vclz %v2064
    %v2066 = vsub.s32 %v2065, 2
    %vm2067 = vcmp.gt.s32.totalorder 0, %v2066
    %v2068 = vsel %vm2067, 0, %v2066
    %v2069 = vsub.s32 32, %v2068
    %v2070 = vshll.u32 %v2061, %v2068
    %v2071 = vshrl.u32 %v2053, %v2069
    %v2072 = vor.u32 %v2070, %v2071
    %v2073 = vsub.s32 4294967266, %v2068
    %v2074 = vadd.s32 %v2073, 127
    %v2075 = vshll.u32 %v2074, 23
    %v2076 = vor.u32 4788187, %v2075
    %v2077 = vand.u32 2147483647, %v2076
    %v2079 = vcvt.s32.f32 %v2072
    %v2080 = vmul.f32 %v2079, %v2077
    %v2081 = vxor.u32 %v2080, 2147483648
    %v2082 = vsel %vm1999, %v2081, %v2080
    %v2083 = vsub.s32 4, %v2059
    %v2084 = vsel %vm1999, %v2083, %v2059
    %v2085 = vsel %vm1998, %v215, %v2082
    %v2086 = vsel %vm1998, 0, %v2084
    %v2087 = vcosq.f32.pop %v2085
    %v2088 = vsinq.f32.pop %v2085
    %vm2089 = vweird.f32 %v215
    %v2090 = vand.u32 %v2086, 3
    %vm2091 = vcmp.lt.s32.totalorder %v2090, 2
    %vm2092 = vcmp.eq.s32.totalorder %v2090, 0
    %v2093 = vxor.u32 %v2088, 2147483648
    %v2094 = vsel %vm2092, %v2087, %v2093
    %vm2095 = vcmp.eq.s32.totalorder %v2090, 2
    %v2096 = vxor.u32 %v2087, 2147483648
    %v2097 = vsel %vm2095, %v2096, %v2088
    %v2098 = vsel %vm2091, %v2094, %v2097
    %v2099 = vsel %vm2089, nan, %v2098
    %v2100 = vand.u32 2147483647, %v216
    %vm2101 = vcmp.le.f32.partialorder %v2100, 0.7853982
    %vm2102 = vcmp.lt.s32.totalorder %v216, 0
    %v2103 = vand.u32 %v216, 2139095040
    %v2104 = vshrl.u32 %v2103, 23
    %v2105 = vsub.s32 %v2104, 127
    %v2106 = vand.u32 2147483647, %v216
    %v2107 = vand.u32 %v2106, 8388607
    %v2108 = vor.u32 %v2107, 8388608
    %v2109 = vsub.s32 0, %v2108
    %v2110 = vadd.s32 %v2105, 1
    %vm2111 = vcmp.gt.s32.totalorder %v2110, 0
    %v2112 = vsel %vm2111, %v2110, 0
    %v2113 = vshrl.u32 %v2112, 5
    %v2114 = vand.u32 %v2112, 31
    %v2115 = vsub.s32 32, %v2114
    %v2116 = vshrl.u32 683565275, %v2115
    %v2117 = vshll.u32 683565275, %v2114
    %v2118 = vshrl.u32 2475754826, %v2115
    %v2119 = vor.u32 %v2117, %v2118
    %v2120 = vshll.u32 2475754826, %v2114
    %v2121 = vshrl.u32 2131351028, %v2115
    %v2122 = vor.u32 %v2120, %v2121
    %v2123 = vshll.u32 2131351028, %v2114
    %v2124 = vshrl.u32 2102212464, %v2115
    %v2125 = vor.u32 %v2123, %v2124
    %v2126 = vshll.u32 2102212464, %v2114
    %v2127 = vshrl.u32 920167782, %v2115
    %v2128 = vor.u32 %v2126, %v2127
    %v2129 = vshll.u32 920167782, %v2114
    %v2130 = vshrl.u32 1326507024, %v2115
    %v2131 = vor.u32 %v2129, %v2130
    %vm2132 = vcmp.lt.s32.totalorder %v2113, 1
    %vm2133 = vcmp.lt.s32.totalorder %v2113, 2
    %vm2134 = vcmp.lt.s32.totalorder %v2113, 3
    %vm2135 = vcmp.lt.s32.totalorder %v2113, 4
    %v2136 = vsel %vm2132, %v2116, %v2119
    %v2137 = vsel %vm2135, %v2125, 2102212464
    %v2138 = vsel %vm2134, %v2122, %v2137
    %v2139 = vsel %vm2133, %v2136, %v2138
    %v2140 = vsel %vm2132, %v2119, %v2122
    %v2141 = vsel %vm2135, %v2128, 920167782
    %v2142 = vsel %vm2134, %v2125, %v2141
    %v2143 = vsel %vm2133, %v2140, %v2142
    %v2144 = vsel %vm2132, %v2122, %v2125
    %v2145 = vsel %vm2135, %v2131, 1326507024
    %v2146 = vsel %vm2134, %v2128, %v2145
    %v2147 = vsel %vm2133, %v2144, %v2146
    %v2148 = vshll.u32 %v2108, 8
    %v2149 = vmul.u32.u64.compose %v2148, %v2147
    %v2150 = vextract.low.u32 %v2149
    %v2151 = vextract.high.u32 %v2149
    %v2152 = vmul.u32.u64.compose %v2148, %v2143
    %v2153 = vextract.low.u32 %v2152
    %v2154 = vextract.high.u32 %v2152
    %v2155 = vmul.u32 %v2148, %v2139
    %v2156 = vadd.s32 %v2151, %v2153
    %vm2157 = vc.u32 %v2151, %v2153
    %v2158 = vadd.s32 %v2154, 1
    %v2159 = vsel %vm2157, %v2158, %v2154
    %v2160 = vadd.s32 %v2155, %v2159
    %v2161 = vadd.s32 %v2160, 536870912
    %v2162 = vshrl.u32 %v2161, 30
    %v2163 = vshll.u32 %v2162, 30
    %v2164 = vsub.s32 %v2160, %v2163
    %vm2165 = vcmp.lt.s32.totalorder %v2164, 0
    %v2166 = vsub.s32 0, %v2164
    %v2167 = vsel %vm2165, %v2166, %v2164
    %v2168 = vclz %v2167
    %v2169 = vsub.s32 %v2168, 2
    %vm2170 = vcmp.gt.s32.totalorder 0, %v2169
    %v2171 = vsel %vm2170, 0, %v2169
    %v2172 = vsub.s32 32, %v2171
    %v2173 = vshll.u32 %v2164, %v2171
    %v2174 = vshrl.u32 %v2156, %v2172
    %v2175 = vor.u32 %v2173, %v2174
    %v2176 = vsub.s32 4294967266, %v2171
    %v2177 = vadd.s32 %v2176, 127
    %v2178 = vshll.u32 %v2177, 23
    %v2179 = vor.u32 4788187, %v2178
    %v2180 = vand.u32 2147483647, %v2179
    %v2182 = vcvt.s32.f32 %v2175
    %v2183 = vmul.f32 %v2182, %v2180
    %v2184 = vxor.u32 %v2183, 2147483648
    %v2185 = vsel %vm2102, %v2184, %v2183
    %v2186 = vsub.s32 4, %v2162
    %v2187 = vsel %vm2102, %v2186, %v2162
    %v2188 = vsel %vm2101, %v216, %v2185
    %v2189 = vsel %vm2101, 0, %v2187
    %v2190 = vcosq.f32.pop %v2188
    %v2191 = vsinq.f32.pop %v2188
    %vm2192 = vweird.f32 %v216
    %v2193 = vand.u32 %v2189, 3
    %vm2194 = vcmp.lt.s32.totalorder %v2193, 2
    %vm2195 = vcmp.eq.s32.totalorder %v2193, 0
    %v2196 = vxor.u32 %v2191, 2147483648
    %v2197 = vsel %vm2195, %v2190, %v2196
    %vm2198 = vcmp.eq.s32.totalorder %v2193, 2
    %v2199 = vxor.u32 %v2190, 2147483648
    %v2200 = vsel %vm2198, %v2199, %v2191
    %v2201 = vsel %vm2194, %v2197, %v2200
    %v2202 = vsel %vm2192, nan, %v2201
    %v2203 = vand.u32 2147483647, %v217
    %vm2204 = vcmp.le.f32.partialorder %v2203, 0.7853982
    %vm2205 = vcmp.lt.s32.totalorder %v217, 0
    %v2206 = vand.u32 %v217, 2139095040
    %v2207 = vshrl.u32 %v2206, 23
    %v2208 = vsub.s32 %v2207, 127
    %v2209 = vand.u32 2147483647, %v217
    %v2210 = vand.u32 %v2209, 8388607
    %v2211 = vor.u32 %v2210, 8388608
    %v2212 = vsub.s32 0, %v2211
    %v2213 = vadd.s32 %v2208, 1
    %vm2214 = vcmp.gt.s32.totalorder %v2213, 0
    %v2215 = vsel %vm2214, %v2213, 0
    %v2216 = vshrl.u32 %v2215, 5
    %v2217 = vand.u32 %v2215, 31
    %v2218 = vsub.s32 32, %v2217
    %v2219 = vshrl.u32 683565275, %v2218
    %v2220 = vshll.u32 683565275, %v2217
    %v2221 = vshrl.u32 2475754826, %v2218
    %v2222 = vor.u32 %v2220, %v2221
    %v2223 = vshll.u32 2475754826, %v2217
    %v2224 = vshrl.u32 2131351028, %v2218
    %v2225 = vor.u32 %v2223, %v2224
    %v2226 = vshll.u32 2131351028, %v2217
    %v2227 = vshrl.u32 2102212464, %v2218
    %v2228 = vor.u32 %v2226, %v2227
    %v2229 = vshll.u32 2102212464, %v2217
    %v2230 = vshrl.u32 920167782, %v2218
    %v2231 = vor.u32 %v2229, %v2230
    %v2232 = vshll.u32 920167782, %v2217
    %v2233 = vshrl.u32 1326507024, %v2218
    %v2234 = vor.u32 %v2232, %v2233
    %vm2235 = vcmp.lt.s32.totalorder %v2216, 1
    %vm2236 = vcmp.lt.s32.totalorder %v2216, 2
    %vm2237 = vcmp.lt.s32.totalorder %v2216, 3
    %vm2238 = vcmp.lt.s32.totalorder %v2216, 4
    %v2239 = vsel %vm2235, %v2219, %v2222
    %v2240 = vsel %vm2238, %v2228, 2102212464
    %v2241 = vsel %vm2237, %v2225, %v2240
    %v2242 = vsel %vm2236, %v2239, %v2241
    %v2243 = vsel %vm2235, %v2222, %v2225
    %v2244 = vsel %vm2238, %v2231, 920167782
    %v2245 = vsel %vm2237, %v2228, %v2244
    %v2246 = vsel %vm2236, %v2243, %v2245
    %v2247 = vsel %vm2235, %v2225, %v2228
    %v2248 = vsel %vm2238, %v2234, 1326507024
    %v2249 = vsel %vm2237, %v2231, %v2248
    %v2250 = vsel %vm2236, %v2247, %v2249
    %v2251 = vshll.u32 %v2211, 8
    %v2252 = vmul.u32.u64.compose %v2251, %v2250
    %v2253 = vextract.low.u32 %v2252
    %v2254 = vextract.high.u32 %v2252
    %v2255 = vmul.u32.u64.compose %v2251, %v2246
    %v2256 = vextract.low.u32 %v2255
    %v2257 = vextract.high.u32 %v2255
    %v2258 = vmul.u32 %v2251, %v2242
    %v2259 = vadd.s32 %v2254, %v2256
    %vm2260 = vc.u32 %v2254, %v2256
    %v2261 = vadd.s32 %v2257, 1
    %v2262 = vsel %vm2260, %v2261, %v2257
    %v2263 = vadd.s32 %v2258, %v2262
    %v2264 = vadd.s32 %v2263, 536870912
    %v2265 = vshrl.u32 %v2264, 30
    %v2266 = vshll.u32 %v2265, 30
    %v2267 = vsub.s32 %v2263, %v2266
    %vm2268 = vcmp.lt.s32.totalorder %v2267, 0
    %v2269 = vsub.s32 0, %v2267
    %v2270 = vsel %vm2268, %v2269, %v2267
    %v2271 = vclz %v2270
    %v2272 = vsub.s32 %v2271, 2
    %vm2273 = vcmp.gt.s32.totalorder 0, %v2272
    %v2274 = vsel %vm2273, 0, %v2272
    %v2275 = vsub.s32 32, %v2274
    %v2276 = vshll.u32 %v2267, %v2274
    %v2277 = vshrl.u32 %v2259, %v2275
    %v2278 = vor.u32 %v2276, %v2277
    %v2279 = vsub.s32 4294967266, %v2274
    %v2280 = vadd.s32 %v2279, 127
    %v2281 = vshll.u32 %v2280, 23
    %v2282 = vor.u32 4788187, %v2281
    %v2283 = vand.u32 2147483647, %v2282
    %v2285 = vcvt.s32.f32 %v2278
    %v2286 = vmul.f32 %v2285, %v2283
    %v2287 = vxor.u32 %v2286, 2147483648
    %v2288 = vsel %vm2205, %v2287, %v2286
    %v2289 = vsub.s32 4, %v2265
    %v2290 = vsel %vm2205, %v2289, %v2265
    %v2291 = vsel %vm2204, %v217, %v2288
    %v2292 = vsel %vm2204, 0, %v2290
    %v2293 = vcosq.f32.pop %v2291
    %v2294 = vsinq.f32.pop %v2291
    %vm2295 = vweird.f32 %v217
    %v2296 = vand.u32 %v2292, 3
    %vm2297 = vcmp.lt.s32.totalorder %v2296, 2
    %vm2298 = vcmp.eq.s32.totalorder %v2296, 0
    %v2299 = vxor.u32 %v2294, 2147483648
    %v2300 = vsel %vm2298, %v2293, %v2299
    %vm2301 = vcmp.eq.s32.totalorder %v2296, 2
    %v2302 = vxor.u32 %v2293, 2147483648
    %v2303 = vsel %vm2301, %v2302, %v2294
    %v2304 = vsel %vm2297, %v2300, %v2303
    %v2305 = vsel %vm2295, nan, %v2304
    %v2306 = vand.u32 2147483647, %v218
    %vm2307 = vcmp.le.f32.partialorder %v2306, 0.7853982
    %vm2308 = vcmp.lt.s32.totalorder %v218, 0
    %v2309 = vand.u32 %v218, 2139095040
    %v2310 = vshrl.u32 %v2309, 23
    %v2311 = vsub.s32 %v2310, 127
    %v2312 = vand.u32 2147483647, %v218
    %v2313 = vand.u32 %v2312, 8388607
    %v2314 = vor.u32 %v2313, 8388608
    %v2315 = vsub.s32 0, %v2314
    %v2316 = vadd.s32 %v2311, 1
    %vm2317 = vcmp.gt.s32.totalorder %v2316, 0
    %v2318 = vsel %vm2317, %v2316, 0
    %v2319 = vshrl.u32 %v2318, 5
    %v2320 = vand.u32 %v2318, 31
    %v2321 = vsub.s32 32, %v2320
    %v2322 = vshrl.u32 683565275, %v2321
    %v2323 = vshll.u32 683565275, %v2320
    %v2324 = vshrl.u32 2475754826, %v2321
    %v2325 = vor.u32 %v2323, %v2324
    %v2326 = vshll.u32 2475754826, %v2320
    %v2327 = vshrl.u32 2131351028, %v2321
    %v2328 = vor.u32 %v2326, %v2327
    %v2329 = vshll.u32 2131351028, %v2320
    %v2330 = vshrl.u32 2102212464, %v2321
    %v2331 = vor.u32 %v2329, %v2330
    %v2332 = vshll.u32 2102212464, %v2320
    %v2333 = vshrl.u32 920167782, %v2321
    %v2334 = vor.u32 %v2332, %v2333
    %v2335 = vshll.u32 920167782, %v2320
    %v2336 = vshrl.u32 1326507024, %v2321
    %v2337 = vor.u32 %v2335, %v2336
    %vm2338 = vcmp.lt.s32.totalorder %v2319, 1
    %vm2339 = vcmp.lt.s32.totalorder %v2319, 2
    %vm2340 = vcmp.lt.s32.totalorder %v2319, 3
    %vm2341 = vcmp.lt.s32.totalorder %v2319, 4
    %v2342 = vsel %vm2338, %v2322, %v2325
    %v2343 = vsel %vm2341, %v2331, 2102212464
    %v2344 = vsel %vm2340, %v2328, %v2343
    %v2345 = vsel %vm2339, %v2342, %v2344
    %v2346 = vsel %vm2338, %v2325, %v2328
    %v2347 = vsel %vm2341, %v2334, 920167782
    %v2348 = vsel %vm2340, %v2331, %v2347
    %v2349 = vsel %vm2339, %v2346, %v2348
    %v2350 = vsel %vm2338, %v2328, %v2331
    %v2351 = vsel %vm2341, %v2337, 1326507024
    %v2352 = vsel %vm2340, %v2334, %v2351
    %v2353 = vsel %vm2339, %v2350, %v2352
    %v2354 = vshll.u32 %v2314, 8
    %v2355 = vmul.u32.u64.compose %v2354, %v2353
    %v2356 = vextract.low.u32 %v2355
    %v2357 = vextract.high.u32 %v2355
    %v2358 = vmul.u32.u64.compose %v2354, %v2349
    %v2359 = vextract.low.u32 %v2358
    %v2360 = vextract.high.u32 %v2358
    %v2361 = vmul.u32 %v2354, %v2345
    %v2362 = vadd.s32 %v2357, %v2359
    %vm2363 = vc.u32 %v2357, %v2359
    %v2364 = vadd.s32 %v2360, 1
    %v2365 = vsel %vm2363, %v2364, %v2360
    %v2366 = vadd.s32 %v2361, %v2365
    %v2367 = vadd.s32 %v2366, 536870912
    %v2368 = vshrl.u32 %v2367, 30
    %v2369 = vshll.u32 %v2368, 30
    %v2370 = vsub.s32 %v2366, %v2369
    %vm2371 = vcmp.lt.s32.totalorder %v2370, 0
    %v2372 = vsub.s32 0, %v2370
    %v2373 = vsel %vm2371, %v2372, %v2370
    %v2374 = vclz %v2373
    %v2375 = vsub.s32 %v2374, 2
    %vm2376 = vcmp.gt.s32.totalorder 0, %v2375
    %v2377 = vsel %vm2376, 0, %v2375
    %v2378 = vsub.s32 32, %v2377
    %v2379 = vshll.u32 %v2370, %v2377
    %v2380 = vshrl.u32 %v2362, %v2378
    %v2381 = vor.u32 %v2379, %v2380
    %v2382 = vsub.s32 4294967266, %v2377
    %v2383 = vadd.s32 %v2382, 127
    %v2384 = vshll.u32 %v2383, 23
    %v2385 = vor.u32 4788187, %v2384
    %v2386 = vand.u32 2147483647, %v2385
    %v2388 = vcvt.s32.f32 %v2381
    %v2389 = vmul.f32 %v2388, %v2386
    %v2390 = vxor.u32 %v2389, 2147483648
    %v2391 = vsel %vm2308, %v2390, %v2389
    %v2392 = vsub.s32 4, %v2368
    %v2393 = vsel %vm2308, %v2392, %v2368
    %v2394 = vsel %vm2307, %v218, %v2391
    %v2395 = vsel %vm2307, 0, %v2393
    %v2396 = vcosq.f32.pop %v2394
    %v2397 = vsinq.f32.pop %v2394
    %vm2398 = vweird.f32 %v218
    %v2399 = vand.u32 %v2395, 3
    %vm2400 = vcmp.lt.s32.totalorder %v2399, 2
    %vm2401 = vcmp.eq.s32.totalorder %v2399, 0
    %v2402 = vxor.u32 %v2397, 2147483648
    %v2403 = vsel %vm2401, %v2396, %v2402
    %vm2404 = vcmp.eq.s32.totalorder %v2399, 2
    %v2405 = vxor.u32 %v2396, 2147483648
    %v2406 = vsel %vm2404, %v2405, %v2397
    %v2407 = vsel %vm2400, %v2403, %v2406
    %v2408 = vsel %vm2398, nan, %v2407
    %v2409 = vand.u32 2147483647, %v219
    %vm2410 = vcmp.le.f32.partialorder %v2409, 0.7853982
    %vm2411 = vcmp.lt.s32.totalorder %v219, 0
    %v2412 = vand.u32 %v219, 2139095040
    %v2413 = vshrl.u32 %v2412, 23
    %v2414 = vsub.s32 %v2413, 127
    %v2415 = vand.u32 2147483647, %v219
    %v2416 = vand.u32 %v2415, 8388607
    %v2417 = vor.u32 %v2416, 8388608
    %v2418 = vsub.s32 0, %v2417
    %v2419 = vadd.s32 %v2414, 1
    %vm2420 = vcmp.gt.s32.totalorder %v2419, 0
    %v2421 = vsel %vm2420, %v2419, 0
    %v2422 = vshrl.u32 %v2421, 5
    %v2423 = vand.u32 %v2421, 31
    %v2424 = vsub.s32 32, %v2423
    %v2425 = vshrl.u32 683565275, %v2424
    %v2426 = vshll.u32 683565275, %v2423
    %v2427 = vshrl.u32 2475754826, %v2424
    %v2428 = vor.u32 %v2426, %v2427
    %v2429 = vshll.u32 2475754826, %v2423
    %v2430 = vshrl.u32 2131351028, %v2424
    %v2431 = vor.u32 %v2429, %v2430
    %v2432 = vshll.u32 2131351028, %v2423
    %v2433 = vshrl.u32 2102212464, %v2424
    %v2434 = vor.u32 %v2432, %v2433
    %v2435 = vshll.u32 2102212464, %v2423
    %v2436 = vshrl.u32 920167782, %v2424
    %v2437 = vor.u32 %v2435, %v2436
    %v2438 = vshll.u32 920167782, %v2423
    %v2439 = vshrl.u32 1326507024, %v2424
    %v2440 = vor.u32 %v2438, %v2439
    %vm2441 = vcmp.lt.s32.totalorder %v2422, 1
    %vm2442 = vcmp.lt.s32.totalorder %v2422, 2
    %vm2443 = vcmp.lt.s32.totalorder %v2422, 3
    %vm2444 = vcmp.lt.s32.totalorder %v2422, 4
    %v2445 = vsel %vm2441, %v2425, %v2428
    %v2446 = vsel %vm2444, %v2434, 2102212464
    %v2447 = vsel %vm2443, %v2431, %v2446
    %v2448 = vsel %vm2442, %v2445, %v2447
    %v2449 = vsel %vm2441, %v2428, %v2431
    %v2450 = vsel %vm2444, %v2437, 920167782
    %v2451 = vsel %vm2443, %v2434, %v2450
    %v2452 = vsel %vm2442, %v2449, %v2451
    %v2453 = vsel %vm2441, %v2431, %v2434
    %v2454 = vsel %vm2444, %v2440, 1326507024
    %v2455 = vsel %vm2443, %v2437, %v2454
    %v2456 = vsel %vm2442, %v2453, %v2455
    %v2457 = vshll.u32 %v2417, 8
    %v2458 = vmul.u32.u64.compose %v2457, %v2456
    %v2459 = vextract.low.u32 %v2458
    %v2460 = vextract.high.u32 %v2458
    %v2461 = vmul.u32.u64.compose %v2457, %v2452
    %v2462 = vextract.low.u32 %v2461
    %v2463 = vextract.high.u32 %v2461
    %v2464 = vmul.u32 %v2457, %v2448
    %v2465 = vadd.s32 %v2460, %v2462
    %vm2466 = vc.u32 %v2460, %v2462
    %v2467 = vadd.s32 %v2463, 1
    %v2468 = vsel %vm2466, %v2467, %v2463
    %v2469 = vadd.s32 %v2464, %v2468
    %v2470 = vadd.s32 %v2469, 536870912
    %v2471 = vshrl.u32 %v2470, 30
    %v2472 = vshll.u32 %v2471, 30
    %v2473 = vsub.s32 %v2469, %v2472
    %vm2474 = vcmp.lt.s32.totalorder %v2473, 0
    %v2475 = vsub.s32 0, %v2473
    %v2476 = vsel %vm2474, %v2475, %v2473
    %v2477 = vclz %v2476
    %v2478 = vsub.s32 %v2477, 2
    %vm2479 = vcmp.gt.s32.totalorder 0, %v2478
    %v2480 = vsel %vm2479, 0, %v2478
    %v2481 = vsub.s32 32, %v2480
    %v2482 = vshll.u32 %v2473, %v2480
    %v2483 = vshrl.u32 %v2465, %v2481
    %v2484 = vor.u32 %v2482, %v2483
    %v2485 = vsub.s32 4294967266, %v2480
    %v2486 = vadd.s32 %v2485, 127
    %v2487 = vshll.u32 %v2486, 23
    %v2488 = vor.u32 4788187, %v2487
    %v2489 = vand.u32 2147483647, %v2488
    %v2491 = vcvt.s32.f32 %v2484
    %v2492 = vmul.f32 %v2491, %v2489
    %v2493 = vxor.u32 %v2492, 2147483648
    %v2494 = vsel %vm2411, %v2493, %v2492
    %v2495 = vsub.s32 4, %v2471
    %v2496 = vsel %vm2411, %v2495, %v2471
    %v2497 = vsel %vm2410, %v219, %v2494
    %v2498 = vsel %vm2410, 0, %v2496
    %v2499 = vcosq.f32.pop %v2497
    %v2500 = vsinq.f32.pop %v2497
    %vm2501 = vweird.f32 %v219
    %v2502 = vand.u32 %v2498, 3
    %vm2503 = vcmp.lt.s32.totalorder %v2502, 2
    %vm2504 = vcmp.eq.s32.totalorder %v2502, 0
    %v2505 = vxor.u32 %v2500, 2147483648
    %v2506 = vsel %vm2504, %v2499, %v2505
    %vm2507 = vcmp.eq.s32.totalorder %v2502, 2
    %v2508 = vxor.u32 %v2499, 2147483648
    %v2509 = vsel %vm2507, %v2508, %v2500
    %v2510 = vsel %vm2503, %v2506, %v2509
    %v2511 = vsel %vm2501, nan, %v2510
    %v2512 = vand.u32 2147483647, %v220
    %vm2513 = vcmp.le.f32.partialorder %v2512, 0.7853982
    %vm2514 = vcmp.lt.s32.totalorder %v220, 0
    %v2515 = vand.u32 %v220, 2139095040
    %v2516 = vshrl.u32 %v2515, 23
    %v2517 = vsub.s32 %v2516, 127
    %v2518 = vand.u32 2147483647, %v220
    %v2519 = vand.u32 %v2518, 8388607
    %v2520 = vor.u32 %v2519, 8388608
    %v2521 = vsub.s32 0, %v2520
    %v2522 = vadd.s32 %v2517, 1
    %vm2523 = vcmp.gt.s32.totalorder %v2522, 0
    %v2524 = vsel %vm2523, %v2522, 0
    %v2525 = vshrl.u32 %v2524, 5
    %v2526 = vand.u32 %v2524, 31
    %v2527 = vsub.s32 32, %v2526
    %v2528 = vshrl.u32 683565275, %v2527
    %v2529 = vshll.u32 683565275, %v2526
    %v2530 = vshrl.u32 2475754826, %v2527
    %v2531 = vor.u32 %v2529, %v2530
    %v2532 = vshll.u32 2475754826, %v2526
    %v2533 = vshrl.u32 2131351028, %v2527
    %v2534 = vor.u32 %v2532, %v2533
    %v2535 = vshll.u32 2131351028, %v2526
    %v2536 = vshrl.u32 2102212464, %v2527
    %v2537 = vor.u32 %v2535, %v2536
    %v2538 = vshll.u32 2102212464, %v2526
    %v2539 = vshrl.u32 920167782, %v2527
    %v2540 = vor.u32 %v2538, %v2539
    %v2541 = vshll.u32 920167782, %v2526
    %v2542 = vshrl.u32 1326507024, %v2527
    %v2543 = vor.u32 %v2541, %v2542
    %vm2544 = vcmp.lt.s32.totalorder %v2525, 1
    %vm2545 = vcmp.lt.s32.totalorder %v2525, 2
    %vm2546 = vcmp.lt.s32.totalorder %v2525, 3
    %vm2547 = vcmp.lt.s32.totalorder %v2525, 4
    %v2548 = vsel %vm2544, %v2528, %v2531
    %v2549 = vsel %vm2547, %v2537, 2102212464
    %v2550 = vsel %vm2546, %v2534, %v2549
    %v2551 = vsel %vm2545, %v2548, %v2550
    %v2552 = vsel %vm2544, %v2531, %v2534
    %v2553 = vsel %vm2547, %v2540, 920167782
    %v2554 = vsel %vm2546, %v2537, %v2553
    %v2555 = vsel %vm2545, %v2552, %v2554
    %v2556 = vsel %vm2544, %v2534, %v2537
    %v2557 = vsel %vm2547, %v2543, 1326507024
    %v2558 = vsel %vm2546, %v2540, %v2557
    %v2559 = vsel %vm2545, %v2556, %v2558
    %v2560 = vshll.u32 %v2520, 8
    %v2561 = vmul.u32.u64.compose %v2560, %v2559
    %v2562 = vextract.low.u32 %v2561
    %v2563 = vextract.high.u32 %v2561
    %v2564 = vmul.u32.u64.compose %v2560, %v2555
    %v2565 = vextract.low.u32 %v2564
    %v2566 = vextract.high.u32 %v2564
    %v2567 = vmul.u32 %v2560, %v2551
    %v2568 = vadd.s32 %v2563, %v2565
    %vm2569 = vc.u32 %v2563, %v2565
    %v2570 = vadd.s32 %v2566, 1
    %v2571 = vsel %vm2569, %v2570, %v2566
    %v2572 = vadd.s32 %v2567, %v2571
    %v2573 = vadd.s32 %v2572, 536870912
    %v2574 = vshrl.u32 %v2573, 30
    %v2575 = vshll.u32 %v2574, 30
    %v2576 = vsub.s32 %v2572, %v2575
    %vm2577 = vcmp.lt.s32.totalorder %v2576, 0
    %v2578 = vsub.s32 0, %v2576
    %v2579 = vsel %vm2577, %v2578, %v2576
    %v2580 = vclz %v2579
    %v2581 = vsub.s32 %v2580, 2
    %vm2582 = vcmp.gt.s32.totalorder 0, %v2581
    %v2583 = vsel %vm2582, 0, %v2581
    %v2584 = vsub.s32 32, %v2583
    %v2585 = vshll.u32 %v2576, %v2583
    %v2586 = vshrl.u32 %v2568, %v2584
    %v2587 = vor.u32 %v2585, %v2586
    %v2588 = vsub.s32 4294967266, %v2583
    %v2589 = vadd.s32 %v2588, 127
    %v2590 = vshll.u32 %v2589, 23
    %v2591 = vor.u32 4788187, %v2590
    %v2592 = vand.u32 2147483647, %v2591
    %v2594 = vcvt.s32.f32 %v2587
    %v2595 = vmul.f32 %v2594, %v2592
    %v2596 = vxor.u32 %v2595, 2147483648
    %v2597 = vsel %vm2514, %v2596, %v2595
    %v2598 = vsub.s32 4, %v2574
    %v2599 = vsel %vm2514, %v2598, %v2574
    %v2600 = vsel %vm2513, %v220, %v2597
    %v2601 = vsel %vm2513, 0, %v2599
    %v2602 = vcosq.f32.pop %v2600
    %v2603 = vsinq.f32.pop %v2600
    %vm2604 = vweird.f32 %v220
    %v2605 = vand.u32 %v2601, 3
    %vm2606 = vcmp.lt.s32.totalorder %v2605, 2
    %vm2607 = vcmp.eq.s32.totalorder %v2605, 0
    %v2608 = vxor.u32 %v2603, 2147483648
    %v2609 = vsel %vm2607, %v2602, %v2608
    %vm2610 = vcmp.eq.s32.totalorder %v2605, 2
    %v2611 = vxor.u32 %v2602, 2147483648
    %v2612 = vsel %vm2610, %v2611, %v2603
    %v2613 = vsel %vm2606, %v2609, %v2612
    %v2614 = vsel %vm2604, nan, %v2613
    %v2615 = vand.u32 2147483647, %v221
    %vm2616 = vcmp.le.f32.partialorder %v2615, 0.7853982
    %vm2617 = vcmp.lt.s32.totalorder %v221, 0
    %v2618 = vand.u32 %v221, 2139095040
    %v2619 = vshrl.u32 %v2618, 23
    %v2620 = vsub.s32 %v2619, 127
    %v2621 = vand.u32 2147483647, %v221
    %v2622 = vand.u32 %v2621, 8388607
    %v2623 = vor.u32 %v2622, 8388608
    %v2624 = vsub.s32 0, %v2623
    %v2625 = vadd.s32 %v2620, 1
    %vm2626 = vcmp.gt.s32.totalorder %v2625, 0
    %v2627 = vsel %vm2626, %v2625, 0
    %v2628 = vshrl.u32 %v2627, 5
    %v2629 = vand.u32 %v2627, 31
    %v2630 = vsub.s32 32, %v2629
    %v2631 = vshrl.u32 683565275, %v2630
    %v2632 = vshll.u32 683565275, %v2629
    %v2633 = vshrl.u32 2475754826, %v2630
    %v2634 = vor.u32 %v2632, %v2633
    %v2635 = vshll.u32 2475754826, %v2629
    %v2636 = vshrl.u32 2131351028, %v2630
    %v2637 = vor.u32 %v2635, %v2636
    %v2638 = vshll.u32 2131351028, %v2629
    %v2639 = vshrl.u32 2102212464, %v2630
    %v2640 = vor.u32 %v2638, %v2639
    %v2641 = vshll.u32 2102212464, %v2629
    %v2642 = vshrl.u32 920167782, %v2630
    %v2643 = vor.u32 %v2641, %v2642
    %v2644 = vshll.u32 920167782, %v2629
    %v2645 = vshrl.u32 1326507024, %v2630
    %v2646 = vor.u32 %v2644, %v2645
    %vm2647 = vcmp.lt.s32.totalorder %v2628, 1
    %vm2648 = vcmp.lt.s32.totalorder %v2628, 2
    %vm2649 = vcmp.lt.s32.totalorder %v2628, 3
    %vm2650 = vcmp.lt.s32.totalorder %v2628, 4
    %v2651 = vsel %vm2647, %v2631, %v2634
    %v2652 = vsel %vm2650, %v2640, 2102212464
    %v2653 = vsel %vm2649, %v2637, %v2652
    %v2654 = vsel %vm2648, %v2651, %v2653
    %v2655 = vsel %vm2647, %v2634, %v2637
    %v2656 = vsel %vm2650, %v2643, 920167782
    %v2657 = vsel %vm2649, %v2640, %v2656
    %v2658 = vsel %vm2648, %v2655, %v2657
    %v2659 = vsel %vm2647, %v2637, %v2640
    %v2660 = vsel %vm2650, %v2646, 1326507024
    %v2661 = vsel %vm2649, %v2643, %v2660
    %v2662 = vsel %vm2648, %v2659, %v2661
    %v2663 = vshll.u32 %v2623, 8
    %v2664 = vmul.u32.u64.compose %v2663, %v2662
    %v2665 = vextract.low.u32 %v2664
    %v2666 = vextract.high.u32 %v2664
    %v2667 = vmul.u32.u64.compose %v2663, %v2658
    %v2668 = vextract.low.u32 %v2667
    %v2669 = vextract.high.u32 %v2667
    %v2670 = vmul.u32 %v2663, %v2654
    %v2671 = vadd.s32 %v2666, %v2668
    %vm2672 = vc.u32 %v2666, %v2668
    %v2673 = vadd.s32 %v2669, 1
    %v2674 = vsel %vm2672, %v2673, %v2669
    %v2675 = vadd.s32 %v2670, %v2674
    %v2676 = vadd.s32 %v2675, 536870912
    %v2677 = vshrl.u32 %v2676, 30
    %v2678 = vshll.u32 %v2677, 30
    %v2679 = vsub.s32 %v2675, %v2678
    %vm2680 = vcmp.lt.s32.totalorder %v2679, 0
    %v2681 = vsub.s32 0, %v2679
    %v2682 = vsel %vm2680, %v2681, %v2679
    %v2683 = vclz %v2682
    %v2684 = vsub.s32 %v2683, 2
    %vm2685 = vcmp.gt.s32.totalorder 0, %v2684
    %v2686 = vsel %vm2685, 0, %v2684
    %v2687 = vsub.s32 32, %v2686
    %v2688 = vshll.u32 %v2679, %v2686
    %v2689 = vshrl.u32 %v2671, %v2687
    %v2690 = vor.u32 %v2688, %v2689
    %v2691 = vsub.s32 4294967266, %v2686
    %v2692 = vadd.s32 %v2691, 127
    %v2693 = vshll.u32 %v2692, 23
    %v2694 = vor.u32 4788187, %v2693
    %v2695 = vand.u32 2147483647, %v2694
    %v2697 = vcvt.s32.f32 %v2690
    %v2698 = vmul.f32 %v2697, %v2695
    %v2699 = vxor.u32 %v2698, 2147483648
    %v2700 = vsel %vm2617, %v2699, %v2698
    %v2701 = vsub.s32 4, %v2677
    %v2702 = vsel %vm2617, %v2701, %v2677
    %v2703 = vsel %vm2616, %v221, %v2700
    %v2704 = vsel %vm2616, 0, %v2702
    %v2705 = vcosq.f32.pop %v2703
    %v2706 = vsinq.f32.pop %v2703
    %vm2707 = vweird.f32 %v221
    %v2708 = vand.u32 %v2704, 3
    %vm2709 = vcmp.lt.s32.totalorder %v2708, 2
    %vm2710 = vcmp.eq.s32.totalorder %v2708, 0
    %v2711 = vxor.u32 %v2706, 2147483648
    %v2712 = vsel %vm2710, %v2705, %v2711
    %vm2713 = vcmp.eq.s32.totalorder %v2708, 2
    %v2714 = vxor.u32 %v2705, 2147483648
    %v2715 = vsel %vm2713, %v2714, %v2706
    %v2716 = vsel %vm2709, %v2712, %v2715
    %v2717 = vsel %vm2707, nan, %v2716
    %v2718 = vand.u32 2147483647, %v222
    %vm2719 = vcmp.le.f32.partialorder %v2718, 0.7853982
    %vm2720 = vcmp.lt.s32.totalorder %v222, 0
    %v2721 = vand.u32 %v222, 2139095040
    %v2722 = vshrl.u32 %v2721, 23
    %v2723 = vsub.s32 %v2722, 127
    %v2724 = vand.u32 2147483647, %v222
    %v2725 = vand.u32 %v2724, 8388607
    %v2726 = vor.u32 %v2725, 8388608
    %v2727 = vsub.s32 0, %v2726
    %v2728 = vadd.s32 %v2723, 1
    %vm2729 = vcmp.gt.s32.totalorder %v2728, 0
    %v2730 = vsel %vm2729, %v2728, 0
    %v2731 = vshrl.u32 %v2730, 5
    %v2732 = vand.u32 %v2730, 31
    %v2733 = vsub.s32 32, %v2732
    %v2734 = vshrl.u32 683565275, %v2733
    %v2735 = vshll.u32 683565275, %v2732
    %v2736 = vshrl.u32 2475754826, %v2733
    %v2737 = vor.u32 %v2735, %v2736
    %v2738 = vshll.u32 2475754826, %v2732
    %v2739 = vshrl.u32 2131351028, %v2733
    %v2740 = vor.u32 %v2738, %v2739
    %v2741 = vshll.u32 2131351028, %v2732
    %v2742 = vshrl.u32 2102212464, %v2733
    %v2743 = vor.u32 %v2741, %v2742
    %v2744 = vshll.u32 2102212464, %v2732
    %v2745 = vshrl.u32 920167782, %v2733
    %v2746 = vor.u32 %v2744, %v2745
    %v2747 = vshll.u32 920167782, %v2732
    %v2748 = vshrl.u32 1326507024, %v2733
    %v2749 = vor.u32 %v2747, %v2748
    %vm2750 = vcmp.lt.s32.totalorder %v2731, 1
    %vm2751 = vcmp.lt.s32.totalorder %v2731, 2
    %vm2752 = vcmp.lt.s32.totalorder %v2731, 3
    %vm2753 = vcmp.lt.s32.totalorder %v2731, 4
    %v2754 = vsel %vm2750, %v2734, %v2737
    %v2755 = vsel %vm2753, %v2743, 2102212464
    %v2756 = vsel %vm2752, %v2740, %v2755
    %v2757 = vsel %vm2751, %v2754, %v2756
    %v2758 = vsel %vm2750, %v2737, %v2740
    %v2759 = vsel %vm2753, %v2746, 920167782
    %v2760 = vsel %vm2752, %v2743, %v2759
    %v2761 = vsel %vm2751, %v2758, %v2760
    %v2762 = vsel %vm2750, %v2740, %v2743
    %v2763 = vsel %vm2753, %v2749, 1326507024
    %v2764 = vsel %vm2752, %v2746, %v2763
    %v2765 = vsel %vm2751, %v2762, %v2764
    %v2766 = vshll.u32 %v2726, 8
    %v2767 = vmul.u32.u64.compose %v2766, %v2765
    %v2768 = vextract.low.u32 %v2767
    %v2769 = vextract.high.u32 %v2767
    %v2770 = vmul.u32.u64.compose %v2766, %v2761
    %v2771 = vextract.low.u32 %v2770
    %v2772 = vextract.high.u32 %v2770
    %v2773 = vmul.u32 %v2766, %v2757
    %v2774 = vadd.s32 %v2769, %v2771
    %vm2775 = vc.u32 %v2769, %v2771
    %v2776 = vadd.s32 %v2772, 1
    %v2777 = vsel %vm2775, %v2776, %v2772
    %v2778 = vadd.s32 %v2773, %v2777
    %v2779 = vadd.s32 %v2778, 536870912
    %v2780 = vshrl.u32 %v2779, 30
    %v2781 = vshll.u32 %v2780, 30
    %v2782 = vsub.s32 %v2778, %v2781
    %vm2783 = vcmp.lt.s32.totalorder %v2782, 0
    %v2784 = vsub.s32 0, %v2782
    %v2785 = vsel %vm2783, %v2784, %v2782
    %v2786 = vclz %v2785
    %v2787 = vsub.s32 %v2786, 2
    %vm2788 = vcmp.gt.s32.totalorder 0, %v2787
    %v2789 = vsel %vm2788, 0, %v2787
    %v2790 = vsub.s32 32, %v2789
    %v2791 = vshll.u32 %v2782, %v2789
    %v2792 = vshrl.u32 %v2774, %v2790
    %v2793 = vor.u32 %v2791, %v2792
    %v2794 = vsub.s32 4294967266, %v2789
    %v2795 = vadd.s32 %v2794, 127
    %v2796 = vshll.u32 %v2795, 23
    %v2797 = vor.u32 4788187, %v2796
    %v2798 = vand.u32 2147483647, %v2797
    %v2800 = vcvt.s32.f32 %v2793
    %v2801 = vmul.f32 %v2800, %v2798
    %v2802 = vxor.u32 %v2801, 2147483648
    %v2803 = vsel %vm2720, %v2802, %v2801
    %v2804 = vsub.s32 4, %v2780
    %v2805 = vsel %vm2720, %v2804, %v2780
    %v2806 = vsel %vm2719, %v222, %v2803
    %v2807 = vsel %vm2719, 0, %v2805
    %v2808 = vcosq.f32.pop %v2806
    %v2809 = vsinq.f32.pop %v2806
    %vm2810 = vweird.f32 %v222
    %v2811 = vand.u32 %v2807, 3
    %vm2812 = vcmp.lt.s32.totalorder %v2811, 2
    %vm2813 = vcmp.eq.s32.totalorder %v2811, 0
    %v2814 = vxor.u32 %v2809, 2147483648
    %v2815 = vsel %vm2813, %v2808, %v2814
    %vm2816 = vcmp.eq.s32.totalorder %v2811, 2
    %v2817 = vxor.u32 %v2808, 2147483648
    %v2818 = vsel %vm2816, %v2817, %v2809
    %v2819 = vsel %vm2812, %v2815, %v2818
    %v2820 = vsel %vm2810, nan, %v2819
    %v2821 = vand.u32 2147483647, %v223
    %vm2822 = vcmp.le.f32.partialorder %v2821, 0.7853982
    %vm2823 = vcmp.lt.s32.totalorder %v223, 0
    %v2824 = vand.u32 %v223, 2139095040
    %v2825 = vshrl.u32 %v2824, 23
    %v2826 = vsub.s32 %v2825, 127
    %v2827 = vand.u32 2147483647, %v223
    %v2828 = vand.u32 %v2827, 8388607
    %v2829 = vor.u32 %v2828, 8388608
    %v2830 = vsub.s32 0, %v2829
    %v2831 = vadd.s32 %v2826, 1
    %vm2832 = vcmp.gt.s32.totalorder %v2831, 0
    %v2833 = vsel %vm2832, %v2831, 0
    %v2834 = vshrl.u32 %v2833, 5
    %v2835 = vand.u32 %v2833, 31
    %v2836 = vsub.s32 32, %v2835
    %v2837 = vshrl.u32 683565275, %v2836
    %v2838 = vshll.u32 683565275, %v2835
    %v2839 = vshrl.u32 2475754826, %v2836
    %v2840 = vor.u32 %v2838, %v2839
    %v2841 = vshll.u32 2475754826, %v2835
    %v2842 = vshrl.u32 2131351028, %v2836
    %v2843 = vor.u32 %v2841, %v2842
    %v2844 = vshll.u32 2131351028, %v2835
    %v2845 = vshrl.u32 2102212464, %v2836
    %v2846 = vor.u32 %v2844, %v2845
    %v2847 = vshll.u32 2102212464, %v2835
    %v2848 = vshrl.u32 920167782, %v2836
    %v2849 = vor.u32 %v2847, %v2848
    %v2850 = vshll.u32 920167782, %v2835
    %v2851 = vshrl.u32 1326507024, %v2836
    %v2852 = vor.u32 %v2850, %v2851
    %vm2853 = vcmp.lt.s32.totalorder %v2834, 1
    %vm2854 = vcmp.lt.s32.totalorder %v2834, 2
    %vm2855 = vcmp.lt.s32.totalorder %v2834, 3
    %vm2856 = vcmp.lt.s32.totalorder %v2834, 4
    %v2857 = vsel %vm2853, %v2837, %v2840
    %v2858 = vsel %vm2856, %v2846, 2102212464
    %v2859 = vsel %vm2855, %v2843, %v2858
    %v2860 = vsel %vm2854, %v2857, %v2859
    %v2861 = vsel %vm2853, %v2840, %v2843
    %v2862 = vsel %vm2856, %v2849, 920167782
    %v2863 = vsel %vm2855, %v2846, %v2862
    %v2864 = vsel %vm2854, %v2861, %v2863
    %v2865 = vsel %vm2853, %v2843, %v2846
    %v2866 = vsel %vm2856, %v2852, 1326507024
    %v2867 = vsel %vm2855, %v2849, %v2866
    %v2868 = vsel %vm2854, %v2865, %v2867
    %v2869 = vshll.u32 %v2829, 8
    %v2870 = vmul.u32.u64.compose %v2869, %v2868
    %v2871 = vextract.low.u32 %v2870
    %v2872 = vextract.high.u32 %v2870
    %v2873 = vmul.u32.u64.compose %v2869, %v2864
    %v2874 = vextract.low.u32 %v2873
    %v2875 = vextract.high.u32 %v2873
    %v2876 = vmul.u32 %v2869, %v2860
    %v2877 = vadd.s32 %v2872, %v2874
    %vm2878 = vc.u32 %v2872, %v2874
    %v2879 = vadd.s32 %v2875, 1
    %v2880 = vsel %vm2878, %v2879, %v2875
    %v2881 = vadd.s32 %v2876, %v2880
    %v2882 = vadd.s32 %v2881, 536870912
    %v2883 = vshrl.u32 %v2882, 30
    %v2884 = vshll.u32 %v2883, 30
    %v2885 = vsub.s32 %v2881, %v2884
    %vm2886 = vcmp.lt.s32.totalorder %v2885, 0
    %v2887 = vsub.s32 0, %v2885
    %v2888 = vsel %vm2886, %v2887, %v2885
    %v2889 = vclz %v2888
    %v2890 = vsub.s32 %v2889, 2
    %vm2891 = vcmp.gt.s32.totalorder 0, %v2890
    %v2892 = vsel %vm2891, 0, %v2890
    %v2893 = vsub.s32 32, %v2892
    %v2894 = vshll.u32 %v2885, %v2892
    %v2895 = vshrl.u32 %v2877, %v2893
    %v2896 = vor.u32 %v2894, %v2895
    %v2897 = vsub.s32 4294967266, %v2892
    %v2898 = vadd.s32 %v2897, 127
    %v2899 = vshll.u32 %v2898, 23
    %v2900 = vor.u32 4788187, %v2899
    %v2901 = vand.u32 2147483647, %v2900
    %v2903 = vcvt.s32.f32 %v2896
    %v2904 = vmul.f32 %v2903, %v2901
    %v2905 = vxor.u32 %v2904, 2147483648
    %v2906 = vsel %vm2823, %v2905, %v2904
    %v2907 = vsub.s32 4, %v2883
    %v2908 = vsel %vm2823, %v2907, %v2883
    %v2909 = vsel %vm2822, %v223, %v2906
    %v2910 = vsel %vm2822, 0, %v2908
    %v2911 = vcosq.f32.pop %v2909
    %v2912 = vsinq.f32.pop %v2909
    %vm2913 = vweird.f32 %v223
    %v2914 = vand.u32 %v2910, 3
    %vm2915 = vcmp.lt.s32.totalorder %v2914, 2
    %vm2916 = vcmp.eq.s32.totalorder %v2914, 0
    %v2917 = vxor.u32 %v2912, 2147483648
    %v2918 = vsel %vm2916, %v2911, %v2917
    %vm2919 = vcmp.eq.s32.totalorder %v2914, 2
    %v2920 = vxor.u32 %v2911, 2147483648
    %v2921 = vsel %vm2919, %v2920, %v2912
    %v2922 = vsel %vm2915, %v2918, %v2921
    %v2923 = vsel %vm2913, nan, %v2922
    %v2924 = vand.u32 2147483647, %v224
    %vm2925 = vcmp.le.f32.partialorder %v2924, 0.7853982
    %vm2926 = vcmp.lt.s32.totalorder %v224, 0
    %v2927 = vand.u32 %v224, 2139095040
    %v2928 = vshrl.u32 %v2927, 23
    %v2929 = vsub.s32 %v2928, 127
    %v2930 = vand.u32 2147483647, %v224
    %v2931 = vand.u32 %v2930, 8388607
    %v2932 = vor.u32 %v2931, 8388608
    %v2933 = vsub.s32 0, %v2932
    %v2934 = vadd.s32 %v2929, 1
    %vm2935 = vcmp.gt.s32.totalorder %v2934, 0
    %v2936 = vsel %vm2935, %v2934, 0
    %v2937 = vshrl.u32 %v2936, 5
    %v2938 = vand.u32 %v2936, 31
    %v2939 = vsub.s32 32, %v2938
    %v2940 = vshrl.u32 683565275, %v2939
    %v2941 = vshll.u32 683565275, %v2938
    %v2942 = vshrl.u32 2475754826, %v2939
    %v2943 = vor.u32 %v2941, %v2942
    %v2944 = vshll.u32 2475754826, %v2938
    %v2945 = vshrl.u32 2131351028, %v2939
    %v2946 = vor.u32 %v2944, %v2945
    %v2947 = vshll.u32 2131351028, %v2938
    %v2948 = vshrl.u32 2102212464, %v2939
    %v2949 = vor.u32 %v2947, %v2948
    %v2950 = vshll.u32 2102212464, %v2938
    %v2951 = vshrl.u32 920167782, %v2939
    %v2952 = vor.u32 %v2950, %v2951
    %v2953 = vshll.u32 920167782, %v2938
    %v2954 = vshrl.u32 1326507024, %v2939
    %v2955 = vor.u32 %v2953, %v2954
    %vm2956 = vcmp.lt.s32.totalorder %v2937, 1
    %vm2957 = vcmp.lt.s32.totalorder %v2937, 2
    %vm2958 = vcmp.lt.s32.totalorder %v2937, 3
    %vm2959 = vcmp.lt.s32.totalorder %v2937, 4
    %v2960 = vsel %vm2956, %v2940, %v2943
    %v2961 = vsel %vm2959, %v2949, 2102212464
    %v2962 = vsel %vm2958, %v2946, %v2961
    %v2963 = vsel %vm2957, %v2960, %v2962
    %v2964 = vsel %vm2956, %v2943, %v2946
    %v2965 = vsel %vm2959, %v2952, 920167782
    %v2966 = vsel %vm2958, %v2949, %v2965
    %v2967 = vsel %vm2957, %v2964, %v2966
    %v2968 = vsel %vm2956, %v2946, %v2949
    %v2969 = vsel %vm2959, %v2955, 1326507024
    %v2970 = vsel %vm2958, %v2952, %v2969
    %v2971 = vsel %vm2957, %v2968, %v2970
    %v2972 = vshll.u32 %v2932, 8
    %v2973 = vmul.u32.u64.compose %v2972, %v2971
    %v2974 = vextract.low.u32 %v2973
    %v2975 = vextract.high.u32 %v2973
    %v2976 = vmul.u32.u64.compose %v2972, %v2967
    %v2977 = vextract.low.u32 %v2976
    %v2978 = vextract.high.u32 %v2976
    %v2979 = vmul.u32 %v2972, %v2963
    %v2980 = vadd.s32 %v2975, %v2977
    %vm2981 = vc.u32 %v2975, %v2977
    %v2982 = vadd.s32 %v2978, 1
    %v2983 = vsel %vm2981, %v2982, %v2978
    %v2984 = vadd.s32 %v2979, %v2983
    %v2985 = vadd.s32 %v2984, 536870912
    %v2986 = vshrl.u32 %v2985, 30
    %v2987 = vshll.u32 %v2986, 30
    %v2988 = vsub.s32 %v2984, %v2987
    %vm2989 = vcmp.lt.s32.totalorder %v2988, 0
    %v2990 = vsub.s32 0, %v2988
    %v2991 = vsel %vm2989, %v2990, %v2988
    %v2992 = vclz %v2991
    %v2993 = vsub.s32 %v2992, 2
    %vm2994 = vcmp.gt.s32.totalorder 0, %v2993
    %v2995 = vsel %vm2994, 0, %v2993
    %v2996 = vsub.s32 32, %v2995
    %v2997 = vshll.u32 %v2988, %v2995
    %v2998 = vshrl.u32 %v2980, %v2996
    %v2999 = vor.u32 %v2997, %v2998
    %v3000 = vsub.s32 4294967266, %v2995
    %v3001 = vadd.s32 %v3000, 127
    %v3002 = vshll.u32 %v3001, 23
    %v3003 = vor.u32 4788187, %v3002
    %v3004 = vand.u32 2147483647, %v3003
    %v3006 = vcvt.s32.f32 %v2999
    %v3007 = vmul.f32 %v3006, %v3004
    %v3008 = vxor.u32 %v3007, 2147483648
    %v3009 = vsel %vm2926, %v3008, %v3007
    %v3010 = vsub.s32 4, %v2986
    %v3011 = vsel %vm2926, %v3010, %v2986
    %v3012 = vsel %vm2925, %v224, %v3009
    %v3013 = vsel %vm2925, 0, %v3011
    %v3014 = vcosq.f32.pop %v3012
    %v3015 = vsinq.f32.pop %v3012
    %vm3016 = vweird.f32 %v224
    %v3017 = vand.u32 %v3013, 3
    %vm3018 = vcmp.lt.s32.totalorder %v3017, 2
    %vm3019 = vcmp.eq.s32.totalorder %v3017, 0
    %v3020 = vxor.u32 %v3015, 2147483648
    %v3021 = vsel %vm3019, %v3014, %v3020
    %vm3022 = vcmp.eq.s32.totalorder %v3017, 2
    %v3023 = vxor.u32 %v3014, 2147483648
    %v3024 = vsel %vm3022, %v3023, %v3015
    %v3025 = vsel %vm3018, %v3021, %v3024
    %v3026 = vsel %vm3016, nan, %v3025
    %v3027 = vand.u32 2147483647, %v225
    %vm3028 = vcmp.le.f32.partialorder %v3027, 0.7853982
    %vm3029 = vcmp.lt.s32.totalorder %v225, 0
    %v3030 = vand.u32 %v225, 2139095040
    %v3031 = vshrl.u32 %v3030, 23
    %v3032 = vsub.s32 %v3031, 127
    %v3033 = vand.u32 2147483647, %v225
    %v3034 = vand.u32 %v3033, 8388607
    %v3035 = vor.u32 %v3034, 8388608
    %v3036 = vsub.s32 0, %v3035
    %v3037 = vadd.s32 %v3032, 1
    %vm3038 = vcmp.gt.s32.totalorder %v3037, 0
    %v3039 = vsel %vm3038, %v3037, 0
    %v3040 = vshrl.u32 %v3039, 5
    %v3041 = vand.u32 %v3039, 31
    %v3042 = vsub.s32 32, %v3041
    %v3043 = vshrl.u32 683565275, %v3042
    %v3044 = vshll.u32 683565275, %v3041
    %v3045 = vshrl.u32 2475754826, %v3042
    %v3046 = vor.u32 %v3044, %v3045
    %v3047 = vshll.u32 2475754826, %v3041
    %v3048 = vshrl.u32 2131351028, %v3042
    %v3049 = vor.u32 %v3047, %v3048
    %v3050 = vshll.u32 2131351028, %v3041
    %v3051 = vshrl.u32 2102212464, %v3042
    %v3052 = vor.u32 %v3050, %v3051
    %v3053 = vshll.u32 2102212464, %v3041
    %v3054 = vshrl.u32 920167782, %v3042
    %v3055 = vor.u32 %v3053, %v3054
    %v3056 = vshll.u32 920167782, %v3041
    %v3057 = vshrl.u32 1326507024, %v3042
    %v3058 = vor.u32 %v3056, %v3057
    %vm3059 = vcmp.lt.s32.totalorder %v3040, 1
    %vm3060 = vcmp.lt.s32.totalorder %v3040, 2
    %vm3061 = vcmp.lt.s32.totalorder %v3040, 3
    %vm3062 = vcmp.lt.s32.totalorder %v3040, 4
    %v3063 = vsel %vm3059, %v3043, %v3046
    %v3064 = vsel %vm3062, %v3052, 2102212464
    %v3065 = vsel %vm3061, %v3049, %v3064
    %v3066 = vsel %vm3060, %v3063, %v3065
    %v3067 = vsel %vm3059, %v3046, %v3049
    %v3068 = vsel %vm3062, %v3055, 920167782
    %v3069 = vsel %vm3061, %v3052, %v3068
    %v3070 = vsel %vm3060, %v3067, %v3069
    %v3071 = vsel %vm3059, %v3049, %v3052
    %v3072 = vsel %vm3062, %v3058, 1326507024
    %v3073 = vsel %vm3061, %v3055, %v3072
    %v3074 = vsel %vm3060, %v3071, %v3073
    %v3075 = vshll.u32 %v3035, 8
    %v3076 = vmul.u32.u64.compose %v3075, %v3074
    %v3077 = vextract.low.u32 %v3076
    %v3078 = vextract.high.u32 %v3076
    %v3079 = vmul.u32.u64.compose %v3075, %v3070
    %v3080 = vextract.low.u32 %v3079
    %v3081 = vextract.high.u32 %v3079
    %v3082 = vmul.u32 %v3075, %v3066
    %v3083 = vadd.s32 %v3078, %v3080
    %vm3084 = vc.u32 %v3078, %v3080
    %v3085 = vadd.s32 %v3081, 1
    %v3086 = vsel %vm3084, %v3085, %v3081
    %v3087 = vadd.s32 %v3082, %v3086
    %v3088 = vadd.s32 %v3087, 536870912
    %v3089 = vshrl.u32 %v3088, 30
    %v3090 = vshll.u32 %v3089, 30
    %v3091 = vsub.s32 %v3087, %v3090
    %vm3092 = vcmp.lt.s32.totalorder %v3091, 0
    %v3093 = vsub.s32 0, %v3091
    %v3094 = vsel %vm3092, %v3093, %v3091
    %v3095 = vclz %v3094
    %v3096 = vsub.s32 %v3095, 2
    %vm3097 = vcmp.gt.s32.totalorder 0, %v3096
    %v3098 = vsel %vm3097, 0, %v3096
    %v3099 = vsub.s32 32, %v3098
    %v3100 = vshll.u32 %v3091, %v3098
    %v3101 = vshrl.u32 %v3083, %v3099
    %v3102 = vor.u32 %v3100, %v3101
    %v3103 = vsub.s32 4294967266, %v3098
    %v3104 = vadd.s32 %v3103, 127
    %v3105 = vshll.u32 %v3104, 23
    %v3106 = vor.u32 4788187, %v3105
    %v3107 = vand.u32 2147483647, %v3106
    %v3109 = vcvt.s32.f32 %v3102
    %v3110 = vmul.f32 %v3109, %v3107
    %v3111 = vxor.u32 %v3110, 2147483648
    %v3112 = vsel %vm3029, %v3111, %v3110
    %v3113 = vsub.s32 4, %v3089
    %v3114 = vsel %vm3029, %v3113, %v3089
    %v3115 = vsel %vm3028, %v225, %v3112
    %v3116 = vsel %vm3028, 0, %v3114
    %v3117 = vcosq.f32.pop %v3115
    %v3118 = vsinq.f32.pop %v3115
    %vm3119 = vweird.f32 %v225
    %v3120 = vand.u32 %v3116, 3
    %vm3121 = vcmp.lt.s32.totalorder %v3120, 2
    %vm3122 = vcmp.eq.s32.totalorder %v3120, 0
    %v3123 = vxor.u32 %v3118, 2147483648
    %v3124 = vsel %vm3122, %v3117, %v3123
    %vm3125 = vcmp.eq.s32.totalorder %v3120, 2
    %v3126 = vxor.u32 %v3117, 2147483648
    %v3127 = vsel %vm3125, %v3126, %v3118
    %v3128 = vsel %vm3121, %v3124, %v3127
    %v3129 = vsel %vm3119, nan, %v3128
    %v3130 = vand.u32 2147483647, %v226
    %vm3131 = vcmp.le.f32.partialorder %v3130, 0.7853982
    %vm3132 = vcmp.lt.s32.totalorder %v226, 0
    %v3133 = vand.u32 %v226, 2139095040
    %v3134 = vshrl.u32 %v3133, 23
    %v3135 = vsub.s32 %v3134, 127
    %v3136 = vand.u32 2147483647, %v226
    %v3137 = vand.u32 %v3136, 8388607
    %v3138 = vor.u32 %v3137, 8388608
    %v3139 = vsub.s32 0, %v3138
    %v3140 = vadd.s32 %v3135, 1
    %vm3141 = vcmp.gt.s32.totalorder %v3140, 0
    %v3142 = vsel %vm3141, %v3140, 0
    %v3143 = vshrl.u32 %v3142, 5
    %v3144 = vand.u32 %v3142, 31
    %v3145 = vsub.s32 32, %v3144
    %v3146 = vshrl.u32 683565275, %v3145
    %v3147 = vshll.u32 683565275, %v3144
    %v3148 = vshrl.u32 2475754826, %v3145
    %v3149 = vor.u32 %v3147, %v3148
    %v3150 = vshll.u32 2475754826, %v3144
    %v3151 = vshrl.u32 2131351028, %v3145
    %v3152 = vor.u32 %v3150, %v3151
    %v3153 = vshll.u32 2131351028, %v3144
    %v3154 = vshrl.u32 2102212464, %v3145
    %v3155 = vor.u32 %v3153, %v3154
    %v3156 = vshll.u32 2102212464, %v3144
    %v3157 = vshrl.u32 920167782, %v3145
    %v3158 = vor.u32 %v3156, %v3157
    %v3159 = vshll.u32 920167782, %v3144
    %v3160 = vshrl.u32 1326507024, %v3145
    %v3161 = vor.u32 %v3159, %v3160
    %vm3162 = vcmp.lt.s32.totalorder %v3143, 1
    %vm3163 = vcmp.lt.s32.totalorder %v3143, 2
    %vm3164 = vcmp.lt.s32.totalorder %v3143, 3
    %vm3165 = vcmp.lt.s32.totalorder %v3143, 4
    %v3166 = vsel %vm3162, %v3146, %v3149
    %v3167 = vsel %vm3165, %v3155, 2102212464
    %v3168 = vsel %vm3164, %v3152, %v3167
    %v3169 = vsel %vm3163, %v3166, %v3168
    %v3170 = vsel %vm3162, %v3149, %v3152
    %v3171 = vsel %vm3165, %v3158, 920167782
    %v3172 = vsel %vm3164, %v3155, %v3171
    %v3173 = vsel %vm3163, %v3170, %v3172
    %v3174 = vsel %vm3162, %v3152, %v3155
    %v3175 = vsel %vm3165, %v3161, 1326507024
    %v3176 = vsel %vm3164, %v3158, %v3175
    %v3177 = vsel %vm3163, %v3174, %v3176
    %v3178 = vshll.u32 %v3138, 8
    %v3179 = vmul.u32.u64.compose %v3178, %v3177
    %v3180 = vextract.low.u32 %v3179
    %v3181 = vextract.high.u32 %v3179
    %v3182 = vmul.u32.u64.compose %v3178, %v3173
    %v3183 = vextract.low.u32 %v3182
    %v3184 = vextract.high.u32 %v3182
    %v3185 = vmul.u32 %v3178, %v3169
    %v3186 = vadd.s32 %v3181, %v3183
    %vm3187 = vc.u32 %v3181, %v3183
    %v3188 = vadd.s32 %v3184, 1
    %v3189 = vsel %vm3187, %v3188, %v3184
    %v3190 = vadd.s32 %v3185, %v3189
    %v3191 = vadd.s32 %v3190, 536870912
    %v3192 = vshrl.u32 %v3191, 30
    %v3193 = vshll.u32 %v3192, 30
    %v3194 = vsub.s32 %v3190, %v3193
    %vm3195 = vcmp.lt.s32.totalorder %v3194, 0
    %v3196 = vsub.s32 0, %v3194
    %v3197 = vsel %vm3195, %v3196, %v3194
    %v3198 = vclz %v3197
    %v3199 = vsub.s32 %v3198, 2
    %vm3200 = vcmp.gt.s32.totalorder 0, %v3199
    %v3201 = vsel %vm3200, 0, %v3199
    %v3202 = vsub.s32 32, %v3201
    %v3203 = vshll.u32 %v3194, %v3201
    %v3204 = vshrl.u32 %v3186, %v3202
    %v3205 = vor.u32 %v3203, %v3204
    %v3206 = vsub.s32 4294967266, %v3201
    %v3207 = vadd.s32 %v3206, 127
    %v3208 = vshll.u32 %v3207, 23
    %v3209 = vor.u32 4788187, %v3208
    %v3210 = vand.u32 2147483647, %v3209
    %v3212 = vcvt.s32.f32 %v3205
    %v3213 = vmul.f32 %v3212, %v3210
    %v3214 = vxor.u32 %v3213, 2147483648
    %v3215 = vsel %vm3132, %v3214, %v3213
    %v3216 = vsub.s32 4, %v3192
    %v3217 = vsel %vm3132, %v3216, %v3192
    %v3218 = vsel %vm3131, %v226, %v3215
    %v3219 = vsel %vm3131, 0, %v3217
    %v3220 = vcosq.f32.pop %v3218
    %v3221 = vsinq.f32.pop %v3218
    %vm3222 = vweird.f32 %v226
    %v3223 = vand.u32 %v3219, 3
    %vm3224 = vcmp.lt.s32.totalorder %v3223, 2
    %vm3225 = vcmp.eq.s32.totalorder %v3223, 0
    %v3226 = vxor.u32 %v3221, 2147483648
    %v3227 = vsel %vm3225, %v3220, %v3226
    %vm3228 = vcmp.eq.s32.totalorder %v3223, 2
    %v3229 = vxor.u32 %v3220, 2147483648
    %v3230 = vsel %vm3228, %v3229, %v3221
    %v3231 = vsel %vm3224, %v3227, %v3230
    %v3232 = vsel %vm3222, nan, %v3231
    %v3233 = vand.u32 2147483647, %v227
    %vm3234 = vcmp.le.f32.partialorder %v3233, 0.7853982
    %vm3235 = vcmp.lt.s32.totalorder %v227, 0
    %v3236 = vand.u32 %v227, 2139095040
    %v3237 = vshrl.u32 %v3236, 23
    %v3238 = vsub.s32 %v3237, 127
    %v3239 = vand.u32 2147483647, %v227
    %v3240 = vand.u32 %v3239, 8388607
    %v3241 = vor.u32 %v3240, 8388608
    %v3242 = vsub.s32 0, %v3241
    %v3243 = vadd.s32 %v3238, 1
    %vm3244 = vcmp.gt.s32.totalorder %v3243, 0
    %v3245 = vsel %vm3244, %v3243, 0
    %v3246 = vshrl.u32 %v3245, 5
    %v3247 = vand.u32 %v3245, 31
    %v3248 = vsub.s32 32, %v3247
    %v3249 = vshrl.u32 683565275, %v3248
    %v3250 = vshll.u32 683565275, %v3247
    %v3251 = vshrl.u32 2475754826, %v3248
    %v3252 = vor.u32 %v3250, %v3251
    %v3253 = vshll.u32 2475754826, %v3247
    %v3254 = vshrl.u32 2131351028, %v3248
    %v3255 = vor.u32 %v3253, %v3254
    %v3256 = vshll.u32 2131351028, %v3247
    %v3257 = vshrl.u32 2102212464, %v3248
    %v3258 = vor.u32 %v3256, %v3257
    %v3259 = vshll.u32 2102212464, %v3247
    %v3260 = vshrl.u32 920167782, %v3248
    %v3261 = vor.u32 %v3259, %v3260
    %v3262 = vshll.u32 920167782, %v3247
    %v3263 = vshrl.u32 1326507024, %v3248
    %v3264 = vor.u32 %v3262, %v3263
    %vm3265 = vcmp.lt.s32.totalorder %v3246, 1
    %vm3266 = vcmp.lt.s32.totalorder %v3246, 2
    %vm3267 = vcmp.lt.s32.totalorder %v3246, 3
    %vm3268 = vcmp.lt.s32.totalorder %v3246, 4
    %v3269 = vsel %vm3265, %v3249, %v3252
    %v3270 = vsel %vm3268, %v3258, 2102212464
    %v3271 = vsel %vm3267, %v3255, %v3270
    %v3272 = vsel %vm3266, %v3269, %v3271
    %v3273 = vsel %vm3265, %v3252, %v3255
    %v3274 = vsel %vm3268, %v3261, 920167782
    %v3275 = vsel %vm3267, %v3258, %v3274
    %v3276 = vsel %vm3266, %v3273, %v3275
    %v3277 = vsel %vm3265, %v3255, %v3258
    %v3278 = vsel %vm3268, %v3264, 1326507024
    %v3279 = vsel %vm3267, %v3261, %v3278
    %v3280 = vsel %vm3266, %v3277, %v3279
    %v3281 = vshll.u32 %v3241, 8
    %v3282 = vmul.u32.u64.compose %v3281, %v3280
    %v3283 = vextract.low.u32 %v3282
    %v3284 = vextract.high.u32 %v3282
    %v3285 = vmul.u32.u64.compose %v3281, %v3276
    %v3286 = vextract.low.u32 %v3285
    %v3287 = vextract.high.u32 %v3285
    %v3288 = vmul.u32 %v3281, %v3272
    %v3289 = vadd.s32 %v3284, %v3286
    %vm3290 = vc.u32 %v3284, %v3286
    %v3291 = vadd.s32 %v3287, 1
    %v3292 = vsel %vm3290, %v3291, %v3287
    %v3293 = vadd.s32 %v3288, %v3292
    %v3294 = vadd.s32 %v3293, 536870912
    %v3295 = vshrl.u32 %v3294, 30
    %v3296 = vshll.u32 %v3295, 30
    %v3297 = vsub.s32 %v3293, %v3296
    %vm3298 = vcmp.lt.s32.totalorder %v3297, 0
    %v3299 = vsub.s32 0, %v3297
    %v3300 = vsel %vm3298, %v3299, %v3297
    %v3301 = vclz %v3300
    %v3302 = vsub.s32 %v3301, 2
    %vm3303 = vcmp.gt.s32.totalorder 0, %v3302
    %v3304 = vsel %vm3303, 0, %v3302
    %v3305 = vsub.s32 32, %v3304
    %v3306 = vshll.u32 %v3297, %v3304
    %v3307 = vshrl.u32 %v3289, %v3305
    %v3308 = vor.u32 %v3306, %v3307
    %v3309 = vsub.s32 4294967266, %v3304
    %v3310 = vadd.s32 %v3309, 127
    %v3311 = vshll.u32 %v3310, 23
    %v3312 = vor.u32 4788187, %v3311
    %v3313 = vand.u32 2147483647, %v3312
    %v3315 = vcvt.s32.f32 %v3308
    %v3316 = vmul.f32 %v3315, %v3313
    %v3317 = vxor.u32 %v3316, 2147483648
    %v3318 = vsel %vm3235, %v3317, %v3316
    %v3319 = vsub.s32 4, %v3295
    %v3320 = vsel %vm3235, %v3319, %v3295
    %v3321 = vsel %vm3234, %v227, %v3318
    %v3322 = vsel %vm3234, 0, %v3320
    %v3323 = vcosq.f32.pop %v3321
    %v3324 = vsinq.f32.pop %v3321
    %vm3325 = vweird.f32 %v227
    %v3326 = vand.u32 %v3322, 3
    %vm3327 = vcmp.lt.s32.totalorder %v3326, 2
    %vm3328 = vcmp.eq.s32.totalorder %v3326, 0
    %v3329 = vxor.u32 %v3324, 2147483648
    %v3330 = vsel %vm3328, %v3323, %v3329
    %vm3331 = vcmp.eq.s32.totalorder %v3326, 2
    %v3332 = vxor.u32 %v3323, 2147483648
    %v3333 = vsel %vm3331, %v3332, %v3324
    %v3334 = vsel %vm3327, %v3330, %v3333
    %v3335 = vsel %vm3325, nan, %v3334
    %v3336 = vand.u32 2147483647, %v228
    %vm3337 = vcmp.le.f32.partialorder %v3336, 0.7853982
    %vm3338 = vcmp.lt.s32.totalorder %v228, 0
    %v3339 = vand.u32 %v228, 2139095040
    %v3340 = vshrl.u32 %v3339, 23
    %v3341 = vsub.s32 %v3340, 127
    %v3342 = vand.u32 2147483647, %v228
    %v3343 = vand.u32 %v3342, 8388607
    %v3344 = vor.u32 %v3343, 8388608
    %v3345 = vsub.s32 0, %v3344
    %v3346 = vadd.s32 %v3341, 1
    %vm3347 = vcmp.gt.s32.totalorder %v3346, 0
    %v3348 = vsel %vm3347, %v3346, 0
    %v3349 = vshrl.u32 %v3348, 5
    %v3350 = vand.u32 %v3348, 31
    %v3351 = vsub.s32 32, %v3350
    %v3352 = vshrl.u32 683565275, %v3351
    %v3353 = vshll.u32 683565275, %v3350
    %v3354 = vshrl.u32 2475754826, %v3351
    %v3355 = vor.u32 %v3353, %v3354
    %v3356 = vshll.u32 2475754826, %v3350
    %v3357 = vshrl.u32 2131351028, %v3351
    %v3358 = vor.u32 %v3356, %v3357
    %v3359 = vshll.u32 2131351028, %v3350
    %v3360 = vshrl.u32 2102212464, %v3351
    %v3361 = vor.u32 %v3359, %v3360
    %v3362 = vshll.u32 2102212464, %v3350
    %v3363 = vshrl.u32 920167782, %v3351
    %v3364 = vor.u32 %v3362, %v3363
    %v3365 = vshll.u32 920167782, %v3350
    %v3366 = vshrl.u32 1326507024, %v3351
    %v3367 = vor.u32 %v3365, %v3366
    %vm3368 = vcmp.lt.s32.totalorder %v3349, 1
    %vm3369 = vcmp.lt.s32.totalorder %v3349, 2
    %vm3370 = vcmp.lt.s32.totalorder %v3349, 3
    %vm3371 = vcmp.lt.s32.totalorder %v3349, 4
    %v3372 = vsel %vm3368, %v3352, %v3355
    %v3373 = vsel %vm3371, %v3361, 2102212464
    %v3374 = vsel %vm3370, %v3358, %v3373
    %v3375 = vsel %vm3369, %v3372, %v3374
    %v3376 = vsel %vm3368, %v3355, %v3358
    %v3377 = vsel %vm3371, %v3364, 920167782
    %v3378 = vsel %vm3370, %v3361, %v3377
    %v3379 = vsel %vm3369, %v3376, %v3378
    %v3380 = vsel %vm3368, %v3358, %v3361
    %v3381 = vsel %vm3371, %v3367, 1326507024
    %v3382 = vsel %vm3370, %v3364, %v3381
    %v3383 = vsel %vm3369, %v3380, %v3382
    %v3384 = vshll.u32 %v3344, 8
    %v3385 = vmul.u32.u64.compose %v3384, %v3383
    %v3386 = vextract.low.u32 %v3385
    %v3387 = vextract.high.u32 %v3385
    %v3388 = vmul.u32.u64.compose %v3384, %v3379
    %v3389 = vextract.low.u32 %v3388
    %v3390 = vextract.high.u32 %v3388
    %v3391 = vmul.u32 %v3384, %v3375
    %v3392 = vadd.s32 %v3387, %v3389
    %vm3393 = vc.u32 %v3387, %v3389
    %v3394 = vadd.s32 %v3390, 1
    %v3395 = vsel %vm3393, %v3394, %v3390
    %v3396 = vadd.s32 %v3391, %v3395
    %v3397 = vadd.s32 %v3396, 536870912
    %v3398 = vshrl.u32 %v3397, 30
    %v3399 = vshll.u32 %v3398, 30
    %v3400 = vsub.s32 %v3396, %v3399
    %vm3401 = vcmp.lt.s32.totalorder %v3400, 0
    %v3402 = vsub.s32 0, %v3400
    %v3403 = vsel %vm3401, %v3402, %v3400
    %v3404 = vclz %v3403
    %v3405 = vsub.s32 %v3404, 2
    %vm3406 = vcmp.gt.s32.totalorder 0, %v3405
    %v3407 = vsel %vm3406, 0, %v3405
    %v3408 = vsub.s32 32, %v3407
    %v3409 = vshll.u32 %v3400, %v3407
    %v3410 = vshrl.u32 %v3392, %v3408
    %v3411 = vor.u32 %v3409, %v3410
    %v3412 = vsub.s32 4294967266, %v3407
    %v3413 = vadd.s32 %v3412, 127
    %v3414 = vshll.u32 %v3413, 23
    %v3415 = vor.u32 4788187, %v3414
    %v3416 = vand.u32 2147483647, %v3415
    %v3418 = vcvt.s32.f32 %v3411
    %v3419 = vmul.f32 %v3418, %v3416
    %v3420 = vxor.u32 %v3419, 2147483648
    %v3421 = vsel %vm3338, %v3420, %v3419
    %v3422 = vsub.s32 4, %v3398
    %v3423 = vsel %vm3338, %v3422, %v3398
    %v3424 = vsel %vm3337, %v228, %v3421
    %v3425 = vsel %vm3337, 0, %v3423
    %v3426 = vcosq.f32.pop %v3424
    %v3427 = vsinq.f32.pop %v3424
    %vm3428 = vweird.f32 %v228
    %v3429 = vand.u32 %v3425, 3
    %vm3430 = vcmp.lt.s32.totalorder %v3429, 2
    %vm3431 = vcmp.eq.s32.totalorder %v3429, 0
    %v3432 = vxor.u32 %v3427, 2147483648
    %v3433 = vsel %vm3431, %v3426, %v3432
    %vm3434 = vcmp.eq.s32.totalorder %v3429, 2
    %v3435 = vxor.u32 %v3426, 2147483648
    %v3436 = vsel %vm3434, %v3435, %v3427
    %v3437 = vsel %vm3430, %v3433, %v3436
    %v3438 = vsel %vm3428, nan, %v3437
    %v3439 = vand.u32 2147483647, %v229
    %vm3440 = vcmp.le.f32.partialorder %v3439, 0.7853982
    %vm3441 = vcmp.lt.s32.totalorder %v229, 0
    %v3442 = vand.u32 %v229, 2139095040
    %v3443 = vshrl.u32 %v3442, 23
    %v3444 = vsub.s32 %v3443, 127
    %v3445 = vand.u32 2147483647, %v229
    %v3446 = vand.u32 %v3445, 8388607
    %v3447 = vor.u32 %v3446, 8388608
    %v3448 = vsub.s32 0, %v3447
    %v3449 = vadd.s32 %v3444, 1
    %vm3450 = vcmp.gt.s32.totalorder %v3449, 0
    %v3451 = vsel %vm3450, %v3449, 0
    %v3452 = vshrl.u32 %v3451, 5
    %v3453 = vand.u32 %v3451, 31
    %v3454 = vsub.s32 32, %v3453
    %v3455 = vshrl.u32 683565275, %v3454
    %v3456 = vshll.u32 683565275, %v3453
    %v3457 = vshrl.u32 2475754826, %v3454
    %v3458 = vor.u32 %v3456, %v3457
    %v3459 = vshll.u32 2475754826, %v3453
    %v3460 = vshrl.u32 2131351028, %v3454
    %v3461 = vor.u32 %v3459, %v3460
    %v3462 = vshll.u32 2131351028, %v3453
    %v3463 = vshrl.u32 2102212464, %v3454
    %v3464 = vor.u32 %v3462, %v3463
    %v3465 = vshll.u32 2102212464, %v3453
    %v3466 = vshrl.u32 920167782, %v3454
    %v3467 = vor.u32 %v3465, %v3466
    %v3468 = vshll.u32 920167782, %v3453
    %v3469 = vshrl.u32 1326507024, %v3454
    %v3470 = vor.u32 %v3468, %v3469
    %vm3471 = vcmp.lt.s32.totalorder %v3452, 1
    %vm3472 = vcmp.lt.s32.totalorder %v3452, 2
    %vm3473 = vcmp.lt.s32.totalorder %v3452, 3
    %vm3474 = vcmp.lt.s32.totalorder %v3452, 4
    %v3475 = vsel %vm3471, %v3455, %v3458
    %v3476 = vsel %vm3474, %v3464, 2102212464
    %v3477 = vsel %vm3473, %v3461, %v3476
    %v3478 = vsel %vm3472, %v3475, %v3477
    %v3479 = vsel %vm3471, %v3458, %v3461
    %v3480 = vsel %vm3474, %v3467, 920167782
    %v3481 = vsel %vm3473, %v3464, %v3480
    %v3482 = vsel %vm3472, %v3479, %v3481
    %v3483 = vsel %vm3471, %v3461, %v3464
    %v3484 = vsel %vm3474, %v3470, 1326507024
    %v3485 = vsel %vm3473, %v3467, %v3484
    %v3486 = vsel %vm3472, %v3483, %v3485
    %v3487 = vshll.u32 %v3447, 8
    %v3488 = vmul.u32.u64.compose %v3487, %v3486
    %v3489 = vextract.low.u32 %v3488
    %v3490 = vextract.high.u32 %v3488
    %v3491 = vmul.u32.u64.compose %v3487, %v3482
    %v3492 = vextract.low.u32 %v3491
    %v3493 = vextract.high.u32 %v3491
    %v3494 = vmul.u32 %v3487, %v3478
    %v3495 = vadd.s32 %v3490, %v3492
    %vm3496 = vc.u32 %v3490, %v3492
    %v3497 = vadd.s32 %v3493, 1
    %v3498 = vsel %vm3496, %v3497, %v3493
    %v3499 = vadd.s32 %v3494, %v3498
    %v3500 = vadd.s32 %v3499, 536870912
    %v3501 = vshrl.u32 %v3500, 30
    %v3502 = vshll.u32 %v3501, 30
    %v3503 = vsub.s32 %v3499, %v3502
    %vm3504 = vcmp.lt.s32.totalorder %v3503, 0
    %v3505 = vsub.s32 0, %v3503
    %v3506 = vsel %vm3504, %v3505, %v3503
    %v3507 = vclz %v3506
    %v3508 = vsub.s32 %v3507, 2
    %vm3509 = vcmp.gt.s32.totalorder 0, %v3508
    %v3510 = vsel %vm3509, 0, %v3508
    %v3511 = vsub.s32 32, %v3510
    %v3512 = vshll.u32 %v3503, %v3510
    %v3513 = vshrl.u32 %v3495, %v3511
    %v3514 = vor.u32 %v3512, %v3513
    %v3515 = vsub.s32 4294967266, %v3510
    %v3516 = vadd.s32 %v3515, 127
    %v3517 = vshll.u32 %v3516, 23
    %v3518 = vor.u32 4788187, %v3517
    %v3519 = vand.u32 2147483647, %v3518
    %v3521 = vcvt.s32.f32 %v3514
    %v3522 = vmul.f32 %v3521, %v3519
    %v3523 = vxor.u32 %v3522, 2147483648
    %v3524 = vsel %vm3441, %v3523, %v3522
    %v3525 = vsub.s32 4, %v3501
    %v3526 = vsel %vm3441, %v3525, %v3501
    %v3527 = vsel %vm3440, %v229, %v3524
    %v3528 = vsel %vm3440, 0, %v3526
    %v3529 = vcosq.f32.pop %v3527
    %v3530 = vsinq.f32.pop %v3527
    %vm3531 = vweird.f32 %v229
    %v3532 = vand.u32 %v3528, 3
    %vm3533 = vcmp.lt.s32.totalorder %v3532, 2
    %vm3534 = vcmp.eq.s32.totalorder %v3532, 0
    %v3535 = vxor.u32 %v3530, 2147483648
    %v3536 = vsel %vm3534, %v3529, %v3535
    %vm3537 = vcmp.eq.s32.totalorder %v3532, 2
    %v3538 = vxor.u32 %v3529, 2147483648
    %v3539 = vsel %vm3537, %v3538, %v3530
    %v3540 = vsel %vm3533, %v3536, %v3539
    %v3541 = vsel %vm3531, nan, %v3540
    %v3542 = vld [vmem:[%s1 + $0x2] sm:$0x1]
    %vm3543 = vcmp.ne.f32.partialorder %v3542, 0.0
    %v3544 = vsel %vm3543, 1, 0
    %v3545 = vlaneseq
    %v3546 = vshrl.u32 %v3545, 7
    %v3547 = vsub.s32 0, %v3546
    %v3548 = vrot.slane %v3544, %v3547
    %vm3549 = vcmp.eq.s32.totalorder %v3548, 1
    %v3550 = vsel %vm3549, %v333, %v1996
    %v3551 = vsel %vm3549, %v437, %v2099
    %v3552 = vsel %vm3549, %v541, %v2202
    %v3553 = vsel %vm3549, %v645, %v2305
    %v3554 = vsel %vm3549, %v749, %v2408
    %v3555 = vsel %vm3549, %v853, %v2511
    %v3556 = vsel %vm3549, %v957, %v2614
    %v3557 = vsel %vm3549, %v1061, %v2717
    %v3558 = vsel %vm3549, %v1165, %v2820
    %v3559 = vsel %vm3549, %v1269, %v2923
    %v3560 = vsel %vm3549, %v1373, %v3026
    %v3561 = vsel %vm3549, %v1477, %v3129
    %v3562 = vsel %vm3549, %v1581, %v3232
    %v3563 = vsel %vm3549, %v1685, %v3335
    %v3564 = vsel %vm3549, %v1789, %v3438
    %v3565 = vsel %vm3549, %v1893, %v3541
    %3566 = vst [vmem:[#allocation2] sm:$0xff] %v3550
    %3567 = vst [vmem:[#allocation2 + $0x8] sm:$0xff] %v3551
    %3568 = vst [vmem:[#allocation2 + $0x10] sm:$0xff] %v3552
    %3569 = vst [vmem:[#allocation2 + $0x18] sm:$0xff] %v3553
    %3570 = vst [vmem:[#allocation2 + $0x20] sm:$0xff] %v3554
    %3571 = vst [vmem:[#allocation2 + $0x28] sm:$0xff] %v3555
    %3572 = vst [vmem:[#allocation2 + $0x30] sm:$0xff] %v3556
    %3573 = vst [vmem:[#allocation2 + $0x38] sm:$0xff] %v3557
    %3574 = vst [vmem:[#allocation2 + $0x40] sm:$0xff] %v3558
    %3575 = vst [vmem:[#allocation2 + $0x48] sm:$0xff] %v3559
    %3576 = vst [vmem:[#allocation2 + $0x50] sm:$0xff] %v3560
    %3577 = vst [vmem:[#allocation2 + $0x58] sm:$0xff] %v3561
    %3578 = vst [vmem:[#allocation2 + $0x60] sm:$0xff] %v3562
    %3579 = vst [vmem:[#allocation2 + $0x68] sm:$0xff] %v3563
    %3580 = vst [vmem:[#allocation2 + $0x70] sm:$0xff] %v3564
    %3581 = vst [vmem:[#allocation2 + $0x78] sm:$0xff] %v3565
    // Predicated region
    $region10: #{tpu_custom_call.1} parent=1 // pred_check
      _
    $region11: #{tpu_custom_call.1} parent=1 // pred_check_branch
      %3583 = sbr.rel (0) target = $region13
    $region12: #{tpu_custom_call.1} parent=1 // pred_region
      %s3585 = ssub.s32 2048, 2048
      %3586 = vsyncadd [#allocation3], %s3585
      %s3587 = sshll.u32 [#allocation2], 4
      %s3588 = int_to_ptr.vmem [resolvable:$true] %s3587
      %3593 = dma.vmem_to_hbm [thread:$0]  %s3588, 2048, %s2, [#allocation3], 128, 128, 8
    $region13: #{tpu_custom_call.1} parent=1 // pred_fallthru
      _
    // Predicated region
    $region14: #{tpu_custom_call.1} parent=1 // pred_check
      _
    $region15: #{tpu_custom_call.1} parent=1 // pred_check_branch
      %3595 = sbr.rel (0) target = $region17
    $region16: #{tpu_custom_call.1} parent=1 // pred_region
      %3596 = dma.done [#allocation3], 2048
    $region17: #{tpu_custom_call.1} parent=1 // pred_fallthru
      _
    %3597 = vsyncpa [#allocation3], 1

</llo_original>
